<compile_context>
chip_gen: v6e
topology: v6e:2x2x1
jax: 0.10.0
libtpu: 0.0.40
codegen_flags: <defaults>
</compile_context>

<pallas_src>
import math

import jax
import jax.numpy as jnp
from jax.experimental import pallas as pl
from jax.experimental.pallas import tpu as pltpu

LATENT_DIM = 100
IMG_SHAPE = (1, 28, 28)
OUT_DIM = IMG_SHAPE[0] * IMG_SHAPE[1] * IMG_SHAPE[2]   # 784
LAT_PAD = 128                                          # 100 -> 128 lanes
OUT_PAD = 896                                          # 784 -> 7 * 128 lanes
BN_EPS = 0.8                                           # nn.BatchNorm1d(feat, 0.8)


def _leaky(x):
    return jnp.where(x > 0, x, 0.2 * x)


def _gen_kernel(z_ref,
                w1_ref, b1_ref,
                w2_ref, b2_ref, s2_ref, t2_ref,
                w3_ref, b3_ref, s3_ref, t3_ref,
                w4_ref, b4_ref, s4_ref, t4_ref,
                w5_ref, b5_ref,
                out_ref):
    bf16 = jnp.bfloat16

    # block 1: Linear(100->128) (no BN) + LeakyReLU
    h = jnp.dot(z_ref[...], w1_ref[...], preferred_element_type=jnp.float32)
    h = _leaky(h + b1_ref[...])

    # block 2: Linear(128->256) + BN(256) + LeakyReLU
    h = jnp.dot(h.astype(bf16), w2_ref[...], preferred_element_type=jnp.float32)
    h = _leaky((h + b2_ref[...]) * s2_ref[...] + t2_ref[...])

    # block 3: Linear(256->512) + BN(512) + LeakyReLU
    h = jnp.dot(h.astype(bf16), w3_ref[...], preferred_element_type=jnp.float32)
    h = _leaky((h + b3_ref[...]) * s3_ref[...] + t3_ref[...])

    # block 4: Linear(512->1024) + BN(1024) + LeakyReLU
    h = jnp.dot(h.astype(bf16), w4_ref[...], preferred_element_type=jnp.float32)
    h = _leaky((h + b4_ref[...]) * s4_ref[...] + t4_ref[...])

    # head: Linear(1024->784, zero-padded to 896) + Tanh
    h = jnp.dot(h.astype(bf16), w5_ref[...], preferred_element_type=jnp.float32)
    out_ref[...] = jnp.tanh(h + b5_ref[...]).astype(out_ref.dtype)


def _round_up(n, m):
    return (n + m - 1) // m * m


def generator_forward(z, params, *, tile_b=256):
    """z: (B, latent_dim) f32. Returns generated images (B, 1, 28, 28) f32."""
    B = z.shape[0]
    (w1, b1,
     w2, b2, g2, be2, rm2, rv2,
     w3, b3, g3, be3, rm3, rv3,
     w4, b4, g4, be4, rm4, rv4,
     w5, b5) = params

    # Fold inference-mode BatchNorm into per-feature scale/shift (f32).
    def bn_affine(g, be, rm, rv):
        scale = g / jnp.sqrt(rv + BN_EPS)
        shift = be - rm * scale
        return (scale.reshape(1, -1).astype(jnp.float32),
                shift.reshape(1, -1).astype(jnp.float32))

    s2, t2 = bn_affine(g2, be2, rm2, rv2)
    s3, t3 = bn_affine(g3, be3, rm3, rv3)
    s4, t4 = bn_affine(g4, be4, rm4, rv4)

    # Batch tiling: small calls pad to one sublane tile, big calls stream tiles.
    tile_b = min(tile_b, _round_up(max(B, 1), 8))
    b_pad = _round_up(B, tile_b)

    bf16 = jnp.bfloat16
    z_p = jnp.zeros((b_pad, LAT_PAD), bf16).at[:B, :LATENT_DIM].set(z.astype(bf16))
    w1_p = jnp.zeros((LAT_PAD, 128), bf16).at[:LATENT_DIM, :].set(w1.astype(bf16))
    w5_p = jnp.zeros((1024, OUT_PAD), bf16).at[:, :OUT_DIM].set(w5.astype(bf16))
    b5_p = jnp.zeros((1, OUT_PAD), jnp.float32).at[:, :OUT_DIM].set(
        b5.reshape(1, -1).astype(jnp.float32))

    row = lambda b: b.reshape(1, -1).astype(jnp.float32)

    operands = (z_p,
                w1_p, row(b1),
                w2.astype(bf16), row(b2), s2, t2,
                w3.astype(bf16), row(b3), s3, t3,
                w4.astype(bf16), row(b4), s4, t4,
                w5_p, b5_p)

    # Weights/biases: full-array blocks, constant index_map -> fetched once,
    # VMEM-resident across all batch-grid steps.
    def const_spec(a):
        return pl.BlockSpec(a.shape, lambda i: (0, 0))

    in_specs = ([pl.BlockSpec((tile_b, LAT_PAD), lambda i: (i, 0))]
                + [const_spec(a) for a in operands[1:]])

    out = pl.pallas_call(
        _gen_kernel,
        out_shape=jax.ShapeDtypeStruct((b_pad, OUT_PAD), jnp.float32),
        grid=(b_pad // tile_b,),
        in_specs=in_specs,
        out_specs=pl.BlockSpec((tile_b, OUT_PAD), lambda i: (i, 0)),
        compiler_params=pltpu.CompilerParams(
            dimension_semantics=("parallel",),
        ),
    )(*operands)

    return out[:B, :OUT_DIM].reshape(B, *IMG_SHAPE)


def init_params(key, latent_dim=LATENT_DIM, img_dim=OUT_DIM):
    """PyTorch-style init. Linear: U(-1/sqrt(fan_in), 1/sqrt(fan_in)), weights
    stored transposed (in, out) for y = x @ W + b. BN params randomized so the
    test exercises the scale/shift path (PyTorch default would be identity)."""
    ks = jax.random.split(key, 22)
    it = iter(range(22))

    def lin(fan_in, fan_out):
        bound = 1.0 / math.sqrt(fan_in)
        w = jax.random.uniform(ks[next(it)], (fan_in, fan_out), jnp.float32, -bound, bound)
        b = jax.random.uniform(ks[next(it)], (fan_out,), jnp.float32, -bound, bound)
        return w, b

    def bn(feat):
        g = jax.random.uniform(ks[next(it)], (feat,), jnp.float32, 0.5, 1.5)
        be = 0.1 * jax.random.normal(ks[next(it)], (feat,), jnp.float32)
        rm = 0.1 * jax.random.normal(ks[next(it)], (feat,), jnp.float32)
        rv = jax.random.uniform(ks[next(it)], (feat,), jnp.float32, 0.5, 1.5)
        return g, be, rm, rv

    w1, b1 = lin(latent_dim, 128)
    w2, b2 = lin(128, 256)
    g2, be2, rm2, rv2 = bn(256)
    w3, b3 = lin(256, 512)
    g3, be3, rm3, rv3 = bn(512)
    w4, b4 = lin(512, 1024)
    g4, be4, rm4, rv4 = bn(1024)
    w5, b5 = lin(1024, img_dim)
    return (w1, b1,
            w2, b2, g2, be2, rm2, rv2,
            w3, b3, g3, be3, rm3, rv3,
            w4, b4, g4, be4, rm4, rv4,
            w5, b5)


def _reference(z, params):
    """Plain-JAX reference with matching bf16-input / f32-accum matmul math."""
    (w1, b1,
     w2, b2, g2, be2, rm2, rv2,
     w3, b3, g3, be3, rm3, rv3,
     w4, b4, g4, be4, rm4, rv4,
     w5, b5) = params
    bf16 = jnp.bfloat16

    def dot(a, w):
        return jnp.dot(a.astype(bf16), w.astype(bf16),
                       preferred_element_type=jnp.float32)

    def bn(x, g, be, rm, rv):
        return (x - rm) / jnp.sqrt(rv + BN_EPS) * g + be

    h = _leaky(dot(z, w1) + b1)
    h = _leaky(bn(dot(h, w2) + b2, g2, be2, rm2, rv2))
    h = _leaky(bn(dot(h, w3) + b3, g3, be3, rm3, rv3))
    h = _leaky(bn(dot(h, w4) + b4, g4, be4, rm4, rv4))
    h = jnp.tanh(dot(h, w5) + b5)
    return h.reshape(z.shape[0], *IMG_SHAPE)


if __name__ == "__main__":
    key = jax.random.PRNGKey(0)
    k_z, k_par = jax.random.split(key)

    B = 2
    z = jax.random.normal(k_z, (B, LATENT_DIM), dtype=jnp.float32)
    params = init_params(k_par)

    img = generator_forward(z, params)
    jax.block_until_ready(img)

    ref = _reference(z, params)
    assert img.shape == (B, *IMG_SHAPE)
    assert bool(jnp.all(jnp.isfinite(img)))
    assert jnp.allclose(img, ref, atol=1e-2, rtol=1e-2)

    print("KERNEL_OK")
</pallas_src>

<mosaic_0001>
module attributes {stable_mosaic.version = 11 : i64} {
  func.func @_gen_kernel(%arg0: i32, %arg1: memref<8x128xbf16, #tpu.memory_space<vmem>>, %arg2: memref<128x128xbf16, #tpu.memory_space<vmem>>, %arg3: memref<1x128xf32, #tpu.memory_space<vmem>>, %arg4: memref<128x256xbf16, #tpu.memory_space<vmem>>, %arg5: memref<1x256xf32, #tpu.memory_space<vmem>>, %arg6: memref<1x256xf32, #tpu.memory_space<vmem>>, %arg7: memref<1x256xf32, #tpu.memory_space<vmem>>, %arg8: memref<256x512xbf16, #tpu.memory_space<vmem>>, %arg9: memref<1x512xf32, #tpu.memory_space<vmem>>, %arg10: memref<1x512xf32, #tpu.memory_space<vmem>>, %arg11: memref<1x512xf32, #tpu.memory_space<vmem>>, %arg12: memref<512x1024xbf16, #tpu.memory_space<vmem>>, %arg13: memref<1x1024xf32, #tpu.memory_space<vmem>>, %arg14: memref<1x1024xf32, #tpu.memory_space<vmem>>, %arg15: memref<1x1024xf32, #tpu.memory_space<vmem>>, %arg16: memref<1024x896xbf16, #tpu.memory_space<vmem>>, %arg17: memref<1x896xf32, #tpu.memory_space<vmem>>, %arg18: memref<8x896xf32, #tpu.memory_space<vmem>>) attributes {dimension_semantics = [#tpu.dimension_semantics<parallel>], iteration_bounds = array<i64: 1>, scalar_prefetch = 0 : i64, scratch_operands = 0 : i64, tpu.core_type = #tpu.core_type<tc>, window_params = [{transform_indices = @transform_0, window_bounds = array<i64: 8, 128>}, {pipeline_mode = #tpu.pipeline_mode<synchronous>, transform_indices = @transform_1, window_bounds = array<i64: 128, 128>}, {pipeline_mode = #tpu.pipeline_mode<synchronous>, transform_indices = @transform_2, window_bounds = array<i64: 1, 128>}, {pipeline_mode = #tpu.pipeline_mode<synchronous>, transform_indices = @transform_3, window_bounds = array<i64: 128, 256>}, {pipeline_mode = #tpu.pipeline_mode<synchronous>, transform_indices = @transform_4, window_bounds = array<i64: 1, 256>}, {pipeline_mode = #tpu.pipeline_mode<synchronous>, transform_indices = @transform_5, window_bounds = array<i64: 1, 256>}, {pipeline_mode = #tpu.pipeline_mode<synchronous>, transform_indices = @transform_6, window_bounds = array<i64: 1, 256>}, {pipeline_mode = #tpu.pipeline_mode<synchronous>, transform_indices = @transform_7, window_bounds = array<i64: 256, 512>}, {pipeline_mode = #tpu.pipeline_mode<synchronous>, transform_indices = @transform_8, window_bounds = array<i64: 1, 512>}, {pipeline_mode = #tpu.pipeline_mode<synchronous>, transform_indices = @transform_9, window_bounds = array<i64: 1, 512>}, {pipeline_mode = #tpu.pipeline_mode<synchronous>, transform_indices = @transform_10, window_bounds = array<i64: 1, 512>}, {pipeline_mode = #tpu.pipeline_mode<synchronous>, transform_indices = @transform_11, window_bounds = array<i64: 512, 1024>}, {pipeline_mode = #tpu.pipeline_mode<synchronous>, transform_indices = @transform_12, window_bounds = array<i64: 1, 1024>}, {pipeline_mode = #tpu.pipeline_mode<synchronous>, transform_indices = @transform_13, window_bounds = array<i64: 1, 1024>}, {pipeline_mode = #tpu.pipeline_mode<synchronous>, transform_indices = @transform_14, window_bounds = array<i64: 1, 1024>}, {pipeline_mode = #tpu.pipeline_mode<synchronous>, transform_indices = @transform_15, window_bounds = array<i64: 1024, 896>}, {pipeline_mode = #tpu.pipeline_mode<synchronous>, transform_indices = @transform_16, window_bounds = array<i64: 1, 896>}, {transform_indices = @transform_17, window_bounds = array<i64: 8, 896>}]} {
    %c0 = arith.constant 0 : index
    %c0_0 = arith.constant 0 : index
    %0 = vector.load %arg1[%c0, %c0_0] : memref<8x128xbf16, #tpu.memory_space<vmem>>, vector<8x128xbf16>
    %c0_1 = arith.constant 0 : index
    %c0_2 = arith.constant 0 : index
    %1 = vector.load %arg2[%c0_1, %c0_2] : memref<128x128xbf16, #tpu.memory_space<vmem>>, vector<128x128xbf16>
    %cst = arith.constant dense<0.000000e+00> : vector<8x128xf32>
    %2 = tpu.matmul %0, %1, %cst {dimension_numbers = #tpu.dot_dimension_numbers<[1], [0], [0], [1], [0, 0, 1, 1], [], []>} : vector<8x128xbf16>, vector<128x128xbf16>, vector<8x128xf32> -> vector<8x128xf32>
    %c0_3 = arith.constant 0 : index
    %c0_4 = arith.constant 0 : index
    %3 = vector.load %arg3[%c0_3, %c0_4] : memref<1x128xf32, #tpu.memory_space<vmem>>, vector<1x128xf32>
    %4 = vector.broadcast %3 : vector<1x128xf32> to vector<8x128xf32>
    %5 = arith.addf %2, %4 : vector<8x128xf32>
    %cst_5 = arith.constant 0.000000e+00 : f32
    %6 = vector.broadcast %cst_5 : f32 to vector<8x128xf32>
    %7 = arith.cmpf ogt, %5, %6 : vector<8x128xf32>
    %cst_6 = arith.constant 2.000000e-01 : f32
    %8 = vector.broadcast %cst_6 : f32 to vector<8x128xf32>
    %9 = arith.mulf %8, %5 : vector<8x128xf32>
    %10 = arith.select %7, %5, %9 : vector<8x128xi1>, vector<8x128xf32>
    %11 = arith.truncf %10 : vector<8x128xf32> to vector<8x128xbf16>
    %c0_7 = arith.constant 0 : index
    %c0_8 = arith.constant 0 : index
    %12 = vector.load %arg4[%c0_7, %c0_8] : memref<128x256xbf16, #tpu.memory_space<vmem>>, vector<128x256xbf16>
    %cst_9 = arith.constant dense<0.000000e+00> : vector<8x256xf32>
    %13 = tpu.matmul %11, %12, %cst_9 {dimension_numbers = #tpu.dot_dimension_numbers<[1], [0], [0], [1], [0, 0, 1, 1], [], []>} : vector<8x128xbf16>, vector<128x256xbf16>, vector<8x256xf32> -> vector<8x256xf32>
    %c0_10 = arith.constant 0 : index
    %c0_11 = arith.constant 0 : index
    %14 = vector.load %arg5[%c0_10, %c0_11] : memref<1x256xf32, #tpu.memory_space<vmem>>, vector<1x256xf32>
    %15 = vector.broadcast %14 : vector<1x256xf32> to vector<8x256xf32>
    %16 = arith.addf %13, %15 : vector<8x256xf32>
    %c0_12 = arith.constant 0 : index
    %c0_13 = arith.constant 0 : index
    %17 = vector.load %arg6[%c0_12, %c0_13] : memref<1x256xf32, #tpu.memory_space<vmem>>, vector<1x256xf32>
    %18 = vector.broadcast %17 : vector<1x256xf32> to vector<8x256xf32>
    %19 = arith.mulf %16, %18 : vector<8x256xf32>
    %c0_14 = arith.constant 0 : index
    %c0_15 = arith.constant 0 : index
    %20 = vector.load %arg7[%c0_14, %c0_15] : memref<1x256xf32, #tpu.memory_space<vmem>>, vector<1x256xf32>
    %21 = vector.broadcast %20 : vector<1x256xf32> to vector<8x256xf32>
    %22 = arith.addf %19, %21 : vector<8x256xf32>
    %cst_16 = arith.constant 0.000000e+00 : f32
    %23 = vector.broadcast %cst_16 : f32 to vector<8x256xf32>
    %24 = arith.cmpf ogt, %22, %23 : vector<8x256xf32>
    %cst_17 = arith.constant 2.000000e-01 : f32
    %25 = vector.broadcast %cst_17 : f32 to vector<8x256xf32>
    %26 = arith.mulf %25, %22 : vector<8x256xf32>
    %27 = arith.select %24, %22, %26 : vector<8x256xi1>, vector<8x256xf32>
    %28 = arith.truncf %27 : vector<8x256xf32> to vector<8x256xbf16>
    %c0_18 = arith.constant 0 : index
    %c0_19 = arith.constant 0 : index
    %29 = vector.load %arg8[%c0_18, %c0_19] : memref<256x512xbf16, #tpu.memory_space<vmem>>, vector<256x512xbf16>
    %cst_20 = arith.constant dense<0.000000e+00> : vector<8x512xf32>
    %30 = tpu.matmul %28, %29, %cst_20 {dimension_numbers = #tpu.dot_dimension_numbers<[1], [0], [0], [1], [0, 0, 1, 1], [], []>} : vector<8x256xbf16>, vector<256x512xbf16>, vector<8x512xf32> -> vector<8x512xf32>
    %c0_21 = arith.constant 0 : index
    %c0_22 = arith.constant 0 : index
    %31 = vector.load %arg9[%c0_21, %c0_22] : memref<1x512xf32, #tpu.memory_space<vmem>>, vector<1x512xf32>
    %32 = vector.broadcast %31 : vector<1x512xf32> to vector<8x512xf32>
    %33 = arith.addf %30, %32 : vector<8x512xf32>
    %c0_23 = arith.constant 0 : index
    %c0_24 = arith.constant 0 : index
    %34 = vector.load %arg10[%c0_23, %c0_24] : memref<1x512xf32, #tpu.memory_space<vmem>>, vector<1x512xf32>
    %35 = vector.broadcast %34 : vector<1x512xf32> to vector<8x512xf32>
    %36 = arith.mulf %33, %35 : vector<8x512xf32>
    %c0_25 = arith.constant 0 : index
    %c0_26 = arith.constant 0 : index
    %37 = vector.load %arg11[%c0_25, %c0_26] : memref<1x512xf32, #tpu.memory_space<vmem>>, vector<1x512xf32>
    %38 = vector.broadcast %37 : vector<1x512xf32> to vector<8x512xf32>
    %39 = arith.addf %36, %38 : vector<8x512xf32>
    %cst_27 = arith.constant 0.000000e+00 : f32
    %40 = vector.broadcast %cst_27 : f32 to vector<8x512xf32>
    %41 = arith.cmpf ogt, %39, %40 : vector<8x512xf32>
    %cst_28 = arith.constant 2.000000e-01 : f32
    %42 = vector.broadcast %cst_28 : f32 to vector<8x512xf32>
    %43 = arith.mulf %42, %39 : vector<8x512xf32>
    %44 = arith.select %41, %39, %43 : vector<8x512xi1>, vector<8x512xf32>
    %45 = arith.truncf %44 : vector<8x512xf32> to vector<8x512xbf16>
    %c0_29 = arith.constant 0 : index
    %c0_30 = arith.constant 0 : index
    %46 = vector.load %arg12[%c0_29, %c0_30] : memref<512x1024xbf16, #tpu.memory_space<vmem>>, vector<512x1024xbf16>
    %cst_31 = arith.constant dense<0.000000e+00> : vector<8x1024xf32>
    %47 = tpu.matmul %45, %46, %cst_31 {dimension_numbers = #tpu.dot_dimension_numbers<[1], [0], [0], [1], [0, 0, 1, 1], [], []>} : vector<8x512xbf16>, vector<512x1024xbf16>, vector<8x1024xf32> -> vector<8x1024xf32>
    %c0_32 = arith.constant 0 : index
    %c0_33 = arith.constant 0 : index
    %48 = vector.load %arg13[%c0_32, %c0_33] : memref<1x1024xf32, #tpu.memory_space<vmem>>, vector<1x1024xf32>
    %49 = vector.broadcast %48 : vector<1x1024xf32> to vector<8x1024xf32>
    %50 = arith.addf %47, %49 : vector<8x1024xf32>
    %c0_34 = arith.constant 0 : index
    %c0_35 = arith.constant 0 : index
    %51 = vector.load %arg14[%c0_34, %c0_35] : memref<1x1024xf32, #tpu.memory_space<vmem>>, vector<1x1024xf32>
    %52 = vector.broadcast %51 : vector<1x1024xf32> to vector<8x1024xf32>
    %53 = arith.mulf %50, %52 : vector<8x1024xf32>
    %c0_36 = arith.constant 0 : index
    %c0_37 = arith.constant 0 : index
    %54 = vector.load %arg15[%c0_36, %c0_37] : memref<1x1024xf32, #tpu.memory_space<vmem>>, vector<1x1024xf32>
    %55 = vector.broadcast %54 : vector<1x1024xf32> to vector<8x1024xf32>
    %56 = arith.addf %53, %55 : vector<8x1024xf32>
    %cst_38 = arith.constant 0.000000e+00 : f32
    %57 = vector.broadcast %cst_38 : f32 to vector<8x1024xf32>
    %58 = arith.cmpf ogt, %56, %57 : vector<8x1024xf32>
    %cst_39 = arith.constant 2.000000e-01 : f32
    %59 = vector.broadcast %cst_39 : f32 to vector<8x1024xf32>
    %60 = arith.mulf %59, %56 : vector<8x1024xf32>
    %61 = arith.select %58, %56, %60 : vector<8x1024xi1>, vector<8x1024xf32>
    %62 = arith.truncf %61 : vector<8x1024xf32> to vector<8x1024xbf16>
    %c0_40 = arith.constant 0 : index
    %c0_41 = arith.constant 0 : index
    %63 = vector.load %arg16[%c0_40, %c0_41] : memref<1024x896xbf16, #tpu.memory_space<vmem>>, vector<1024x896xbf16>
    %cst_42 = arith.constant dense<0.000000e+00> : vector<8x896xf32>
    %64 = tpu.matmul %62, %63, %cst_42 {dimension_numbers = #tpu.dot_dimension_numbers<[1], [0], [0], [1], [0, 0, 1, 1], [], []>} : vector<8x1024xbf16>, vector<1024x896xbf16>, vector<8x896xf32> -> vector<8x896xf32>
    %c0_43 = arith.constant 0 : index
    %c0_44 = arith.constant 0 : index
    %65 = vector.load %arg17[%c0_43, %c0_44] : memref<1x896xf32, #tpu.memory_space<vmem>>, vector<1x896xf32>
    %66 = vector.broadcast %65 : vector<1x896xf32> to vector<8x896xf32>
    %67 = arith.addf %64, %66 : vector<8x896xf32>
    %68 = math.tanh %67 : vector<8x896xf32>
    %c0_45 = arith.constant 0 : index
    %c0_46 = arith.constant 0 : index
    %69 = vector.load %arg18[%c0_45, %c0_46] : memref<8x896xf32, #tpu.memory_space<vmem>>, vector<8x896xf32>
    tpu.vector_store %arg18[%c0_45, %c0_46], %68 {strides = array<i32>} : memref<8x896xf32, #tpu.memory_space<vmem>>, vector<8x896xf32>,
    return
  }
  func.func @transform_0(%arg0: i32) -> (i32, i32) {
    %c0_i32 = arith.constant 0 : i32
    %c0_i32_0 = arith.constant 0 : i32
    return %arg0, %c0_i32 : i32, i32
  }
  func.func @transform_1(%arg0: i32) -> (i32, i32) {
    %c0_i32 = arith.constant 0 : i32
    %c0_i32_0 = arith.constant 0 : i32
    %c0_i32_1 = arith.constant 0 : i32
    return %c0_i32, %c0_i32_0 : i32, i32
  }
  func.func @transform_2(%arg0: i32) -> (i32, i32) {
    %c0_i32 = arith.constant 0 : i32
    %c0_i32_0 = arith.constant 0 : i32
    %c0_i32_1 = arith.constant 0 : i32
    return %c0_i32, %c0_i32_0 : i32, i32
  }
  func.func @transform_3(%arg0: i32) -> (i32, i32) {
    %c0_i32 = arith.constant 0 : i32
    %c0_i32_0 = arith.constant 0 : i32
    %c0_i32_1 = arith.constant 0 : i32
    return %c0_i32, %c0_i32_0 : i32, i32
  }
  func.func @transform_4(%arg0: i32) -> (i32, i32) {
    %c0_i32 = arith.constant 0 : i32
    %c0_i32_0 = arith.constant 0 : i32
    %c0_i32_1 = arith.constant 0 : i32
    return %c0_i32, %c0_i32_0 : i32, i32
  }
  func.func @transform_5(%arg0: i32) -> (i32, i32) {
    %c0_i32 = arith.constant 0 : i32
    %c0_i32_0 = arith.constant 0 : i32
    %c0_i32_1 = arith.constant 0 : i32
    return %c0_i32, %c0_i32_0 : i32, i32
  }
  func.func @transform_6(%arg0: i32) -> (i32, i32) {
    %c0_i32 = arith.constant 0 : i32
    %c0_i32_0 = arith.constant 0 : i32
    %c0_i32_1 = arith.constant 0 : i32
    return %c0_i32, %c0_i32_0 : i32, i32
  }
  func.func @transform_7(%arg0: i32) -> (i32, i32) {
    %c0_i32 = arith.constant 0 : i32
    %c0_i32_0 = arith.constant 0 : i32
    %c0_i32_1 = arith.constant 0 : i32
    return %c0_i32, %c0_i32_0 : i32, i32
  }
  func.func @transform_8(%arg0: i32) -> (i32, i32) {
    %c0_i32 = arith.constant 0 : i32
    %c0_i32_0 = arith.constant 0 : i32
    %c0_i32_1 = arith.constant 0 : i32
    return %c0_i32, %c0_i32_0 : i32, i32
  }
  func.func @transform_9(%arg0: i32) -> (i32, i32) {
    %c0_i32 = arith.constant 0 : i32
    %c0_i32_0 = arith.constant 0 : i32
    %c0_i32_1 = arith.constant 0 : i32
    return %c0_i32, %c0_i32_0 : i32, i32
  }
  func.func @transform_10(%arg0: i32) -> (i32, i32) {
    %c0_i32 = arith.constant 0 : i32
    %c0_i32_0 = arith.constant 0 : i32
    %c0_i32_1 = arith.constant 0 : i32
    return %c0_i32, %c0_i32_0 : i32, i32
  }
  func.func @transform_11(%arg0: i32) -> (i32, i32) {
    %c0_i32 = arith.constant 0 : i32
    %c0_i32_0 = arith.constant 0 : i32
    %c0_i32_1 = arith.constant 0 : i32
    return %c0_i32, %c0_i32_0 : i32, i32
  }
  func.func @transform_12(%arg0: i32) -> (i32, i32) {
    %c0_i32 = arith.constant 0 : i32
    %c0_i32_0 = arith.constant 0 : i32
    %c0_i32_1 = arith.constant 0 : i32
    return %c0_i32, %c0_i32_0 : i32, i32
  }
  func.func @transform_13(%arg0: i32) -> (i32, i32) {
    %c0_i32 = arith.constant 0 : i32
    %c0_i32_0 = arith.constant 0 : i32
    %c0_i32_1 = arith.constant 0 : i32
    return %c0_i32, %c0_i32_0 : i32, i32
  }
  func.func @transform_14(%arg0: i32) -> (i32, i32) {
    %c0_i32 = arith.constant 0 : i32
    %c0_i32_0 = arith.constant 0 : i32
    %c0_i32_1 = arith.constant 0 : i32
    return %c0_i32, %c0_i32_0 : i32, i32
  }
  func.func @transform_15(%arg0: i32) -> (i32, i32) {
    %c0_i32 = arith.constant 0 : i32
    %c0_i32_0 = arith.constant 0 : i32
    %c0_i32_1 = arith.constant 0 : i32
    return %c0_i32, %c0_i32_0 : i32, i32
  }
  func.func @transform_16(%arg0: i32) -> (i32, i32) {
    %c0_i32 = arith.constant 0 : i32
    %c0_i32_0 = arith.constant 0 : i32
    %c0_i32_1 = arith.constant 0 : i32
    return %c0_i32, %c0_i32_0 : i32, i32
  }
  func.func @transform_17(%arg0: i32) -> (i32, i32) {
    %c0_i32 = arith.constant 0 : i32
    %c0_i32_0 = arith.constant 0 : i32
    return %arg0, %c0_i32 : i32, i32
  }
}

</mosaic_0001>

<llo_original>
// kernel: tpu_custom_call.1
$region0: #{tpu_custom_call.1}
  #allocation0 [shape = 'u32[]', space=smem, size = 0x4, offset = 0x4, fixed_abs, tag = 'smem constant byte address 0x4 - core index']
  #allocation1 [shape = 'u32[144,128]{1,0:T(1,128)}', space=vmem, size = 0x12000, scoped, tag = 'internal scratch']
  %s0 = inlined_call_operand.hbm [shape: bf16[8,128], index: 0, kind: input, shape index: {}]
  %s1 = inlined_call_operand.hbm [shape: bf16[128,128], index: 1, kind: input, shape index: {}]
  %s2 = inlined_call_operand.hbm [shape: f32[1,128], index: 2, kind: input, shape index: {}]
  %s3 = inlined_call_operand.hbm [shape: bf16[128,256], index: 3, kind: input, shape index: {}]
  %s4 = inlined_call_operand.hbm [shape: f32[1,256], index: 4, kind: input, shape index: {}]
  %s5 = inlined_call_operand.hbm [shape: f32[1,256], index: 5, kind: input, shape index: {}]
  %s6 = inlined_call_operand.hbm [shape: f32[1,256], index: 6, kind: input, shape index: {}]
  %s7 = inlined_call_operand.hbm [shape: bf16[256,512], index: 7, kind: input, shape index: {}]
  %s8 = inlined_call_operand.hbm [shape: f32[1,512], index: 8, kind: input, shape index: {}]
  %s9 = inlined_call_operand.hbm [shape: f32[1,512], index: 9, kind: input, shape index: {}]
  %s10 = inlined_call_operand.hbm [shape: f32[1,512], index: 10, kind: input, shape index: {}]
  %s11 = inlined_call_operand.hbm [shape: bf16[512,1024], index: 11, kind: input, shape index: {}]
  %s12 = inlined_call_operand.hbm [shape: f32[1,1024], index: 12, kind: input, shape index: {}]
  %s13 = inlined_call_operand.hbm [shape: f32[1,1024], index: 13, kind: input, shape index: {}]
  %s14 = inlined_call_operand.hbm [shape: f32[1,1024], index: 14, kind: input, shape index: {}]
  %s15 = inlined_call_operand.hbm [shape: bf16[1024,896], index: 15, kind: input, shape index: {}]
  %s16 = inlined_call_operand.hbm [shape: f32[1,896], index: 16, kind: input, shape index: {}]
  %s17 = inlined_call_operand.hbm [shape: f32[8,896], index: 17, kind: output, shape index: {}]
  %s18 = sld [smem:[#allocation0]]
  $region146: #{tpu_custom_call.1} parent=0
    _
  %s20 = ssub.s32 1, %s18
  %s21 = scalar_select 0, %s20, %s18
  $region1: #{tpu_custom_call.1} parent=0
    #allocation2 [shape = 'u8[2048]{0}', space=vmem, size = 0x800, scoped, tag = 'input window, operand 0, single buffered']
    #allocation3 [shape = 's32[1]{0}', space=sflag, size = 0x4, scoped, tag = 'scoped memory for tpu_custom_call.1']
    #allocation4 [shape = 's32[1]{0}', space=sflag, size = 0x4, scoped, tag = 'scoped memory for tpu_custom_call.1']
    #allocation5 [shape = 'u8[32768]{0}', space=vmem, size = 0x8000, scoped, tag = 'input window, operand 1, single buffered']
    #allocation6 [shape = 's32[1]{0}', space=sflag, size = 0x4, scoped, tag = 'scoped memory for tpu_custom_call.1']
    #allocation7 [shape = 'u8[512]{0}', space=vmem, size = 0x400, scoped, tag = 'input window, operand 2, single buffered']
    #allocation8 [shape = 'u8[65536]{0}', space=vmem, size = 0x10000, scoped, tag = 'input window, operand 3, single buffered']
    #allocation9 [shape = 's32[1]{0}', space=sflag, size = 0x4, scoped, tag = 'scoped memory for tpu_custom_call.1']
    #allocation10 [shape = 'u8[1024]{0}', space=vmem, size = 0x400, scoped, tag = 'input window, operand 4, single buffered']
    #allocation11 [shape = 'u8[1024]{0}', space=vmem, size = 0x400, scoped, tag = 'input window, operand 5, single buffered']
    #allocation12 [shape = 's32[1]{0}', space=sflag, size = 0x4, scoped, tag = 'scoped memory for tpu_custom_call.1']
    #allocation13 [shape = 'u8[1024]{0}', space=vmem, size = 0x400, scoped, tag = 'input window, operand 6, single buffered']
    #allocation14 [shape = 'u8[262144]{0}', space=vmem, size = 0x40000, scoped, tag = 'input window, operand 7, single buffered']
    #allocation15 [shape = 's32[1]{0}', space=sflag, size = 0x4, scoped, tag = 'scoped memory for tpu_custom_call.1']
    #allocation16 [shape = 'u8[2048]{0}', space=vmem, size = 0x800, scoped, tag = 'input window, operand 8, single buffered']
    #allocation17 [shape = 'u8[2048]{0}', space=vmem, size = 0x800, scoped, tag = 'input window, operand 9, single buffered']
    #allocation18 [shape = 's32[1]{0}', space=sflag, size = 0x4, scoped, tag = 'scoped memory for tpu_custom_call.1']
    #allocation19 [shape = 'u8[2048]{0}', space=vmem, size = 0x800, scoped, tag = 'input window, operand 10, single buffered']
    #allocation20 [shape = 'u8[1048576]{0}', space=vmem, size = 0x100000, scoped, tag = 'input window, operand 11, single buffered']
    #allocation21 [shape = 's32[1]{0}', space=sflag, size = 0x4, scoped, tag = 'scoped memory for tpu_custom_call.1']
    #allocation22 [shape = 'u8[4096]{0}', space=vmem, size = 0x1000, scoped, tag = 'input window, operand 12, single buffered']
    #allocation23 [shape = 'u8[4096]{0}', space=vmem, size = 0x1000, scoped, tag = 'input window, operand 13, single buffered']
    #allocation24 [shape = 's32[1]{0}', space=sflag, size = 0x4, scoped, tag = 'scoped memory for tpu_custom_call.1']
    #allocation25 [shape = 'u8[4096]{0}', space=vmem, size = 0x1000, scoped, tag = 'input window, operand 14, single buffered']
    #allocation26 [shape = 'u8[1835008]{0}', space=vmem, size = 0x1c0000, scoped, tag = 'input window, operand 15, single buffered']
    #allocation27 [shape = 's32[1]{0}', space=sflag, size = 0x4, scoped, tag = 'scoped memory for tpu_custom_call.1']
    #allocation28 [shape = 'u8[3584]{0}', space=vmem, size = 0x1000, scoped, tag = 'input window, operand 16, single buffered']
    #allocation29 [shape = 'u8[28672]{0}', space=vmem, size = 0x7000, scoped, tag = 'output window, operand 0, single buffered']
    %22 = vsyncpa [#allocation3], 0
    %23 = vsyncpa [#allocation6], 0
    %24 = vsyncpa [#allocation9], 0
    %25 = vsyncpa [#allocation12], 0
    %26 = vsyncpa [#allocation15], 0
    %27 = vsyncpa [#allocation18], 0
    %28 = vsyncpa [#allocation21], 0
    %29 = vsyncpa [#allocation24], 0
    %30 = vsyncpa [#allocation27], 0
    %31 = vsyncpa [#allocation4], 0
    // Predicated region
    $region2: #{tpu_custom_call.1} parent=1 // pred_check
      _
    $region3: #{tpu_custom_call.1} parent=1 // pred_check_branch
      %33 = sbr.rel (0) target = $region5
    $region4: #{tpu_custom_call.1} parent=1 // pred_region
      %s35 = ssub.s32 64, 64
      %36 = vsyncadd [#allocation3], %s35
      %s38 = sshll.u32 [#allocation2], 4
      %s39 = int_to_ptr.vmem [resolvable:$true] %s38
      %41 = dma.hbm_to_vmem [thread:$0]  %s0, 64, %s39, [#allocation3]
    $region5: #{tpu_custom_call.1} parent=1 // pred_fallthru
      _
    // Predicated region
    $region6: #{tpu_custom_call.1} parent=1 // pred_check
      _
    $region7: #{tpu_custom_call.1} parent=1 // pred_check_branch
      %43 = sbr.rel (0) target = $region9
    $region8: #{tpu_custom_call.1} parent=1 // pred_region
      %s45 = ssub.s32 1024, 1024
      %46 = vsyncadd [#allocation6], %s45
      %s47 = sshll.u32 [#allocation5], 4
      %s48 = int_to_ptr.vmem [resolvable:$true] %s47
      %53 = dma.hbm_to_vmem [thread:$0]  %s1, 1024, %s48, [#allocation6], 64, 64, 4
    $region9: #{tpu_custom_call.1} parent=1 // pred_fallthru
      _
    // Predicated region
    $region10: #{tpu_custom_call.1} parent=1 // pred_check
      _
    $region11: #{tpu_custom_call.1} parent=1 // pred_check_branch
      %55 = sbr.rel (0) target = $region13
    $region12: #{tpu_custom_call.1} parent=1 // pred_region
      %s57 = ssub.s32 16, 16
      %58 = vsyncadd [#allocation6], %s57
      %s60 = sshll.u32 [#allocation7], 4
      %s61 = int_to_ptr.vmem [resolvable:$true] %s60
      %63 = dma.hbm_to_vmem [thread:$0]  %s2, 16, %s61, [#allocation6]
    $region13: #{tpu_custom_call.1} parent=1 // pred_fallthru
      _
    // Predicated region
    $region14: #{tpu_custom_call.1} parent=1 // pred_check
      _
    $region15: #{tpu_custom_call.1} parent=1 // pred_check_branch
      %65 = sbr.rel (0) target = $region17
    $region16: #{tpu_custom_call.1} parent=1 // pred_region
      %s67 = ssub.s32 2048, 2048
      %68 = vsyncadd [#allocation9], %s67
      %s69 = sshll.u32 [#allocation8], 4
      %s70 = int_to_ptr.vmem [resolvable:$true] %s69
      %75 = dma.hbm_to_vmem [thread:$0]  %s3, 2048, %s70, [#allocation9], 128, 128, 8
    $region17: #{tpu_custom_call.1} parent=1 // pred_fallthru
      _
    // Predicated region
    $region18: #{tpu_custom_call.1} parent=1 // pred_check
      _
    $region19: #{tpu_custom_call.1} parent=1 // pred_check_branch
      %77 = sbr.rel (0) target = $region21
    $region20: #{tpu_custom_call.1} parent=1 // pred_region
      %s79 = ssub.s32 32, 32
      %80 = vsyncadd [#allocation9], %s79
      %s82 = sshll.u32 [#allocation10], 4
      %s83 = int_to_ptr.vmem [resolvable:$true] %s82
      %85 = dma.hbm_to_vmem [thread:$0]  %s4, 32, %s83, [#allocation9]
    $region21: #{tpu_custom_call.1} parent=1 // pred_fallthru
      _
    // Predicated region
    $region22: #{tpu_custom_call.1} parent=1 // pred_check
      _
    $region23: #{tpu_custom_call.1} parent=1 // pred_check_branch
      %87 = sbr.rel (0) target = $region25
    $region24: #{tpu_custom_call.1} parent=1 // pred_region
      %s89 = ssub.s32 32, 32
      %90 = vsyncadd [#allocation12], %s89
      %s92 = sshll.u32 [#allocation11], 4
      %s93 = int_to_ptr.vmem [resolvable:$true] %s92
      %95 = dma.hbm_to_vmem [thread:$0]  %s5, 32, %s93, [#allocation12]
    $region25: #{tpu_custom_call.1} parent=1 // pred_fallthru
      _
    // Predicated region
    $region26: #{tpu_custom_call.1} parent=1 // pred_check
      _
    $region27: #{tpu_custom_call.1} parent=1 // pred_check_branch
      %97 = sbr.rel (0) target = $region29
    $region28: #{tpu_custom_call.1} parent=1 // pred_region
      %s99 = ssub.s32 32, 32
      %100 = vsyncadd [#allocation12], %s99
      %s102 = sshll.u32 [#allocation13], 4
      %s103 = int_to_ptr.vmem [resolvable:$true] %s102
      %105 = dma.hbm_to_vmem [thread:$0]  %s6, 32, %s103, [#allocation12]
    $region29: #{tpu_custom_call.1} parent=1 // pred_fallthru
      _
    // Predicated region
    $region30: #{tpu_custom_call.1} parent=1 // pred_check
      _
    $region31: #{tpu_custom_call.1} parent=1 // pred_check_branch
      %107 = sbr.rel (0) target = $region33
    $region32: #{tpu_custom_call.1} parent=1 // pred_region
      %s109 = ssub.s32 8192, 8192
      %110 = vsyncadd [#allocation15], %s109
      %s111 = sshll.u32 [#allocation14], 4
      %s112 = int_to_ptr.vmem [resolvable:$true] %s111
      %117 = dma.hbm_to_vmem [thread:$0]  %s7, 8192, %s112, [#allocation15], 256, 256, 16
    $region33: #{tpu_custom_call.1} parent=1 // pred_fallthru
      _
    // Predicated region
    $region34: #{tpu_custom_call.1} parent=1 // pred_check
      _
    $region35: #{tpu_custom_call.1} parent=1 // pred_check_branch
      %119 = sbr.rel (0) target = $region37
    $region36: #{tpu_custom_call.1} parent=1 // pred_region
      %s121 = ssub.s32 64, 64
      %122 = vsyncadd [#allocation15], %s121
      %s124 = sshll.u32 [#allocation16], 4
      %s125 = int_to_ptr.vmem [resolvable:$true] %s124
      %127 = dma.hbm_to_vmem [thread:$0]  %s8, 64, %s125, [#allocation15]
    $region37: #{tpu_custom_call.1} parent=1 // pred_fallthru
      _
    // Predicated region
    $region38: #{tpu_custom_call.1} parent=1 // pred_check
      _
    $region39: #{tpu_custom_call.1} parent=1 // pred_check_branch
      %129 = sbr.rel (0) target = $region41
    $region40: #{tpu_custom_call.1} parent=1 // pred_region
      %s131 = ssub.s32 64, 64
      %132 = vsyncadd [#allocation18], %s131
      %s134 = sshll.u32 [#allocation17], 4
      %s135 = int_to_ptr.vmem [resolvable:$true] %s134
      %137 = dma.hbm_to_vmem [thread:$0]  %s9, 64, %s135, [#allocation18]
    $region41: #{tpu_custom_call.1} parent=1 // pred_fallthru
      _
    // Predicated region
    $region42: #{tpu_custom_call.1} parent=1 // pred_check
      _
    $region43: #{tpu_custom_call.1} parent=1 // pred_check_branch
      %139 = sbr.rel (0) target = $region45
    $region44: #{tpu_custom_call.1} parent=1 // pred_region
      %s141 = ssub.s32 64, 64
      %142 = vsyncadd [#allocation18], %s141
      %s144 = sshll.u32 [#allocation19], 4
      %s145 = int_to_ptr.vmem [resolvable:$true] %s144
      %147 = dma.hbm_to_vmem [thread:$0]  %s10, 64, %s145, [#allocation18]
    $region45: #{tpu_custom_call.1} parent=1 // pred_fallthru
      _
    // Predicated region
    $region46: #{tpu_custom_call.1} parent=1 // pred_check
      _
    $region47: #{tpu_custom_call.1} parent=1 // pred_check_branch
      %149 = sbr.rel (0) target = $region49
    $region48: #{tpu_custom_call.1} parent=1 // pred_region
      %s151 = ssub.s32 32768, 32768
      %152 = vsyncadd [#allocation21], %s151
      %s153 = sshll.u32 [#allocation20], 4
      %s154 = int_to_ptr.vmem [resolvable:$true] %s153
      %159 = dma.hbm_to_vmem [thread:$0]  %s11, 32768, %s154, [#allocation21], 512, 512, 32
    $region49: #{tpu_custom_call.1} parent=1 // pred_fallthru
      _
    // Predicated region
    $region50: #{tpu_custom_call.1} parent=1 // pred_check
      _
    $region51: #{tpu_custom_call.1} parent=1 // pred_check_branch
      %161 = sbr.rel (0) target = $region53
    $region52: #{tpu_custom_call.1} parent=1 // pred_region
      %s163 = ssub.s32 128, 128
      %164 = vsyncadd [#allocation21], %s163
      %s166 = sshll.u32 [#allocation22], 4
      %s167 = int_to_ptr.vmem [resolvable:$true] %s166
      %169 = dma.hbm_to_vmem [thread:$0]  %s12, 128, %s167, [#allocation21]
    $region53: #{tpu_custom_call.1} parent=1 // pred_fallthru
      _
    // Predicated region
    $region54: #{tpu_custom_call.1} parent=1 // pred_check
      _
    $region55: #{tpu_custom_call.1} parent=1 // pred_check_branch
      %171 = sbr.rel (0) target = $region57
    $region56: #{tpu_custom_call.1} parent=1 // pred_region
      %s173 = ssub.s32 128, 128
      %174 = vsyncadd [#allocation24], %s173
      %s176 = sshll.u32 [#allocation23], 4
      %s177 = int_to_ptr.vmem [resolvable:$true] %s176
      %179 = dma.hbm_to_vmem [thread:$0]  %s13, 128, %s177, [#allocation24]
    $region57: #{tpu_custom_call.1} parent=1 // pred_fallthru
      _
    // Predicated region
    $region58: #{tpu_custom_call.1} parent=1 // pred_check
      _
    $region59: #{tpu_custom_call.1} parent=1 // pred_check_branch
      %181 = sbr.rel (0) target = $region61
    $region60: #{tpu_custom_call.1} parent=1 // pred_region
      %s183 = ssub.s32 128, 128
      %184 = vsyncadd [#allocation24], %s183
      %s186 = sshll.u32 [#allocation25], 4
      %s187 = int_to_ptr.vmem [resolvable:$true] %s186
      %189 = dma.hbm_to_vmem [thread:$0]  %s14, 128, %s187, [#allocation24]
    $region61: #{tpu_custom_call.1} parent=1 // pred_fallthru
      _
    // Predicated region
    $region62: #{tpu_custom_call.1} parent=1 // pred_check
      _
    $region63: #{tpu_custom_call.1} parent=1 // pred_check_branch
      %191 = sbr.rel (0) target = $region65
    $region64: #{tpu_custom_call.1} parent=1 // pred_region
      %s193 = ssub.s32 57344, 57344
      %194 = vsyncadd [#allocation27], %s193
      %s195 = sshll.u32 [#allocation26], 4
      %s196 = int_to_ptr.vmem [resolvable:$true] %s195
      %201 = dma.hbm_to_vmem [thread:$0]  %s15, 57344, %s196, [#allocation27], 448, 448, 28
    $region65: #{tpu_custom_call.1} parent=1 // pred_fallthru
      _
    // Predicated region
    $region66: #{tpu_custom_call.1} parent=1 // pred_check
      _
    $region67: #{tpu_custom_call.1} parent=1 // pred_check_branch
      %203 = sbr.rel (0) target = $region69
    $region68: #{tpu_custom_call.1} parent=1 // pred_region
      %s205 = ssub.s32 112, 112
      %206 = vsyncadd [#allocation27], %s205
      %s208 = sshll.u32 [#allocation28], 4
      %s209 = int_to_ptr.vmem [resolvable:$true] %s208
      %211 = dma.hbm_to_vmem [thread:$0]  %s16, 112, %s209, [#allocation27]
    $region69: #{tpu_custom_call.1} parent=1 // pred_fallthru
      _
    // Predicated region
    $region70: #{tpu_custom_call.1} parent=1 // pred_check
      _
    $region71: #{tpu_custom_call.1} parent=1 // pred_check_branch
      %213 = sbr.rel (0) target = $region73
    $region72: #{tpu_custom_call.1} parent=1 // pred_region
      %214 = dma.done [#allocation3], 64
    $region73: #{tpu_custom_call.1} parent=1 // pred_fallthru
      _
    // Predicated region
    $region74: #{tpu_custom_call.1} parent=1 // pred_check
      _
    $region75: #{tpu_custom_call.1} parent=1 // pred_check_branch
      %216 = sbr.rel (0) target = $region77
    $region76: #{tpu_custom_call.1} parent=1 // pred_region
      %217 = dma.done [#allocation6], 1024
    $region77: #{tpu_custom_call.1} parent=1 // pred_fallthru
      _
    // Predicated region
    $region78: #{tpu_custom_call.1} parent=1 // pred_check
      _
    $region79: #{tpu_custom_call.1} parent=1 // pred_check_branch
      %219 = sbr.rel (0) target = $region81
    $region80: #{tpu_custom_call.1} parent=1 // pred_region
      %220 = dma.done [#allocation6], 16
    $region81: #{tpu_custom_call.1} parent=1 // pred_fallthru
      _
    // Predicated region
    $region82: #{tpu_custom_call.1} parent=1 // pred_check
      _
    $region83: #{tpu_custom_call.1} parent=1 // pred_check_branch
      %222 = sbr.rel (0) target = $region85
    $region84: #{tpu_custom_call.1} parent=1 // pred_region
      %223 = dma.done [#allocation9], 2048
    $region85: #{tpu_custom_call.1} parent=1 // pred_fallthru
      _
    // Predicated region
    $region86: #{tpu_custom_call.1} parent=1 // pred_check
      _
    $region87: #{tpu_custom_call.1} parent=1 // pred_check_branch
      %225 = sbr.rel (0) target = $region89
    $region88: #{tpu_custom_call.1} parent=1 // pred_region
      %226 = dma.done [#allocation9], 32
    $region89: #{tpu_custom_call.1} parent=1 // pred_fallthru
      _
    // Predicated region
    $region90: #{tpu_custom_call.1} parent=1 // pred_check
      _
    $region91: #{tpu_custom_call.1} parent=1 // pred_check_branch
      %228 = sbr.rel (0) target = $region93
    $region92: #{tpu_custom_call.1} parent=1 // pred_region
      %229 = dma.done [#allocation12], 32
    $region93: #{tpu_custom_call.1} parent=1 // pred_fallthru
      _
    // Predicated region
    $region94: #{tpu_custom_call.1} parent=1 // pred_check
      _
    $region95: #{tpu_custom_call.1} parent=1 // pred_check_branch
      %231 = sbr.rel (0) target = $region97
    $region96: #{tpu_custom_call.1} parent=1 // pred_region
      %232 = dma.done [#allocation12], 32
    $region97: #{tpu_custom_call.1} parent=1 // pred_fallthru
      _
    // Predicated region
    $region98: #{tpu_custom_call.1} parent=1 // pred_check
      _
    $region99: #{tpu_custom_call.1} parent=1 // pred_check_branch
      %234 = sbr.rel (0) target = $region101
    $region100: #{tpu_custom_call.1} parent=1 // pred_region
      %235 = dma.done [#allocation15], 8192
    $region101: #{tpu_custom_call.1} parent=1 // pred_fallthru
      _
    // Predicated region
    $region102: #{tpu_custom_call.1} parent=1 // pred_check
      _
    $region103: #{tpu_custom_call.1} parent=1 // pred_check_branch
      %237 = sbr.rel (0) target = $region105
    $region104: #{tpu_custom_call.1} parent=1 // pred_region
      %238 = dma.done [#allocation15], 64
    $region105: #{tpu_custom_call.1} parent=1 // pred_fallthru
      _
    // Predicated region
    $region106: #{tpu_custom_call.1} parent=1 // pred_check
      _
    $region107: #{tpu_custom_call.1} parent=1 // pred_check_branch
      %240 = sbr.rel (0) target = $region109
    $region108: #{tpu_custom_call.1} parent=1 // pred_region
      %241 = dma.done [#allocation18], 64
    $region109: #{tpu_custom_call.1} parent=1 // pred_fallthru
      _
    // Predicated region
    $region110: #{tpu_custom_call.1} parent=1 // pred_check
      _
    $region111: #{tpu_custom_call.1} parent=1 // pred_check_branch
      %243 = sbr.rel (0) target = $region113
    $region112: #{tpu_custom_call.1} parent=1 // pred_region
      %244 = dma.done [#allocation18], 64
    $region113: #{tpu_custom_call.1} parent=1 // pred_fallthru
      _
    // Predicated region
    $region114: #{tpu_custom_call.1} parent=1 // pred_check
      _
    $region115: #{tpu_custom_call.1} parent=1 // pred_check_branch
      %246 = sbr.rel (0) target = $region117
    $region116: #{tpu_custom_call.1} parent=1 // pred_region
      %247 = dma.done [#allocation21], 32768
    $region117: #{tpu_custom_call.1} parent=1 // pred_fallthru
      _
    // Predicated region
    $region118: #{tpu_custom_call.1} parent=1 // pred_check
      _
    $region119: #{tpu_custom_call.1} parent=1 // pred_check_branch
      %249 = sbr.rel (0) target = $region121
    $region120: #{tpu_custom_call.1} parent=1 // pred_region
      %250 = dma.done [#allocation21], 128
    $region121: #{tpu_custom_call.1} parent=1 // pred_fallthru
      _
    // Predicated region
    $region122: #{tpu_custom_call.1} parent=1 // pred_check
      _
    $region123: #{tpu_custom_call.1} parent=1 // pred_check_branch
      %252 = sbr.rel (0) target = $region125
    $region124: #{tpu_custom_call.1} parent=1 // pred_region
      %253 = dma.done [#allocation24], 128
    $region125: #{tpu_custom_call.1} parent=1 // pred_fallthru
      _
    // Predicated region
    $region126: #{tpu_custom_call.1} parent=1 // pred_check
      _
    $region127: #{tpu_custom_call.1} parent=1 // pred_check_branch
      %255 = sbr.rel (0) target = $region129
    $region128: #{tpu_custom_call.1} parent=1 // pred_region
      %256 = dma.done [#allocation24], 128
    $region129: #{tpu_custom_call.1} parent=1 // pred_fallthru
      _
    // Predicated region
    $region130: #{tpu_custom_call.1} parent=1 // pred_check
      _
    $region131: #{tpu_custom_call.1} parent=1 // pred_check_branch
      %258 = sbr.rel (0) target = $region133
    $region132: #{tpu_custom_call.1} parent=1 // pred_region
      %259 = dma.done [#allocation27], 57344
    $region133: #{tpu_custom_call.1} parent=1 // pred_fallthru
      _
    // Predicated region
    $region134: #{tpu_custom_call.1} parent=1 // pred_check
      _
    $region135: #{tpu_custom_call.1} parent=1 // pred_check_branch
      %261 = sbr.rel (0) target = $region137
    $region136: #{tpu_custom_call.1} parent=1 // pred_region
      %262 = dma.done [#allocation27], 112
    $region137: #{tpu_custom_call.1} parent=1 // pred_fallthru
      _
    %v264 = vld [vmem:[#allocation2] sm:$0xf]
    %v265 = vld [vmem:[#allocation5] sm:$0xf]
    %v266 = vld [vmem:[#allocation5 + $0x4] sm:$0xf]
    %v267 = vld [vmem:[#allocation5 + $0x8] sm:$0xf]
    %v268 = vld [vmem:[#allocation5 + $0xc] sm:$0xf]
    %v269 = vld [vmem:[#allocation5 + $0x10] sm:$0xf]
    %v270 = vld [vmem:[#allocation5 + $0x14] sm:$0xf]
    %v271 = vld [vmem:[#allocation5 + $0x18] sm:$0xf]
    %v272 = vld [vmem:[#allocation5 + $0x1c] sm:$0xf]
    %v273 = vld [vmem:[#allocation5 + $0x20] sm:$0xf]
    %v274 = vld [vmem:[#allocation5 + $0x24] sm:$0xf]
    %v275 = vld [vmem:[#allocation5 + $0x28] sm:$0xf]
    %v276 = vld [vmem:[#allocation5 + $0x2c] sm:$0xf]
    %v277 = vld [vmem:[#allocation5 + $0x30] sm:$0xf]
    %v278 = vld [vmem:[#allocation5 + $0x34] sm:$0xf]
    %v279 = vld [vmem:[#allocation5 + $0x38] sm:$0xf]
    %v280 = vld [vmem:[#allocation5 + $0x3c] sm:$0xf]
    %v281 = vld [vmem:[#allocation7] sm:$0x1]
    %v283 = vlaneseq
    %v284 = vshrl.u32 %v283, 7
    %v285 = vsub.s32 0, %v284
    %v286 = vrot.slane %v281, %v285
    %v304 = vunpack.c.l.b16 %v265
    %v305 = vunpack.c.l.b16 %v266
    %v306 = vunpack.c.l.b16 %v267
    %v307 = vunpack.c.l.b16 %v268
    %v308 = vunpack.c.l.b16 %v269
    %v309 = vunpack.c.l.b16 %v270
    %v310 = vunpack.c.l.b16 %v271
    %v311 = vunpack.c.l.b16 %v272
    %v312 = vunpack.c.l.b16 %v273
    %v313 = vunpack.c.l.b16 %v274
    %v314 = vunpack.c.l.b16 %v275
    %v315 = vunpack.c.l.b16 %v276
    %v316 = vunpack.c.l.b16 %v277
    %v317 = vunpack.c.l.b16 %v278
    %v318 = vunpack.c.l.b16 %v279
    %v319 = vunpack.c.l.b16 %v280
    %v320 = vpack.c.b16 %v305, %v304
    %v321 = vpack.c.b16 %v307, %v306
    %v322 = vpack.c.b16 %v309, %v308
    %v323 = vpack.c.b16 %v311, %v310
    %v324 = vpack.c.b16 %v313, %v312
    %v325 = vpack.c.b16 %v315, %v314
    %v326 = vpack.c.b16 %v317, %v316
    %v327 = vpack.c.b16 %v319, %v318
    %336 = vmatprep.subr.bf16.mxu0 0
    %337 = vmatpush1.bf16.msra.mxu0 %v327
    %338 = vmatprep.subr.bf16.mxu0 0
    %339 = vmatpush1.bf16.msra.mxu0 %v326
    %340 = vmatprep.subr.bf16.mxu0 0
    %341 = vmatpush1.bf16.msra.mxu0 %v325
    %342 = vmatprep.subr.bf16.mxu0 0
    %343 = vmatpush1.bf16.msra.mxu0 %v324
    %344 = vmatprep.subr.bf16.mxu0 0
    %345 = vmatpush1.bf16.msra.mxu0 %v323
    %346 = vmatprep.subr.bf16.mxu0 0
    %347 = vmatpush1.bf16.msra.mxu0 %v322
    %348 = vmatprep.subr.bf16.mxu0 0
    %349 = vmatpush1.bf16.msra.mxu0 %v321
    %350 = vmatprep.subr.bf16.mxu0 0
    %351 = vmatpush1.bf16.msra.mxu0 %v320
    %352 = vmatprep.subr.bf16.mxu0 0
    %353 = vmatpush2.bf16.msra.mxu0 0
    %354 = vmatprep.subr.bf16.mxu0 0
    %355 = vmatpush2.bf16.msra.mxu0 0
    %356 = vmatprep.subr.bf16.mxu0 0
    %357 = vmatpush2.bf16.msra.mxu0 0
    %358 = vmatprep.subr.bf16.mxu0 0
    %359 = vmatpush2.bf16.msra.mxu0 0
    %360 = vmatprep.subr.bf16.mxu0 0
    %361 = vmatpush2.bf16.msra.mxu0 0
    %362 = vmatprep.subr.bf16.mxu0 0
    %363 = vmatpush2.bf16.msra.mxu0 0
    %364 = vmatprep.subr.bf16.mxu0 0
    %365 = vmatpush2.bf16.msra.mxu0 0
    %366 = vmatprep.subr.bf16.mxu0 0
    %367 = vmatpush2.bf16.msra.mxu0 0
    %368 = vmatprep.mubr.bf16.mxu0 0
    %369 = vmatmul.mubr.bf16.gmra.mxu0 %v264
    %v370 = vpop.f32.mrf.mxu0
    %v371 = vadd.f32 %v286, %v370
    %v372 = vpop.f32.mrf.mxu0
    %v373 = vpop.f32.mrf.mxu0
    %v374 = vpop.f32.mrf.mxu0
    %375 = vdwg.mxu0
    %vm376 = vcmp.gt.f32.partialorder %v371, 0.0
    %v377 = vmul.f32 %v371, 0.2
    %v378 = vsel %vm376, %v371, %v377
    %v379 = vpack.c.bf16 %v378, %v378
    %v380 = vld [vmem:[#allocation8] sm:$0xff]
    %v381 = vld [vmem:[#allocation8 + $0x8] sm:$0xff]
    %v382 = vld [vmem:[#allocation8 + $0x10] sm:$0xff]
    %v383 = vld [vmem:[#allocation8 + $0x18] sm:$0xff]
    %v384 = vld [vmem:[#allocation8 + $0x20] sm:$0xff]
    %v385 = vld [vmem:[#allocation8 + $0x28] sm:$0xff]
    %v386 = vld [vmem:[#allocation8 + $0x30] sm:$0xff]
    %v387 = vld [vmem:[#allocation8 + $0x38] sm:$0xff]
    %v388 = vld [vmem:[#allocation8 + $0x40] sm:$0xff]
    %v389 = vld [vmem:[#allocation8 + $0x48] sm:$0xff]
    %v390 = vld [vmem:[#allocation8 + $0x50] sm:$0xff]
    %v391 = vld [vmem:[#allocation8 + $0x58] sm:$0xff]
    %v392 = vld [vmem:[#allocation8 + $0x60] sm:$0xff]
    %v393 = vld [vmem:[#allocation8 + $0x68] sm:$0xff]
    %v394 = vld [vmem:[#allocation8 + $0x70] sm:$0xff]
    %v395 = vld [vmem:[#allocation8 + $0x78] sm:$0xff]
    %v396 = vld [vmem:[#allocation10] sm:$0x3]
    %v398 = vlaneseq
    %v399 = vshrl.u32 %v398, 7
    %v400 = vsub.s32 0, %v399
    %v401 = vrot.slane %v396, %v400
    %v402 = vlaneseq
    %v403 = vshrl.u32 %v402, 7
    %v404 = vsub.s32 1, %v403
    %v405 = vrot.slane %v396, %v404
    %v424 = vunpack.c.l.b16 %v380
    %v425 = vunpack.c.h.b16 %v380
    %v426 = vunpack.c.l.b16 %v381
    %v427 = vunpack.c.h.b16 %v381
    %v428 = vunpack.c.l.b16 %v382
    %v429 = vunpack.c.h.b16 %v382
    %v430 = vunpack.c.l.b16 %v383
    %v431 = vunpack.c.h.b16 %v383
    %v432 = vunpack.c.l.b16 %v384
    %v433 = vunpack.c.h.b16 %v384
    %v434 = vunpack.c.l.b16 %v385
    %v435 = vunpack.c.h.b16 %v385
    %v436 = vunpack.c.l.b16 %v386
    %v437 = vunpack.c.h.b16 %v386
    %v438 = vunpack.c.l.b16 %v387
    %v439 = vunpack.c.h.b16 %v387
    %v440 = vunpack.c.l.b16 %v388
    %v441 = vunpack.c.h.b16 %v388
    %v442 = vunpack.c.l.b16 %v389
    %v443 = vunpack.c.h.b16 %v389
    %v444 = vunpack.c.l.b16 %v390
    %v445 = vunpack.c.h.b16 %v390
    %v446 = vunpack.c.l.b16 %v391
    %v447 = vunpack.c.h.b16 %v391
    %v448 = vunpack.c.l.b16 %v392
    %v449 = vunpack.c.h.b16 %v392
    %v450 = vunpack.c.l.b16 %v393
    %v451 = vunpack.c.h.b16 %v393
    %v452 = vunpack.c.l.b16 %v394
    %v453 = vunpack.c.h.b16 %v394
    %v454 = vunpack.c.l.b16 %v395
    %v455 = vunpack.c.h.b16 %v395
    %v456 = vpack.c.b16 %v426, %v424
    %v457 = vpack.c.b16 %v427, %v425
    %v458 = vpack.c.b16 %v430, %v428
    %v459 = vpack.c.b16 %v431, %v429
    %v460 = vpack.c.b16 %v434, %v432
    %v461 = vpack.c.b16 %v435, %v433
    %v462 = vpack.c.b16 %v438, %v436
    %v463 = vpack.c.b16 %v439, %v437
    %v464 = vpack.c.b16 %v442, %v440
    %v465 = vpack.c.b16 %v443, %v441
    %v466 = vpack.c.b16 %v446, %v444
    %v467 = vpack.c.b16 %v447, %v445
    %v468 = vpack.c.b16 %v450, %v448
    %v469 = vpack.c.b16 %v451, %v449
    %v470 = vpack.c.b16 %v454, %v452
    %v471 = vpack.c.b16 %v455, %v453
    %488 = vmatprep.subr.bf16.mxu0 %v471
    %489 = vmatpush1.bf16.msra.mxu0 %v470
    %490 = vmatprep.subr.bf16.mxu0 %v469
    %491 = vmatpush1.bf16.msra.mxu0 %v468
    %492 = vmatprep.subr.bf16.mxu0 %v467
    %493 = vmatpush1.bf16.msra.mxu0 %v466
    %494 = vmatprep.subr.bf16.mxu0 %v465
    %495 = vmatpush1.bf16.msra.mxu0 %v464
    %496 = vmatprep.subr.bf16.mxu0 %v463
    %497 = vmatpush1.bf16.msra.mxu0 %v462
    %498 = vmatprep.subr.bf16.mxu0 %v461
    %499 = vmatpush1.bf16.msra.mxu0 %v460
    %500 = vmatprep.subr.bf16.mxu0 %v459
    %501 = vmatpush1.bf16.msra.mxu0 %v458
    %502 = vmatprep.subr.bf16.mxu0 %v457
    %503 = vmatpush1.bf16.msra.mxu0 %v456
    %504 = vmatprep.subr.bf16.mxu0 0
    %505 = vmatpush2.bf16.msra.mxu0 0
    %506 = vmatprep.subr.bf16.mxu0 0
    %507 = vmatpush2.bf16.msra.mxu0 0
    %508 = vmatprep.subr.bf16.mxu0 0
    %509 = vmatpush2.bf16.msra.mxu0 0
    %510 = vmatprep.subr.bf16.mxu0 0
    %511 = vmatpush2.bf16.msra.mxu0 0
    %512 = vmatprep.subr.bf16.mxu0 0
    %513 = vmatpush2.bf16.msra.mxu0 0
    %514 = vmatprep.subr.bf16.mxu0 0
    %515 = vmatpush2.bf16.msra.mxu0 0
    %516 = vmatprep.subr.bf16.mxu0 0
    %517 = vmatpush2.bf16.msra.mxu0 0
    %518 = vmatprep.subr.bf16.mxu0 0
    %519 = vmatpush2.bf16.msra.mxu0 0
    %520 = vmatprep.mubr.bf16.mxu0 0
    %521 = vmatmul.mubr.bf16.gmra.mxu0 %v379
    %v522 = vpop.f32.mrf.mxu0
    %v523 = vadd.f32 %v401, %v522
    %v524 = vpop.f32.mrf.mxu0
    %v525 = vadd.f32 %v405, %v524
    %v526 = vpop.f32.mrf.mxu0
    %v527 = vpop.f32.mrf.mxu0
    %528 = vdwg.mxu0
    %v529 = vld [vmem:[#allocation11] sm:$0x3]
    %v531 = vlaneseq
    %v532 = vshrl.u32 %v531, 7
    %v533 = vsub.s32 0, %v532
    %v534 = vrot.slane %v529, %v533
    %v535 = vlaneseq
    %v536 = vshrl.u32 %v535, 7
    %v537 = vsub.s32 1, %v536
    %v538 = vrot.slane %v529, %v537
    %v541 = vmul.f32 %v523, %v534
    %v542 = vmul.f32 %v525, %v538
    %v543 = vld [vmem:[#allocation13] sm:$0x3]
    %v545 = vlaneseq
    %v546 = vshrl.u32 %v545, 7
    %v547 = vsub.s32 0, %v546
    %v548 = vrot.slane %v543, %v547
    %v549 = vlaneseq
    %v550 = vshrl.u32 %v549, 7
    %v551 = vsub.s32 1, %v550
    %v552 = vrot.slane %v543, %v551
    %v555 = vadd.f32 %v541, %v548
    %v556 = vadd.f32 %v542, %v552
    %vm557 = vcmp.gt.f32.partialorder %v555, 0.0
    %vm558 = vcmp.gt.f32.partialorder %v556, 0.0
    %v559 = vmul.f32 %v555, 0.2
    %v560 = vmul.f32 %v556, 0.2
    %v561 = vsel %vm557, %v555, %v559
    %v562 = vsel %vm558, %v556, %v560
    %v563 = vpack.c.bf16 %v561, %v561
    %v564 = vpack.c.bf16 %v562, %v562
    %v565 = vld [vmem:[#allocation14] sm:$0xff]
    %v566 = vld [vmem:[#allocation14 + $0x8] sm:$0xff]
    %v567 = vld [vmem:[#allocation14 + $0x10] sm:$0xff]
    %v568 = vld [vmem:[#allocation14 + $0x18] sm:$0xff]
    %v569 = vld [vmem:[#allocation14 + $0x20] sm:$0xff]
    %v570 = vld [vmem:[#allocation14 + $0x28] sm:$0xff]
    %v571 = vld [vmem:[#allocation14 + $0x30] sm:$0xff]
    %v572 = vld [vmem:[#allocation14 + $0x38] sm:$0xff]
    %v573 = vld [vmem:[#allocation14 + $0x40] sm:$0xff]
    %v574 = vld [vmem:[#allocation14 + $0x48] sm:$0xff]
    %v575 = vld [vmem:[#allocation14 + $0x50] sm:$0xff]
    %v576 = vld [vmem:[#allocation14 + $0x58] sm:$0xff]
    %v577 = vld [vmem:[#allocation14 + $0x60] sm:$0xff]
    %v578 = vld [vmem:[#allocation14 + $0x68] sm:$0xff]
    %v579 = vld [vmem:[#allocation14 + $0x70] sm:$0xff]
    %v580 = vld [vmem:[#allocation14 + $0x78] sm:$0xff]
    %v581 = vld [vmem:[#allocation14 + $0x80] sm:$0xff]
    %v582 = vld [vmem:[#allocation14 + $0x88] sm:$0xff]
    %v583 = vld [vmem:[#allocation14 + $0x90] sm:$0xff]
    %v584 = vld [vmem:[#allocation14 + $0x98] sm:$0xff]
    %v585 = vld [vmem:[#allocation14 + $0xa0] sm:$0xff]
    %v586 = vld [vmem:[#allocation14 + $0xa8] sm:$0xff]
    %v587 = vld [vmem:[#allocation14 + $0xb0] sm:$0xff]
    %v588 = vld [vmem:[#allocation14 + $0xb8] sm:$0xff]
    %v589 = vld [vmem:[#allocation14 + $0xc0] sm:$0xff]
    %v590 = vld [vmem:[#allocation14 + $0xc8] sm:$0xff]
    %v591 = vld [vmem:[#allocation14 + $0xd0] sm:$0xff]
    %v592 = vld [vmem:[#allocation14 + $0xd8] sm:$0xff]
    %v593 = vld [vmem:[#allocation14 + $0xe0] sm:$0xff]
    %v594 = vld [vmem:[#allocation14 + $0xe8] sm:$0xff]
    %v595 = vld [vmem:[#allocation14 + $0xf0] sm:$0xff]
    %v596 = vld [vmem:[#allocation14 + $0xf8] sm:$0xff]
    %v597 = vld [vmem:[#allocation14 + $0x100] sm:$0xff]
    %v598 = vld [vmem:[#allocation14 + $0x108] sm:$0xff]
    %v599 = vld [vmem:[#allocation14 + $0x110] sm:$0xff]
    %v600 = vld [vmem:[#allocation14 + $0x118] sm:$0xff]
    %v601 = vld [vmem:[#allocation14 + $0x120] sm:$0xff]
    %v602 = vld [vmem:[#allocation14 + $0x128] sm:$0xff]
    %v603 = vld [vmem:[#allocation14 + $0x130] sm:$0xff]
    %v604 = vld [vmem:[#allocation14 + $0x138] sm:$0xff]
    %v605 = vld [vmem:[#allocation14 + $0x140] sm:$0xff]
    %v606 = vld [vmem:[#allocation14 + $0x148] sm:$0xff]
    %v607 = vld [vmem:[#allocation14 + $0x150] sm:$0xff]
    %v608 = vld [vmem:[#allocation14 + $0x158] sm:$0xff]
    %v609 = vld [vmem:[#allocation14 + $0x160] sm:$0xff]
    %v610 = vld [vmem:[#allocation14 + $0x168] sm:$0xff]
    %v611 = vld [vmem:[#allocation14 + $0x170] sm:$0xff]
    %v612 = vld [vmem:[#allocation14 + $0x178] sm:$0xff]
    %v613 = vld [vmem:[#allocation14 + $0x180] sm:$0xff]
    %v614 = vld [vmem:[#allocation14 + $0x188] sm:$0xff]
    %v615 = vld [vmem:[#allocation14 + $0x190] sm:$0xff]
    %v616 = vld [vmem:[#allocation14 + $0x198] sm:$0xff]
    %v617 = vld [vmem:[#allocation14 + $0x1a0] sm:$0xff]
    %v618 = vld [vmem:[#allocation14 + $0x1a8] sm:$0xff]
    %v619 = vld [vmem:[#allocation14 + $0x1b0] sm:$0xff]
    %v620 = vld [vmem:[#allocation14 + $0x1b8] sm:$0xff]
    %v621 = vld [vmem:[#allocation14 + $0x1c0] sm:$0xff]
    %v622 = vld [vmem:[#allocation14 + $0x1c8] sm:$0xff]
    %v623 = vld [vmem:[#allocation14 + $0x1d0] sm:$0xff]
    %v624 = vld [vmem:[#allocation14 + $0x1d8] sm:$0xff]
    %v625 = vld [vmem:[#allocation14 + $0x1e0] sm:$0xff]
    %v626 = vld [vmem:[#allocation14 + $0x1e8] sm:$0xff]
    %v627 = vld [vmem:[#allocation14 + $0x1f0] sm:$0xff]
    %v628 = vld [vmem:[#allocation14 + $0x1f8] sm:$0xff]
    %v629 = vld [vmem:[#allocation16] sm:$0xf]
    %v631 = vlaneseq
    %v632 = vshrl.u32 %v631, 7
    %v633 = vsub.s32 0, %v632
    %v634 = vrot.slane %v629, %v633
    %v635 = vlaneseq
    %v636 = vshrl.u32 %v635, 7
    %v637 = vsub.s32 1, %v636
    %v638 = vrot.slane %v629, %v637
    %v639 = vlaneseq
    %v640 = vshrl.u32 %v639, 7
    %v641 = vsub.s32 2, %v640
    %v642 = vrot.slane %v629, %v641
    %v643 = vlaneseq
    %v644 = vshrl.u32 %v643, 7
    %v645 = vsub.s32 3, %v644
    %v646 = vrot.slane %v629, %v645
    %v715 = vunpack.c.l.b16 %v565
    %v716 = vunpack.c.h.b16 %v565
    %v717 = vunpack.c.l.b16 %v566
    %v718 = vunpack.c.h.b16 %v566
    %v719 = vunpack.c.l.b16 %v567
    %v720 = vunpack.c.h.b16 %v567
    %v721 = vunpack.c.l.b16 %v568
    %v722 = vunpack.c.h.b16 %v568
    %v723 = vunpack.c.l.b16 %v569
    %v724 = vunpack.c.h.b16 %v569
    %v725 = vunpack.c.l.b16 %v570
    %v726 = vunpack.c.h.b16 %v570
    %v727 = vunpack.c.l.b16 %v571
    %v728 = vunpack.c.h.b16 %v571
    %v729 = vunpack.c.l.b16 %v572
    %v730 = vunpack.c.h.b16 %v572
    %v731 = vunpack.c.l.b16 %v573
    %v732 = vunpack.c.h.b16 %v573
    %v733 = vunpack.c.l.b16 %v574
    %v734 = vunpack.c.h.b16 %v574
    %v735 = vunpack.c.l.b16 %v575
    %v736 = vunpack.c.h.b16 %v575
    %v737 = vunpack.c.l.b16 %v576
    %v738 = vunpack.c.h.b16 %v576
    %v739 = vunpack.c.l.b16 %v577
    %v740 = vunpack.c.h.b16 %v577
    %v741 = vunpack.c.l.b16 %v578
    %v742 = vunpack.c.h.b16 %v578
    %v743 = vunpack.c.l.b16 %v579
    %v744 = vunpack.c.h.b16 %v579
    %v745 = vunpack.c.l.b16 %v580
    %v746 = vunpack.c.h.b16 %v580
    %v747 = vunpack.c.l.b16 %v581
    %v748 = vunpack.c.h.b16 %v581
    %v749 = vunpack.c.l.b16 %v582
    %v750 = vunpack.c.h.b16 %v582
    %v751 = vunpack.c.l.b16 %v583
    %v752 = vunpack.c.h.b16 %v583
    %v753 = vunpack.c.l.b16 %v584
    %v754 = vunpack.c.h.b16 %v584
    %v755 = vunpack.c.l.b16 %v585
    %v756 = vunpack.c.h.b16 %v585
    %v757 = vunpack.c.l.b16 %v586
    %v758 = vunpack.c.h.b16 %v586
    %v759 = vunpack.c.l.b16 %v587
    %v760 = vunpack.c.h.b16 %v587
    %v761 = vunpack.c.l.b16 %v588
    %v762 = vunpack.c.h.b16 %v588
    %v763 = vunpack.c.l.b16 %v589
    %v764 = vunpack.c.h.b16 %v589
    %v765 = vunpack.c.l.b16 %v590
    %v766 = vunpack.c.h.b16 %v590
    %v767 = vunpack.c.l.b16 %v591
    %v768 = vunpack.c.h.b16 %v591
    %v769 = vunpack.c.l.b16 %v592
    %v770 = vunpack.c.h.b16 %v592
    %v771 = vunpack.c.l.b16 %v593
    %v772 = vunpack.c.h.b16 %v593
    %v773 = vunpack.c.l.b16 %v594
    %v774 = vunpack.c.h.b16 %v594
    %v775 = vunpack.c.l.b16 %v595
    %v776 = vunpack.c.h.b16 %v595
    %v777 = vunpack.c.l.b16 %v596
    %v778 = vunpack.c.h.b16 %v596
    %v779 = vunpack.c.l.b16 %v597
    %v780 = vunpack.c.h.b16 %v597
    %v781 = vunpack.c.l.b16 %v598
    %v782 = vunpack.c.h.b16 %v598
    %v783 = vunpack.c.l.b16 %v599
    %v784 = vunpack.c.h.b16 %v599
    %v785 = vunpack.c.l.b16 %v600
    %v786 = vunpack.c.h.b16 %v600
    %v787 = vunpack.c.l.b16 %v601
    %v788 = vunpack.c.h.b16 %v601
    %v789 = vunpack.c.l.b16 %v602
    %v790 = vunpack.c.h.b16 %v602
    %v791 = vunpack.c.l.b16 %v603
    %v792 = vunpack.c.h.b16 %v603
    %v793 = vunpack.c.l.b16 %v604
    %v794 = vunpack.c.h.b16 %v604
    %v795 = vunpack.c.l.b16 %v605
    %v796 = vunpack.c.h.b16 %v605
    %v797 = vunpack.c.l.b16 %v606
    %v798 = vunpack.c.h.b16 %v606
    %v799 = vunpack.c.l.b16 %v607
    %v800 = vunpack.c.h.b16 %v607
    %v801 = vunpack.c.l.b16 %v608
    %v802 = vunpack.c.h.b16 %v608
    %v803 = vunpack.c.l.b16 %v609
    %v804 = vunpack.c.h.b16 %v609
    %v805 = vunpack.c.l.b16 %v610
    %v806 = vunpack.c.h.b16 %v610
    %v807 = vunpack.c.l.b16 %v611
    %v808 = vunpack.c.h.b16 %v611
    %v809 = vunpack.c.l.b16 %v612
    %v810 = vunpack.c.h.b16 %v612
    %v811 = vunpack.c.l.b16 %v613
    %v812 = vunpack.c.h.b16 %v613
    %v813 = vunpack.c.l.b16 %v614
    %v814 = vunpack.c.h.b16 %v614
    %v815 = vunpack.c.l.b16 %v615
    %v816 = vunpack.c.h.b16 %v615
    %v817 = vunpack.c.l.b16 %v616
    %v818 = vunpack.c.h.b16 %v616
    %v819 = vunpack.c.l.b16 %v617
    %v820 = vunpack.c.h.b16 %v617
    %v821 = vunpack.c.l.b16 %v618
    %v822 = vunpack.c.h.b16 %v618
    %v823 = vunpack.c.l.b16 %v619
    %v824 = vunpack.c.h.b16 %v619
    %v825 = vunpack.c.l.b16 %v620
    %v826 = vunpack.c.h.b16 %v620
    %v827 = vunpack.c.l.b16 %v621
    %v828 = vunpack.c.h.b16 %v621
    %v829 = vunpack.c.l.b16 %v622
    %v830 = vunpack.c.h.b16 %v622
    %v831 = vunpack.c.l.b16 %v623
    %v832 = vunpack.c.h.b16 %v623
    %v833 = vunpack.c.l.b16 %v624
    %v834 = vunpack.c.h.b16 %v624
    %v835 = vunpack.c.l.b16 %v625
    %v836 = vunpack.c.h.b16 %v625
    %v837 = vunpack.c.l.b16 %v626
    %v838 = vunpack.c.h.b16 %v626
    %v839 = vunpack.c.l.b16 %v627
    %v840 = vunpack.c.h.b16 %v627
    %v841 = vunpack.c.l.b16 %v628
    %v842 = vunpack.c.h.b16 %v628
    %v843 = vpack.c.b16 %v719, %v715
    %v844 = vpack.c.b16 %v720, %v716
    %v845 = vpack.c.b16 %v721, %v717
    %v846 = vpack.c.b16 %v722, %v718
    %v847 = vpack.c.b16 %v727, %v723
    %v848 = vpack.c.b16 %v728, %v724
    %v849 = vpack.c.b16 %v729, %v725
    %v850 = vpack.c.b16 %v730, %v726
    %v851 = vpack.c.b16 %v735, %v731
    %v852 = vpack.c.b16 %v736, %v732
    %v853 = vpack.c.b16 %v737, %v733
    %v854 = vpack.c.b16 %v738, %v734
    %v855 = vpack.c.b16 %v743, %v739
    %v856 = vpack.c.b16 %v744, %v740
    %v857 = vpack.c.b16 %v745, %v741
    %v858 = vpack.c.b16 %v746, %v742
    %v859 = vpack.c.b16 %v751, %v747
    %v860 = vpack.c.b16 %v752, %v748
    %v861 = vpack.c.b16 %v753, %v749
    %v862 = vpack.c.b16 %v754, %v750
    %v863 = vpack.c.b16 %v759, %v755
    %v864 = vpack.c.b16 %v760, %v756
    %v865 = vpack.c.b16 %v761, %v757
    %v866 = vpack.c.b16 %v762, %v758
    %v867 = vpack.c.b16 %v767, %v763
    %v868 = vpack.c.b16 %v768, %v764
    %v869 = vpack.c.b16 %v769, %v765
    %v870 = vpack.c.b16 %v770, %v766
    %v871 = vpack.c.b16 %v775, %v771
    %v872 = vpack.c.b16 %v776, %v772
    %v873 = vpack.c.b16 %v777, %v773
    %v874 = vpack.c.b16 %v778, %v774
    %v875 = vpack.c.b16 %v783, %v779
    %v876 = vpack.c.b16 %v784, %v780
    %v877 = vpack.c.b16 %v785, %v781
    %v878 = vpack.c.b16 %v786, %v782
    %v879 = vpack.c.b16 %v791, %v787
    %v880 = vpack.c.b16 %v792, %v788
    %v881 = vpack.c.b16 %v793, %v789
    %v882 = vpack.c.b16 %v794, %v790
    %v883 = vpack.c.b16 %v799, %v795
    %v884 = vpack.c.b16 %v800, %v796
    %v885 = vpack.c.b16 %v801, %v797
    %v886 = vpack.c.b16 %v802, %v798
    %v887 = vpack.c.b16 %v807, %v803
    %v888 = vpack.c.b16 %v808, %v804
    %v889 = vpack.c.b16 %v809, %v805
    %v890 = vpack.c.b16 %v810, %v806
    %v891 = vpack.c.b16 %v815, %v811
    %v892 = vpack.c.b16 %v816, %v812
    %v893 = vpack.c.b16 %v817, %v813
    %v894 = vpack.c.b16 %v818, %v814
    %v895 = vpack.c.b16 %v823, %v819
    %v896 = vpack.c.b16 %v824, %v820
    %v897 = vpack.c.b16 %v825, %v821
    %v898 = vpack.c.b16 %v826, %v822
    %v899 = vpack.c.b16 %v831, %v827
    %v900 = vpack.c.b16 %v832, %v828
    %v901 = vpack.c.b16 %v833, %v829
    %v902 = vpack.c.b16 %v834, %v830
    %v903 = vpack.c.b16 %v839, %v835
    %v904 = vpack.c.b16 %v840, %v836
    %v905 = vpack.c.b16 %v841, %v837
    %v906 = vpack.c.b16 %v842, %v838
    %971 = vmatprep.subr.bf16.mxu0 %v872
    %972 = vmatpush1.bf16.msra.mxu0 %v871
    %973 = vmatprep.subr.bf16.mxu0 %v868
    %974 = vmatpush1.bf16.msra.mxu0 %v867
    %975 = vmatprep.subr.bf16.mxu0 %v864
    %976 = vmatpush1.bf16.msra.mxu0 %v863
    %977 = vmatprep.subr.bf16.mxu0 %v860
    %978 = vmatpush1.bf16.msra.mxu0 %v859
    %979 = vmatprep.subr.bf16.mxu0 %v856
    %980 = vmatpush1.bf16.msra.mxu0 %v855
    %981 = vmatprep.subr.bf16.mxu0 %v852
    %982 = vmatpush1.bf16.msra.mxu0 %v851
    %983 = vmatprep.subr.bf16.mxu0 %v848
    %984 = vmatpush1.bf16.msra.mxu0 %v847
    %985 = vmatprep.subr.bf16.mxu0 %v844
    %986 = vmatpush1.bf16.msra.mxu0 %v843
    %987 = vmatprep.subr.bf16.mxu0 %v904
    %988 = vmatpush2.bf16.msra.mxu0 %v903
    %989 = vmatprep.subr.bf16.mxu0 %v900
    %990 = vmatpush2.bf16.msra.mxu0 %v899
    %991 = vmatprep.subr.bf16.mxu0 %v896
    %992 = vmatpush2.bf16.msra.mxu0 %v895
    %993 = vmatprep.subr.bf16.mxu0 %v892
    %994 = vmatpush2.bf16.msra.mxu0 %v891
    %995 = vmatprep.subr.bf16.mxu0 %v888
    %996 = vmatpush2.bf16.msra.mxu0 %v887
    %997 = vmatprep.subr.bf16.mxu0 %v884
    %998 = vmatpush2.bf16.msra.mxu0 %v883
    %999 = vmatprep.subr.bf16.mxu0 %v880
    %1000 = vmatpush2.bf16.msra.mxu0 %v879
    %1001 = vmatprep.subr.bf16.mxu0 %v876
    %1002 = vmatpush2.bf16.msra.mxu0 %v875
    %1003 = vmatprep.mubr.bf16.mxu0 %v564
    %1004 = vmatmul.mubr.bf16.gmra.mxu0 %v563
    %v1005 = vpop.f32.mrf.mxu0
    %v1006 = vadd.f32 %v634, %v1005
    %v1007 = vpop.f32.mrf.mxu0
    %v1008 = vadd.f32 %v638, %v1007
    %v1009 = vpop.f32.mrf.mxu0
    %v1010 = vpop.f32.mrf.mxu0
    %1011 = vdwg.mxu0
    %1012 = vmatprep.subr.bf16.mxu0 %v874
    %1013 = vmatpush1.bf16.msra.mxu0 %v873
    %1014 = vmatprep.subr.bf16.mxu0 %v870
    %1015 = vmatpush1.bf16.msra.mxu0 %v869
    %1016 = vmatprep.subr.bf16.mxu0 %v866
    %1017 = vmatpush1.bf16.msra.mxu0 %v865
    %1018 = vmatprep.subr.bf16.mxu0 %v862
    %1019 = vmatpush1.bf16.msra.mxu0 %v861
    %1020 = vmatprep.subr.bf16.mxu0 %v858
    %1021 = vmatpush1.bf16.msra.mxu0 %v857
    %1022 = vmatprep.subr.bf16.mxu0 %v854
    %1023 = vmatpush1.bf16.msra.mxu0 %v853
    %1024 = vmatprep.subr.bf16.mxu0 %v850
    %1025 = vmatpush1.bf16.msra.mxu0 %v849
    %1026 = vmatprep.subr.bf16.mxu0 %v846
    %1027 = vmatpush1.bf16.msra.mxu0 %v845
    %1028 = vmatprep.subr.bf16.mxu0 %v906
    %1029 = vmatpush2.bf16.msra.mxu0 %v905
    %1030 = vmatprep.subr.bf16.mxu0 %v902
    %1031 = vmatpush2.bf16.msra.mxu0 %v901
    %1032 = vmatprep.subr.bf16.mxu0 %v898
    %1033 = vmatpush2.bf16.msra.mxu0 %v897
    %1034 = vmatprep.subr.bf16.mxu0 %v894
    %1035 = vmatpush2.bf16.msra.mxu0 %v893
    %1036 = vmatprep.subr.bf16.mxu0 %v890
    %1037 = vmatpush2.bf16.msra.mxu0 %v889
    %1038 = vmatprep.subr.bf16.mxu0 %v886
    %1039 = vmatpush2.bf16.msra.mxu0 %v885
    %1040 = vmatprep.subr.bf16.mxu0 %v882
    %1041 = vmatpush2.bf16.msra.mxu0 %v881
    %1042 = vmatprep.subr.bf16.mxu0 %v878
    %1043 = vmatpush2.bf16.msra.mxu0 %v877
    %1044 = vmatprep.mubr.bf16.mxu0 %v564
    %1045 = vmatmul.mubr.bf16.gmra.mxu0 %v563
    %v1046 = vpop.f32.mrf.mxu0
    %v1047 = vadd.f32 %v642, %v1046
    %v1048 = vpop.f32.mrf.mxu0
    %v1049 = vadd.f32 %v646, %v1048
    %v1050 = vpop.f32.mrf.mxu0
    %v1051 = vpop.f32.mrf.mxu0
    %1052 = vdwg.mxu0
    %v1053 = vld [vmem:[#allocation17] sm:$0xf]
    %v1055 = vlaneseq
    %v1056 = vshrl.u32 %v1055, 7
    %v1057 = vsub.s32 0, %v1056
    %v1058 = vrot.slane %v1053, %v1057
    %v1059 = vlaneseq
    %v1060 = vshrl.u32 %v1059, 7
    %v1061 = vsub.s32 1, %v1060
    %v1062 = vrot.slane %v1053, %v1061
    %v1063 = vlaneseq
    %v1064 = vshrl.u32 %v1063, 7
    %v1065 = vsub.s32 2, %v1064
    %v1066 = vrot.slane %v1053, %v1065
    %v1067 = vlaneseq
    %v1068 = vshrl.u32 %v1067, 7
    %v1069 = vsub.s32 3, %v1068
    %v1070 = vrot.slane %v1053, %v1069
    %v1075 = vmul.f32 %v1006, %v1058
    %v1076 = vmul.f32 %v1008, %v1062
    %v1077 = vmul.f32 %v1047, %v1066
    %v1078 = vmul.f32 %v1049, %v1070
    %v1079 = vld [vmem:[#allocation19] sm:$0xf]
    %v1081 = vlaneseq
    %v1082 = vshrl.u32 %v1081, 7
    %v1083 = vsub.s32 0, %v1082
    %v1084 = vrot.slane %v1079, %v1083
    %v1085 = vlaneseq
    %v1086 = vshrl.u32 %v1085, 7
    %v1087 = vsub.s32 1, %v1086
    %v1088 = vrot.slane %v1079, %v1087
    %v1089 = vlaneseq
    %v1090 = vshrl.u32 %v1089, 7
    %v1091 = vsub.s32 2, %v1090
    %v1092 = vrot.slane %v1079, %v1091
    %v1093 = vlaneseq
    %v1094 = vshrl.u32 %v1093, 7
    %v1095 = vsub.s32 3, %v1094
    %v1096 = vrot.slane %v1079, %v1095
    %v1101 = vadd.f32 %v1075, %v1084
    %v1102 = vadd.f32 %v1076, %v1088
    %v1103 = vadd.f32 %v1077, %v1092
    %v1104 = vadd.f32 %v1078, %v1096
    %vm1105 = vcmp.gt.f32.partialorder %v1101, 0.0
    %vm1106 = vcmp.gt.f32.partialorder %v1102, 0.0
    %vm1107 = vcmp.gt.f32.partialorder %v1103, 0.0
    %vm1108 = vcmp.gt.f32.partialorder %v1104, 0.0
    %v1109 = vmul.f32 %v1101, 0.2
    %v1110 = vmul.f32 %v1102, 0.2
    %v1111 = vmul.f32 %v1103, 0.2
    %v1112 = vmul.f32 %v1104, 0.2
    %v1113 = vsel %vm1105, %v1101, %v1109
    %v1114 = vsel %vm1106, %v1102, %v1110
    %v1115 = vsel %vm1107, %v1103, %v1111
    %v1116 = vsel %vm1108, %v1104, %v1112
    %v1117 = vpack.c.bf16 %v1113, %v1113
    %v1118 = vpack.c.bf16 %v1114, %v1114
    %v1119 = vpack.c.bf16 %v1115, %v1115
    %v1120 = vpack.c.bf16 %v1116, %v1116
    %v1121 = vld [vmem:[#allocation20] sm:$0xff]
    %v1122 = vld [vmem:[#allocation20 + $0x8] sm:$0xff]
    %v1123 = vld [vmem:[#allocation20 + $0x10] sm:$0xff]
    %v1124 = vld [vmem:[#allocation20 + $0x18] sm:$0xff]
    %v1125 = vld [vmem:[#allocation20 + $0x20] sm:$0xff]
    %v1126 = vld [vmem:[#allocation20 + $0x28] sm:$0xff]
    %v1127 = vld [vmem:[#allocation20 + $0x30] sm:$0xff]
    %v1128 = vld [vmem:[#allocation20 + $0x38] sm:$0xff]
    %v1129 = vld [vmem:[#allocation20 + $0x40] sm:$0xff]
    %v1130 = vld [vmem:[#allocation20 + $0x48] sm:$0xff]
    %v1131 = vld [vmem:[#allocation20 + $0x50] sm:$0xff]
    %v1132 = vld [vmem:[#allocation20 + $0x58] sm:$0xff]
    %v1133 = vld [vmem:[#allocation20 + $0x60] sm:$0xff]
    %v1134 = vld [vmem:[#allocation20 + $0x68] sm:$0xff]
    %v1135 = vld [vmem:[#allocation20 + $0x70] sm:$0xff]
    %v1136 = vld [vmem:[#allocation20 + $0x78] sm:$0xff]
    %v1137 = vld [vmem:[#allocation20 + $0x80] sm:$0xff]
    %v1138 = vld [vmem:[#allocation20 + $0x88] sm:$0xff]
    %v1139 = vld [vmem:[#allocation20 + $0x90] sm:$0xff]
    %v1140 = vld [vmem:[#allocation20 + $0x98] sm:$0xff]
    %v1141 = vld [vmem:[#allocation20 + $0xa0] sm:$0xff]
    %v1142 = vld [vmem:[#allocation20 + $0xa8] sm:$0xff]
    %v1143 = vld [vmem:[#allocation20 + $0xb0] sm:$0xff]
    %v1144 = vld [vmem:[#allocation20 + $0xb8] sm:$0xff]
    %v1145 = vld [vmem:[#allocation20 + $0xc0] sm:$0xff]
    %v1146 = vld [vmem:[#allocation20 + $0xc8] sm:$0xff]
    %v1147 = vld [vmem:[#allocation20 + $0xd0] sm:$0xff]
    %v1148 = vld [vmem:[#allocation20 + $0xd8] sm:$0xff]
    %v1149 = vld [vmem:[#allocation20 + $0xe0] sm:$0xff]
    %v1150 = vld [vmem:[#allocation20 + $0xe8] sm:$0xff]
    %v1151 = vld [vmem:[#allocation20 + $0xf0] sm:$0xff]
    %v1152 = vld [vmem:[#allocation20 + $0xf8] sm:$0xff]
    %v1153 = vld [vmem:[#allocation20 + $0x100] sm:$0xff]
    %v1154 = vld [vmem:[#allocation20 + $0x108] sm:$0xff]
    %v1155 = vld [vmem:[#allocation20 + $0x110] sm:$0xff]
    %v1156 = vld [vmem:[#allocation20 + $0x118] sm:$0xff]
    %v1157 = vld [vmem:[#allocation20 + $0x120] sm:$0xff]
    %v1158 = vld [vmem:[#allocation20 + $0x128] sm:$0xff]
    %v1159 = vld [vmem:[#allocation20 + $0x130] sm:$0xff]
    %v1160 = vld [vmem:[#allocation20 + $0x138] sm:$0xff]
    %v1161 = vld [vmem:[#allocation20 + $0x140] sm:$0xff]
    %v1162 = vld [vmem:[#allocation20 + $0x148] sm:$0xff]
    %v1163 = vld [vmem:[#allocation20 + $0x150] sm:$0xff]
    %v1164 = vld [vmem:[#allocation20 + $0x158] sm:$0xff]
    %v1165 = vld [vmem:[#allocation20 + $0x160] sm:$0xff]
    %v1166 = vld [vmem:[#allocation20 + $0x168] sm:$0xff]
    %v1167 = vld [vmem:[#allocation20 + $0x170] sm:$0xff]
    %v1168 = vld [vmem:[#allocation20 + $0x178] sm:$0xff]
    %v1169 = vld [vmem:[#allocation20 + $0x180] sm:$0xff]
    %v1170 = vld [vmem:[#allocation20 + $0x188] sm:$0xff]
    %v1171 = vld [vmem:[#allocation20 + $0x190] sm:$0xff]
    %v1172 = vld [vmem:[#allocation20 + $0x198] sm:$0xff]
    %v1173 = vld [vmem:[#allocation20 + $0x1a0] sm:$0xff]
    %v1174 = vld [vmem:[#allocation20 + $0x1a8] sm:$0xff]
    %v1175 = vld [vmem:[#allocation20 + $0x1b0] sm:$0xff]
    %v1176 = vld [vmem:[#allocation20 + $0x1b8] sm:$0xff]
    %v1177 = vld [vmem:[#allocation20 + $0x1c0] sm:$0xff]
    %v1178 = vld [vmem:[#allocation20 + $0x1c8] sm:$0xff]
    %v1179 = vld [vmem:[#allocation20 + $0x1d0] sm:$0xff]
    %v1180 = vld [vmem:[#allocation20 + $0x1d8] sm:$0xff]
    %v1181 = vld [vmem:[#allocation20 + $0x1e0] sm:$0xff]
    %v1182 = vld [vmem:[#allocation20 + $0x1e8] sm:$0xff]
    %v1183 = vld [vmem:[#allocation20 + $0x1f0] sm:$0xff]
    %v1184 = vld [vmem:[#allocation20 + $0x1f8] sm:$0xff]
    %v1185 = vld [vmem:[#allocation20 + $0x200] sm:$0xff]
    %v1186 = vld [vmem:[#allocation20 + $0x208] sm:$0xff]
    %v1187 = vld [vmem:[#allocation20 + $0x210] sm:$0xff]
    %v1188 = vld [vmem:[#allocation20 + $0x218] sm:$0xff]
    %v1189 = vld [vmem:[#allocation20 + $0x220] sm:$0xff]
    %v1190 = vld [vmem:[#allocation20 + $0x228] sm:$0xff]
    %v1191 = vld [vmem:[#allocation20 + $0x230] sm:$0xff]
    %v1192 = vld [vmem:[#allocation20 + $0x238] sm:$0xff]
    %v1193 = vld [vmem:[#allocation20 + $0x240] sm:$0xff]
    %v1194 = vld [vmem:[#allocation20 + $0x248] sm:$0xff]
    %v1195 = vld [vmem:[#allocation20 + $0x250] sm:$0xff]
    %v1196 = vld [vmem:[#allocation20 + $0x258] sm:$0xff]
    %v1197 = vld [vmem:[#allocation20 + $0x260] sm:$0xff]
    %v1198 = vld [vmem:[#allocation20 + $0x268] sm:$0xff]
    %v1199 = vld [vmem:[#allocation20 + $0x270] sm:$0xff]
    %v1200 = vld [vmem:[#allocation20 + $0x278] sm:$0xff]
    %v1201 = vld [vmem:[#allocation20 + $0x280] sm:$0xff]
    %v1202 = vld [vmem:[#allocation20 + $0x288] sm:$0xff]
    %v1203 = vld [vmem:[#allocation20 + $0x290] sm:$0xff]
    %v1204 = vld [vmem:[#allocation20 + $0x298] sm:$0xff]
    %v1205 = vld [vmem:[#allocation20 + $0x2a0] sm:$0xff]
    %v1206 = vld [vmem:[#allocation20 + $0x2a8] sm:$0xff]
    %v1207 = vld [vmem:[#allocation20 + $0x2b0] sm:$0xff]
    %v1208 = vld [vmem:[#allocation20 + $0x2b8] sm:$0xff]
    %v1209 = vld [vmem:[#allocation20 + $0x2c0] sm:$0xff]
    %v1210 = vld [vmem:[#allocation20 + $0x2c8] sm:$0xff]
    %v1211 = vld [vmem:[#allocation20 + $0x2d0] sm:$0xff]
    %v1212 = vld [vmem:[#allocation20 + $0x2d8] sm:$0xff]
    %v1213 = vld [vmem:[#allocation20 + $0x2e0] sm:$0xff]
    %v1214 = vld [vmem:[#allocation20 + $0x2e8] sm:$0xff]
    %v1215 = vld [vmem:[#allocation20 + $0x2f0] sm:$0xff]
    %v1216 = vld [vmem:[#allocation20 + $0x2f8] sm:$0xff]
    %v1217 = vld [vmem:[#allocation20 + $0x300] sm:$0xff]
    %v1218 = vld [vmem:[#allocation20 + $0x308] sm:$0xff]
    %v1219 = vld [vmem:[#allocation20 + $0x310] sm:$0xff]
    %v1220 = vld [vmem:[#allocation20 + $0x318] sm:$0xff]
    %v1221 = vld [vmem:[#allocation20 + $0x320] sm:$0xff]
    %v1222 = vld [vmem:[#allocation20 + $0x328] sm:$0xff]
    %v1223 = vld [vmem:[#allocation20 + $0x330] sm:$0xff]
    %v1224 = vld [vmem:[#allocation20 + $0x338] sm:$0xff]
    %v1225 = vld [vmem:[#allocation20 + $0x340] sm:$0xff]
    %v1226 = vld [vmem:[#allocation20 + $0x348] sm:$0xff]
    %v1227 = vld [vmem:[#allocation20 + $0x350] sm:$0xff]
    %v1228 = vld [vmem:[#allocation20 + $0x358] sm:$0xff]
    %v1229 = vld [vmem:[#allocation20 + $0x360] sm:$0xff]
    %v1230 = vld [vmem:[#allocation20 + $0x368] sm:$0xff]
    %v1231 = vld [vmem:[#allocation20 + $0x370] sm:$0xff]
    %v1232 = vld [vmem:[#allocation20 + $0x378] sm:$0xff]
    %v1233 = vld [vmem:[#allocation20 + $0x380] sm:$0xff]
    %v1234 = vld [vmem:[#allocation20 + $0x388] sm:$0xff]
    %v1235 = vld [vmem:[#allocation20 + $0x390] sm:$0xff]
    %v1236 = vld [vmem:[#allocation20 + $0x398] sm:$0xff]
    %v1237 = vld [vmem:[#allocation20 + $0x3a0] sm:$0xff]
    %v1238 = vld [vmem:[#allocation20 + $0x3a8] sm:$0xff]
    %v1239 = vld [vmem:[#allocation20 + $0x3b0] sm:$0xff]
    %v1240 = vld [vmem:[#allocation20 + $0x3b8] sm:$0xff]
    %v1241 = vld [vmem:[#allocation20 + $0x3c0] sm:$0xff]
    %v1242 = vld [vmem:[#allocation20 + $0x3c8] sm:$0xff]
    %v1243 = vld [vmem:[#allocation20 + $0x3d0] sm:$0xff]
    %v1244 = vld [vmem:[#allocation20 + $0x3d8] sm:$0xff]
    %v1245 = vld [vmem:[#allocation20 + $0x3e0] sm:$0xff]
    %v1246 = vld [vmem:[#allocation20 + $0x3e8] sm:$0xff]
    %v1247 = vld [vmem:[#allocation20 + $0x3f0] sm:$0xff]
    %v1248 = vld [vmem:[#allocation20 + $0x3f8] sm:$0xff]
    %v1249 = vld [vmem:[#allocation20 + $0x400] sm:$0xff]
    %v1250 = vld [vmem:[#allocation20 + $0x408] sm:$0xff]
    %v1251 = vld [vmem:[#allocation20 + $0x410] sm:$0xff]
    %v1252 = vld [vmem:[#allocation20 + $0x418] sm:$0xff]
    %v1253 = vld [vmem:[#allocation20 + $0x420] sm:$0xff]
    %v1254 = vld [vmem:[#allocation20 + $0x428] sm:$0xff]
    %v1255 = vld [vmem:[#allocation20 + $0x430] sm:$0xff]
    %v1256 = vld [vmem:[#allocation20 + $0x438] sm:$0xff]
    %v1257 = vld [vmem:[#allocation20 + $0x440] sm:$0xff]
    %v1258 = vld [vmem:[#allocation20 + $0x448] sm:$0xff]
    %v1259 = vld [vmem:[#allocation20 + $0x450] sm:$0xff]
    %v1260 = vld [vmem:[#allocation20 + $0x458] sm:$0xff]
    %v1261 = vld [vmem:[#allocation20 + $0x460] sm:$0xff]
    %v1262 = vld [vmem:[#allocation20 + $0x468] sm:$0xff]
    %v1263 = vld [vmem:[#allocation20 + $0x470] sm:$0xff]
    %v1264 = vld [vmem:[#allocation20 + $0x478] sm:$0xff]
    %v1265 = vld [vmem:[#allocation20 + $0x480] sm:$0xff]
    %v1266 = vld [vmem:[#allocation20 + $0x488] sm:$0xff]
    %v1267 = vld [vmem:[#allocation20 + $0x490] sm:$0xff]
    %v1268 = vld [vmem:[#allocation20 + $0x498] sm:$0xff]
    %v1269 = vld [vmem:[#allocation20 + $0x4a0] sm:$0xff]
    %v1270 = vld [vmem:[#allocation20 + $0x4a8] sm:$0xff]
    %v1271 = vld [vmem:[#allocation20 + $0x4b0] sm:$0xff]
    %v1272 = vld [vmem:[#allocation20 + $0x4b8] sm:$0xff]
    %v1273 = vld [vmem:[#allocation20 + $0x4c0] sm:$0xff]
    %v1274 = vld [vmem:[#allocation20 + $0x4c8] sm:$0xff]
    %v1275 = vld [vmem:[#allocation20 + $0x4d0] sm:$0xff]
    %v1276 = vld [vmem:[#allocation20 + $0x4d8] sm:$0xff]
    %v1277 = vld [vmem:[#allocation20 + $0x4e0] sm:$0xff]
    %v1278 = vld [vmem:[#allocation20 + $0x4e8] sm:$0xff]
    %v1279 = vld [vmem:[#allocation20 + $0x4f0] sm:$0xff]
    %v1280 = vld [vmem:[#allocation20 + $0x4f8] sm:$0xff]
    %v1281 = vld [vmem:[#allocation20 + $0x500] sm:$0xff]
    %v1282 = vld [vmem:[#allocation20 + $0x508] sm:$0xff]
    %v1283 = vld [vmem:[#allocation20 + $0x510] sm:$0xff]
    %v1284 = vld [vmem:[#allocation20 + $0x518] sm:$0xff]
    %v1285 = vld [vmem:[#allocation20 + $0x520] sm:$0xff]
    %v1286 = vld [vmem:[#allocation20 + $0x528] sm:$0xff]
    %v1287 = vld [vmem:[#allocation20 + $0x530] sm:$0xff]
    %v1288 = vld [vmem:[#allocation20 + $0x538] sm:$0xff]
    %v1289 = vld [vmem:[#allocation20 + $0x540] sm:$0xff]
    %v1290 = vld [vmem:[#allocation20 + $0x548] sm:$0xff]
    %v1291 = vld [vmem:[#allocation20 + $0x550] sm:$0xff]
    %v1292 = vld [vmem:[#allocation20 + $0x558] sm:$0xff]
    %v1293 = vld [vmem:[#allocation20 + $0x560] sm:$0xff]
    %v1294 = vld [vmem:[#allocation20 + $0x568] sm:$0xff]
    %v1295 = vld [vmem:[#allocation20 + $0x570] sm:$0xff]
    %v1296 = vld [vmem:[#allocation20 + $0x578] sm:$0xff]
    %v1297 = vld [vmem:[#allocation20 + $0x580] sm:$0xff]
    %v1298 = vld [vmem:[#allocation20 + $0x588] sm:$0xff]
    %v1299 = vld [vmem:[#allocation20 + $0x590] sm:$0xff]
    %v1300 = vld [vmem:[#allocation20 + $0x598] sm:$0xff]
    %v1301 = vld [vmem:[#allocation20 + $0x5a0] sm:$0xff]
    %v1302 = vld [vmem:[#allocation20 + $0x5a8] sm:$0xff]
    %v1303 = vld [vmem:[#allocation20 + $0x5b0] sm:$0xff]
    %v1304 = vld [vmem:[#allocation20 + $0x5b8] sm:$0xff]
    %v1305 = vld [vmem:[#allocation20 + $0x5c0] sm:$0xff]
    %v1306 = vld [vmem:[#allocation20 + $0x5c8] sm:$0xff]
    %v1307 = vld [vmem:[#allocation20 + $0x5d0] sm:$0xff]
    %v1308 = vld [vmem:[#allocation20 + $0x5d8] sm:$0xff]
    %v1309 = vld [vmem:[#allocation20 + $0x5e0] sm:$0xff]
    %v1310 = vld [vmem:[#allocation20 + $0x5e8] sm:$0xff]
    %v1311 = vld [vmem:[#allocation20 + $0x5f0] sm:$0xff]
    %v1312 = vld [vmem:[#allocation20 + $0x5f8] sm:$0xff]
    %v1313 = vld [vmem:[#allocation20 + $0x600] sm:$0xff]
    %v1314 = vld [vmem:[#allocation20 + $0x608] sm:$0xff]
    %v1315 = vld [vmem:[#allocation20 + $0x610] sm:$0xff]
    %v1316 = vld [vmem:[#allocation20 + $0x618] sm:$0xff]
    %v1317 = vld [vmem:[#allocation20 + $0x620] sm:$0xff]
    %v1318 = vld [vmem:[#allocation20 + $0x628] sm:$0xff]
    %v1319 = vld [vmem:[#allocation20 + $0x630] sm:$0xff]
    %v1320 = vld [vmem:[#allocation20 + $0x638] sm:$0xff]
    %v1321 = vld [vmem:[#allocation20 + $0x640] sm:$0xff]
    %v1322 = vld [vmem:[#allocation20 + $0x648] sm:$0xff]
    %v1323 = vld [vmem:[#allocation20 + $0x650] sm:$0xff]
    %v1324 = vld [vmem:[#allocation20 + $0x658] sm:$0xff]
    %v1325 = vld [vmem:[#allocation20 + $0x660] sm:$0xff]
    %v1326 = vld [vmem:[#allocation20 + $0x668] sm:$0xff]
    %v1327 = vld [vmem:[#allocation20 + $0x670] sm:$0xff]
    %v1328 = vld [vmem:[#allocation20 + $0x678] sm:$0xff]
    %v1329 = vld [vmem:[#allocation20 + $0x680] sm:$0xff]
    %v1330 = vld [vmem:[#allocation20 + $0x688] sm:$0xff]
    %v1331 = vld [vmem:[#allocation20 + $0x690] sm:$0xff]
    %v1332 = vld [vmem:[#allocation20 + $0x698] sm:$0xff]
    %v1333 = vld [vmem:[#allocation20 + $0x6a0] sm:$0xff]
    %v1334 = vld [vmem:[#allocation20 + $0x6a8] sm:$0xff]
    %v1335 = vld [vmem:[#allocation20 + $0x6b0] sm:$0xff]
    %v1336 = vld [vmem:[#allocation20 + $0x6b8] sm:$0xff]
    %v1337 = vld [vmem:[#allocation20 + $0x6c0] sm:$0xff]
    %v1338 = vld [vmem:[#allocation20 + $0x6c8] sm:$0xff]
    %v1339 = vld [vmem:[#allocation20 + $0x6d0] sm:$0xff]
    %v1340 = vld [vmem:[#allocation20 + $0x6d8] sm:$0xff]
    %v1341 = vld [vmem:[#allocation20 + $0x6e0] sm:$0xff]
    %v1342 = vld [vmem:[#allocation20 + $0x6e8] sm:$0xff]
    %v1343 = vld [vmem:[#allocation20 + $0x6f0] sm:$0xff]
    %v1344 = vld [vmem:[#allocation20 + $0x6f8] sm:$0xff]
    %v1345 = vld [vmem:[#allocation20 + $0x700] sm:$0xff]
    %v1346 = vld [vmem:[#allocation20 + $0x708] sm:$0xff]
    %v1347 = vld [vmem:[#allocation20 + $0x710] sm:$0xff]
    %v1348 = vld [vmem:[#allocation20 + $0x718] sm:$0xff]
    %v1349 = vld [vmem:[#allocation20 + $0x720] sm:$0xff]
    %v1350 = vld [vmem:[#allocation20 + $0x728] sm:$0xff]
    %v1351 = vld [vmem:[#allocation20 + $0x730] sm:$0xff]
    %v1352 = vld [vmem:[#allocation20 + $0x738] sm:$0xff]
    %v1353 = vld [vmem:[#allocation20 + $0x740] sm:$0xff]
    %v1354 = vld [vmem:[#allocation20 + $0x748] sm:$0xff]
    %v1355 = vld [vmem:[#allocation20 + $0x750] sm:$0xff]
    %v1356 = vld [vmem:[#allocation20 + $0x758] sm:$0xff]
    %v1357 = vld [vmem:[#allocation20 + $0x760] sm:$0xff]
    %v1358 = vld [vmem:[#allocation20 + $0x768] sm:$0xff]
    %v1359 = vld [vmem:[#allocation20 + $0x770] sm:$0xff]
    %v1360 = vld [vmem:[#allocation20 + $0x778] sm:$0xff]
    %v1361 = vld [vmem:[#allocation20 + $0x780] sm:$0xff]
    %v1362 = vld [vmem:[#allocation20 + $0x788] sm:$0xff]
    %v1363 = vld [vmem:[#allocation20 + $0x790] sm:$0xff]
    %v1364 = vld [vmem:[#allocation20 + $0x798] sm:$0xff]
    %v1365 = vld [vmem:[#allocation20 + $0x7a0] sm:$0xff]
    %v1366 = vld [vmem:[#allocation20 + $0x7a8] sm:$0xff]
    %v1367 = vld [vmem:[#allocation20 + $0x7b0] sm:$0xff]
    %v1368 = vld [vmem:[#allocation20 + $0x7b8] sm:$0xff]
    %v1369 = vld [vmem:[#allocation20 + $0x7c0] sm:$0xff]
    %v1370 = vld [vmem:[#allocation20 + $0x7c8] sm:$0xff]
    %v1371 = vld [vmem:[#allocation20 + $0x7d0] sm:$0xff]
    %v1372 = vld [vmem:[#allocation20 + $0x7d8] sm:$0xff]
    %v1373 = vld [vmem:[#allocation20 + $0x7e0] sm:$0xff]
    %v1374 = vld [vmem:[#allocation20 + $0x7e8] sm:$0xff]
    %v1375 = vld [vmem:[#allocation20 + $0x7f0] sm:$0xff]
    %v1376 = vld [vmem:[#allocation20 + $0x7f8] sm:$0xff]
    %v1377 = vld [vmem:[#allocation22] sm:$0xff]
    %v1379 = vlaneseq
    %v1380 = vshrl.u32 %v1379, 7
    %v1381 = vsub.s32 0, %v1380
    %v1382 = vrot.slane %v1377, %v1381
    %v1383 = vlaneseq
    %v1384 = vshrl.u32 %v1383, 7
    %v1385 = vsub.s32 1, %v1384
    %v1386 = vrot.slane %v1377, %v1385
    %v1387 = vlaneseq
    %v1388 = vshrl.u32 %v1387, 7
    %v1389 = vsub.s32 2, %v1388
    %v1390 = vrot.slane %v1377, %v1389
    %v1391 = vlaneseq
    %v1392 = vshrl.u32 %v1391, 7
    %v1393 = vsub.s32 3, %v1392
    %v1394 = vrot.slane %v1377, %v1393
    %v1395 = vlaneseq
    %v1396 = vshrl.u32 %v1395, 7
    %v1397 = vsub.s32 4, %v1396
    %v1398 = vrot.slane %v1377, %v1397
    %v1399 = vlaneseq
    %v1400 = vshrl.u32 %v1399, 7
    %v1401 = vsub.s32 5, %v1400
    %v1402 = vrot.slane %v1377, %v1401
    %v1403 = vlaneseq
    %v1404 = vshrl.u32 %v1403, 7
    %v1405 = vsub.s32 6, %v1404
    %v1406 = vrot.slane %v1377, %v1405
    %v1407 = vlaneseq
    %v1408 = vshrl.u32 %v1407, 7
    %v1409 = vsub.s32 7, %v1408
    %v1410 = vrot.slane %v1377, %v1409
    %v1675 = vunpack.c.l.b16 %v1121
    %v1676 = vunpack.c.h.b16 %v1121
    %v1677 = vunpack.c.l.b16 %v1122
    %v1678 = vunpack.c.h.b16 %v1122
    %v1679 = vunpack.c.l.b16 %v1123
    %v1680 = vunpack.c.h.b16 %v1123
    %v1681 = vunpack.c.l.b16 %v1124
    %v1682 = vunpack.c.h.b16 %v1124
    %v1683 = vunpack.c.l.b16 %v1125
    %v1684 = vunpack.c.h.b16 %v1125
    %v1685 = vunpack.c.l.b16 %v1126
    %v1686 = vunpack.c.h.b16 %v1126
    %v1687 = vunpack.c.l.b16 %v1127
    %v1688 = vunpack.c.h.b16 %v1127
    %v1689 = vunpack.c.l.b16 %v1128
    %v1690 = vunpack.c.h.b16 %v1128
    %v1691 = vunpack.c.l.b16 %v1129
    %v1692 = vunpack.c.h.b16 %v1129
    %v1693 = vunpack.c.l.b16 %v1130
    %v1694 = vunpack.c.h.b16 %v1130
    %v1695 = vunpack.c.l.b16 %v1131
    %v1696 = vunpack.c.h.b16 %v1131
    %v1697 = vunpack.c.l.b16 %v1132
    %v1698 = vunpack.c.h.b16 %v1132
    %v1699 = vunpack.c.l.b16 %v1133
    %v1700 = vunpack.c.h.b16 %v1133
    %v1701 = vunpack.c.l.b16 %v1134
    %v1702 = vunpack.c.h.b16 %v1134
    %v1703 = vunpack.c.l.b16 %v1135
    %v1704 = vunpack.c.h.b16 %v1135
    %v1705 = vunpack.c.l.b16 %v1136
    %v1706 = vunpack.c.h.b16 %v1136
    %v1707 = vunpack.c.l.b16 %v1137
    %v1708 = vunpack.c.h.b16 %v1137
    %v1709 = vunpack.c.l.b16 %v1138
    %v1710 = vunpack.c.h.b16 %v1138
    %v1711 = vunpack.c.l.b16 %v1139
    %v1712 = vunpack.c.h.b16 %v1139
    %v1713 = vunpack.c.l.b16 %v1140
    %v1714 = vunpack.c.h.b16 %v1140
    %v1715 = vunpack.c.l.b16 %v1141
    %v1716 = vunpack.c.h.b16 %v1141
    %v1717 = vunpack.c.l.b16 %v1142
    %v1718 = vunpack.c.h.b16 %v1142
    %v1719 = vunpack.c.l.b16 %v1143
    %v1720 = vunpack.c.h.b16 %v1143
    %v1721 = vunpack.c.l.b16 %v1144
    %v1722 = vunpack.c.h.b16 %v1144
    %v1723 = vunpack.c.l.b16 %v1145
    %v1724 = vunpack.c.h.b16 %v1145
    %v1725 = vunpack.c.l.b16 %v1146
    %v1726 = vunpack.c.h.b16 %v1146
    %v1727 = vunpack.c.l.b16 %v1147
    %v1728 = vunpack.c.h.b16 %v1147
    %v1729 = vunpack.c.l.b16 %v1148
    %v1730 = vunpack.c.h.b16 %v1148
    %v1731 = vunpack.c.l.b16 %v1149
    %v1732 = vunpack.c.h.b16 %v1149
    %v1733 = vunpack.c.l.b16 %v1150
    %v1734 = vunpack.c.h.b16 %v1150
    %v1735 = vunpack.c.l.b16 %v1151
    %v1736 = vunpack.c.h.b16 %v1151
    %v1737 = vunpack.c.l.b16 %v1152
    %v1738 = vunpack.c.h.b16 %v1152
    %v1739 = vunpack.c.l.b16 %v1153
    %v1740 = vunpack.c.h.b16 %v1153
    %v1741 = vunpack.c.l.b16 %v1154
    %v1742 = vunpack.c.h.b16 %v1154
    %v1743 = vunpack.c.l.b16 %v1155
    %v1744 = vunpack.c.h.b16 %v1155
    %v1745 = vunpack.c.l.b16 %v1156
    %v1746 = vunpack.c.h.b16 %v1156
    %v1747 = vunpack.c.l.b16 %v1157
    %v1748 = vunpack.c.h.b16 %v1157
    %v1749 = vunpack.c.l.b16 %v1158
    %v1750 = vunpack.c.h.b16 %v1158
    %v1751 = vunpack.c.l.b16 %v1159
    %v1752 = vunpack.c.h.b16 %v1159
    %v1753 = vunpack.c.l.b16 %v1160
    %v1754 = vunpack.c.h.b16 %v1160
    %v1755 = vunpack.c.l.b16 %v1161
    %v1756 = vunpack.c.h.b16 %v1161
    %v1757 = vunpack.c.l.b16 %v1162
    %v1758 = vunpack.c.h.b16 %v1162
    %v1759 = vunpack.c.l.b16 %v1163
    %v1760 = vunpack.c.h.b16 %v1163
    %v1761 = vunpack.c.l.b16 %v1164
    %v1762 = vunpack.c.h.b16 %v1164
    %v1763 = vunpack.c.l.b16 %v1165
    %v1764 = vunpack.c.h.b16 %v1165
    %v1765 = vunpack.c.l.b16 %v1166
    %v1766 = vunpack.c.h.b16 %v1166
    %v1767 = vunpack.c.l.b16 %v1167
    %v1768 = vunpack.c.h.b16 %v1167
    %v1769 = vunpack.c.l.b16 %v1168
    %v1770 = vunpack.c.h.b16 %v1168
    %v1771 = vunpack.c.l.b16 %v1169
    %v1772 = vunpack.c.h.b16 %v1169
    %v1773 = vunpack.c.l.b16 %v1170
    %v1774 = vunpack.c.h.b16 %v1170
    %v1775 = vunpack.c.l.b16 %v1171
    %v1776 = vunpack.c.h.b16 %v1171
    %v1777 = vunpack.c.l.b16 %v1172
    %v1778 = vunpack.c.h.b16 %v1172
    %v1779 = vunpack.c.l.b16 %v1173
    %v1780 = vunpack.c.h.b16 %v1173
    %v1781 = vunpack.c.l.b16 %v1174
    %v1782 = vunpack.c.h.b16 %v1174
    %v1783 = vunpack.c.l.b16 %v1175
    %v1784 = vunpack.c.h.b16 %v1175
    %v1785 = vunpack.c.l.b16 %v1176
    %v1786 = vunpack.c.h.b16 %v1176
    %v1787 = vunpack.c.l.b16 %v1177
    %v1788 = vunpack.c.h.b16 %v1177
    %v1789 = vunpack.c.l.b16 %v1178
    %v1790 = vunpack.c.h.b16 %v1178
    %v1791 = vunpack.c.l.b16 %v1179
    %v1792 = vunpack.c.h.b16 %v1179
    %v1793 = vunpack.c.l.b16 %v1180
    %v1794 = vunpack.c.h.b16 %v1180
    %v1795 = vunpack.c.l.b16 %v1181
    %v1796 = vunpack.c.h.b16 %v1181
    %v1797 = vunpack.c.l.b16 %v1182
    %v1798 = vunpack.c.h.b16 %v1182
    %v1799 = vunpack.c.l.b16 %v1183
    %v1800 = vunpack.c.h.b16 %v1183
    %v1801 = vunpack.c.l.b16 %v1184
    %v1802 = vunpack.c.h.b16 %v1184
    %v1803 = vunpack.c.l.b16 %v1185
    %v1804 = vunpack.c.h.b16 %v1185
    %v1805 = vunpack.c.l.b16 %v1186
    %v1806 = vunpack.c.h.b16 %v1186
    %v1807 = vunpack.c.l.b16 %v1187
    %v1808 = vunpack.c.h.b16 %v1187
    %v1809 = vunpack.c.l.b16 %v1188
    %v1810 = vunpack.c.h.b16 %v1188
    %v1811 = vunpack.c.l.b16 %v1189
    %v1812 = vunpack.c.h.b16 %v1189
    %v1813 = vunpack.c.l.b16 %v1190
    %v1814 = vunpack.c.h.b16 %v1190
    %v1815 = vunpack.c.l.b16 %v1191
    %v1816 = vunpack.c.h.b16 %v1191
    %v1817 = vunpack.c.l.b16 %v1192
    %v1818 = vunpack.c.h.b16 %v1192
    %v1819 = vunpack.c.l.b16 %v1193
    %v1820 = vunpack.c.h.b16 %v1193
    %v1821 = vunpack.c.l.b16 %v1194
    %v1822 = vunpack.c.h.b16 %v1194
    %v1823 = vunpack.c.l.b16 %v1195
    %v1824 = vunpack.c.h.b16 %v1195
    %v1825 = vunpack.c.l.b16 %v1196
    %v1826 = vunpack.c.h.b16 %v1196
    %v1827 = vunpack.c.l.b16 %v1197
    %v1828 = vunpack.c.h.b16 %v1197
    %v1829 = vunpack.c.l.b16 %v1198
    %v1830 = vunpack.c.h.b16 %v1198
    %v1831 = vunpack.c.l.b16 %v1199
    %v1832 = vunpack.c.h.b16 %v1199
    %v1833 = vunpack.c.l.b16 %v1200
    %v1834 = vunpack.c.h.b16 %v1200
    %v1835 = vunpack.c.l.b16 %v1201
    %v1836 = vunpack.c.h.b16 %v1201
    %v1837 = vunpack.c.l.b16 %v1202
    %v1838 = vunpack.c.h.b16 %v1202
    %v1839 = vunpack.c.l.b16 %v1203
    %v1840 = vunpack.c.h.b16 %v1203
    %v1841 = vunpack.c.l.b16 %v1204
    %v1842 = vunpack.c.h.b16 %v1204
    %v1843 = vunpack.c.l.b16 %v1205
    %v1844 = vunpack.c.h.b16 %v1205
    %v1845 = vunpack.c.l.b16 %v1206
    %v1846 = vunpack.c.h.b16 %v1206
    %v1847 = vunpack.c.l.b16 %v1207
    %v1848 = vunpack.c.h.b16 %v1207
    %v1849 = vunpack.c.l.b16 %v1208
    %v1850 = vunpack.c.h.b16 %v1208
    %v1851 = vunpack.c.l.b16 %v1209
    %v1852 = vunpack.c.h.b16 %v1209
    %v1853 = vunpack.c.l.b16 %v1210
    %v1854 = vunpack.c.h.b16 %v1210
    %v1855 = vunpack.c.l.b16 %v1211
    %v1856 = vunpack.c.h.b16 %v1211
    %v1857 = vunpack.c.l.b16 %v1212
    %v1858 = vunpack.c.h.b16 %v1212
    %v1859 = vunpack.c.l.b16 %v1213
    %v1860 = vunpack.c.h.b16 %v1213
    %v1861 = vunpack.c.l.b16 %v1214
    %v1862 = vunpack.c.h.b16 %v1214
    %v1863 = vunpack.c.l.b16 %v1215
    %v1864 = vunpack.c.h.b16 %v1215
    %v1865 = vunpack.c.l.b16 %v1216
    %v1866 = vunpack.c.h.b16 %v1216
    %v1867 = vunpack.c.l.b16 %v1217
    %v1868 = vunpack.c.h.b16 %v1217
    %v1869 = vunpack.c.l.b16 %v1218
    %v1870 = vunpack.c.h.b16 %v1218
    %v1871 = vunpack.c.l.b16 %v1219
    %v1872 = vunpack.c.h.b16 %v1219
    %v1873 = vunpack.c.l.b16 %v1220
    %v1874 = vunpack.c.h.b16 %v1220
    %v1875 = vunpack.c.l.b16 %v1221
    %v1876 = vunpack.c.h.b16 %v1221
    %v1877 = vunpack.c.l.b16 %v1222
    %v1878 = vunpack.c.h.b16 %v1222
    %v1879 = vunpack.c.l.b16 %v1223
    %v1880 = vunpack.c.h.b16 %v1223
    %v1881 = vunpack.c.l.b16 %v1224
    %v1882 = vunpack.c.h.b16 %v1224
    %v1883 = vunpack.c.l.b16 %v1225
    %v1884 = vunpack.c.h.b16 %v1225
    %v1885 = vunpack.c.l.b16 %v1226
    %v1886 = vunpack.c.h.b16 %v1226
    %v1887 = vunpack.c.l.b16 %v1227
    %v1888 = vunpack.c.h.b16 %v1227
    %v1889 = vunpack.c.l.b16 %v1228
    %v1890 = vunpack.c.h.b16 %v1228
    %v1891 = vunpack.c.l.b16 %v1229
    %v1892 = vunpack.c.h.b16 %v1229
    %v1893 = vunpack.c.l.b16 %v1230
    %v1894 = vunpack.c.h.b16 %v1230
    %v1895 = vunpack.c.l.b16 %v1231
    %v1896 = vunpack.c.h.b16 %v1231
    %v1897 = vunpack.c.l.b16 %v1232
    %v1898 = vunpack.c.h.b16 %v1232
    %v1899 = vunpack.c.l.b16 %v1233
    %v1900 = vunpack.c.h.b16 %v1233
    %v1901 = vunpack.c.l.b16 %v1234
    %v1902 = vunpack.c.h.b16 %v1234
    %v1903 = vunpack.c.l.b16 %v1235
    %v1904 = vunpack.c.h.b16 %v1235
    %v1905 = vunpack.c.l.b16 %v1236
    %v1906 = vunpack.c.h.b16 %v1236
    %v1907 = vunpack.c.l.b16 %v1237
    %v1908 = vunpack.c.h.b16 %v1237
    %v1909 = vunpack.c.l.b16 %v1238
    %v1910 = vunpack.c.h.b16 %v1238
    %v1911 = vunpack.c.l.b16 %v1239
    %v1912 = vunpack.c.h.b16 %v1239
    %v1913 = vunpack.c.l.b16 %v1240
    %v1914 = vunpack.c.h.b16 %v1240
    %v1915 = vunpack.c.l.b16 %v1241
    %v1916 = vunpack.c.h.b16 %v1241
    %v1917 = vunpack.c.l.b16 %v1242
    %v1918 = vunpack.c.h.b16 %v1242
    %v1919 = vunpack.c.l.b16 %v1243
    %v1920 = vunpack.c.h.b16 %v1243
    %v1921 = vunpack.c.l.b16 %v1244
    %v1922 = vunpack.c.h.b16 %v1244
    %v1923 = vunpack.c.l.b16 %v1245
    %v1924 = vunpack.c.h.b16 %v1245
    %v1925 = vunpack.c.l.b16 %v1246
    %v1926 = vunpack.c.h.b16 %v1246
    %v1927 = vunpack.c.l.b16 %v1247
    %v1928 = vunpack.c.h.b16 %v1247
    %v1929 = vunpack.c.l.b16 %v1248
    %v1930 = vunpack.c.h.b16 %v1248
    %v1931 = vunpack.c.l.b16 %v1249
    %v1932 = vunpack.c.h.b16 %v1249
    %v1933 = vunpack.c.l.b16 %v1250
    %v1934 = vunpack.c.h.b16 %v1250
    %v1935 = vunpack.c.l.b16 %v1251
    %v1936 = vunpack.c.h.b16 %v1251
    %v1937 = vunpack.c.l.b16 %v1252
    %v1938 = vunpack.c.h.b16 %v1252
    %v1939 = vunpack.c.l.b16 %v1253
    %v1940 = vunpack.c.h.b16 %v1253
    %v1941 = vunpack.c.l.b16 %v1254
    %v1942 = vunpack.c.h.b16 %v1254
    %v1943 = vunpack.c.l.b16 %v1255
    %v1944 = vunpack.c.h.b16 %v1255
    %v1945 = vunpack.c.l.b16 %v1256
    %v1946 = vunpack.c.h.b16 %v1256
    %v1947 = vunpack.c.l.b16 %v1257
    %v1948 = vunpack.c.h.b16 %v1257
    %v1949 = vunpack.c.l.b16 %v1258
    %v1950 = vunpack.c.h.b16 %v1258
    %v1951 = vunpack.c.l.b16 %v1259
    %v1952 = vunpack.c.h.b16 %v1259
    %v1953 = vunpack.c.l.b16 %v1260
    %v1954 = vunpack.c.h.b16 %v1260
    %v1955 = vunpack.c.l.b16 %v1261
    %v1956 = vunpack.c.h.b16 %v1261
    %v1957 = vunpack.c.l.b16 %v1262
    %v1958 = vunpack.c.h.b16 %v1262
    %v1959 = vunpack.c.l.b16 %v1263
    %v1960 = vunpack.c.h.b16 %v1263
    %v1961 = vunpack.c.l.b16 %v1264
    %v1962 = vunpack.c.h.b16 %v1264
    %v1963 = vunpack.c.l.b16 %v1265
    %v1964 = vunpack.c.h.b16 %v1265
    %v1965 = vunpack.c.l.b16 %v1266
    %v1966 = vunpack.c.h.b16 %v1266
    %v1967 = vunpack.c.l.b16 %v1267
    %v1968 = vunpack.c.h.b16 %v1267
    %v1969 = vunpack.c.l.b16 %v1268
    %v1970 = vunpack.c.h.b16 %v1268
    %v1971 = vunpack.c.l.b16 %v1269
    %v1972 = vunpack.c.h.b16 %v1269
    %v1973 = vunpack.c.l.b16 %v1270
    %v1974 = vunpack.c.h.b16 %v1270
    %v1975 = vunpack.c.l.b16 %v1271
    %v1976 = vunpack.c.h.b16 %v1271
    %v1977 = vunpack.c.l.b16 %v1272
    %v1978 = vunpack.c.h.b16 %v1272
    %v1979 = vunpack.c.l.b16 %v1273
    %v1980 = vunpack.c.h.b16 %v1273
    %v1981 = vunpack.c.l.b16 %v1274
    %v1982 = vunpack.c.h.b16 %v1274
    %v1983 = vunpack.c.l.b16 %v1275
    %v1984 = vunpack.c.h.b16 %v1275
    %v1985 = vunpack.c.l.b16 %v1276
    %v1986 = vunpack.c.h.b16 %v1276
    %v1987 = vunpack.c.l.b16 %v1277
    %v1988 = vunpack.c.h.b16 %v1277
    %v1989 = vunpack.c.l.b16 %v1278
    %v1990 = vunpack.c.h.b16 %v1278
    %v1991 = vunpack.c.l.b16 %v1279
    %v1992 = vunpack.c.h.b16 %v1279
    %v1993 = vunpack.c.l.b16 %v1280
    %v1994 = vunpack.c.h.b16 %v1280
    %v1995 = vunpack.c.l.b16 %v1281
    %v1996 = vunpack.c.h.b16 %v1281
    %v1997 = vunpack.c.l.b16 %v1282
    %v1998 = vunpack.c.h.b16 %v1282
    %v1999 = vunpack.c.l.b16 %v1283
    %v2000 = vunpack.c.h.b16 %v1283
    %v2001 = vunpack.c.l.b16 %v1284
    %v2002 = vunpack.c.h.b16 %v1284
    %v2003 = vunpack.c.l.b16 %v1285
    %v2004 = vunpack.c.h.b16 %v1285
    %v2005 = vunpack.c.l.b16 %v1286
    %v2006 = vunpack.c.h.b16 %v1286
    %v2007 = vunpack.c.l.b16 %v1287
    %v2008 = vunpack.c.h.b16 %v1287
    %v2009 = vunpack.c.l.b16 %v1288
    %v2010 = vunpack.c.h.b16 %v1288
    %v2011 = vunpack.c.l.b16 %v1289
    %v2012 = vunpack.c.h.b16 %v1289
    %v2013 = vunpack.c.l.b16 %v1290
    %v2014 = vunpack.c.h.b16 %v1290
    %v2015 = vunpack.c.l.b16 %v1291
    %v2016 = vunpack.c.h.b16 %v1291
    %v2017 = vunpack.c.l.b16 %v1292
    %v2018 = vunpack.c.h.b16 %v1292
    %v2019 = vunpack.c.l.b16 %v1293
    %v2020 = vunpack.c.h.b16 %v1293
    %v2021 = vunpack.c.l.b16 %v1294
    %v2022 = vunpack.c.h.b16 %v1294
    %v2023 = vunpack.c.l.b16 %v1295
    %v2024 = vunpack.c.h.b16 %v1295
    %v2025 = vunpack.c.l.b16 %v1296
    %v2026 = vunpack.c.h.b16 %v1296
    %v2027 = vunpack.c.l.b16 %v1297
    %v2028 = vunpack.c.h.b16 %v1297
    %v2029 = vunpack.c.l.b16 %v1298
    %v2030 = vunpack.c.h.b16 %v1298
    %v2031 = vunpack.c.l.b16 %v1299
    %v2032 = vunpack.c.h.b16 %v1299
    %v2033 = vunpack.c.l.b16 %v1300
    %v2034 = vunpack.c.h.b16 %v1300
    %v2035 = vunpack.c.l.b16 %v1301
    %v2036 = vunpack.c.h.b16 %v1301
    %v2037 = vunpack.c.l.b16 %v1302
    %v2038 = vunpack.c.h.b16 %v1302
    %v2039 = vunpack.c.l.b16 %v1303
    %v2040 = vunpack.c.h.b16 %v1303
    %v2041 = vunpack.c.l.b16 %v1304
    %v2042 = vunpack.c.h.b16 %v1304
    %v2043 = vunpack.c.l.b16 %v1305
    %v2044 = vunpack.c.h.b16 %v1305
    %v2045 = vunpack.c.l.b16 %v1306
    %v2046 = vunpack.c.h.b16 %v1306
    %v2047 = vunpack.c.l.b16 %v1307
    %v2048 = vunpack.c.h.b16 %v1307
    %v2049 = vunpack.c.l.b16 %v1308
    %v2050 = vunpack.c.h.b16 %v1308
    %v2051 = vunpack.c.l.b16 %v1309
    %v2052 = vunpack.c.h.b16 %v1309
    %v2053 = vunpack.c.l.b16 %v1310
    %v2054 = vunpack.c.h.b16 %v1310
    %v2055 = vunpack.c.l.b16 %v1311
    %v2056 = vunpack.c.h.b16 %v1311
    %v2057 = vunpack.c.l.b16 %v1312
    %v2058 = vunpack.c.h.b16 %v1312
    %v2059 = vunpack.c.l.b16 %v1313
    %v2060 = vunpack.c.h.b16 %v1313
    %v2061 = vunpack.c.l.b16 %v1314
    %v2062 = vunpack.c.h.b16 %v1314
    %v2063 = vunpack.c.l.b16 %v1315
    %v2064 = vunpack.c.h.b16 %v1315
    %v2065 = vunpack.c.l.b16 %v1316
    %v2066 = vunpack.c.h.b16 %v1316
    %v2067 = vunpack.c.l.b16 %v1317
    %v2068 = vunpack.c.h.b16 %v1317
    %v2069 = vunpack.c.l.b16 %v1318
    %v2070 = vunpack.c.h.b16 %v1318
    %v2071 = vunpack.c.l.b16 %v1319
    %v2072 = vunpack.c.h.b16 %v1319
    %v2073 = vunpack.c.l.b16 %v1320
    %v2074 = vunpack.c.h.b16 %v1320
    %v2075 = vunpack.c.l.b16 %v1321
    %v2076 = vunpack.c.h.b16 %v1321
    %v2077 = vunpack.c.l.b16 %v1322
    %v2078 = vunpack.c.h.b16 %v1322
    %v2079 = vunpack.c.l.b16 %v1323
    %v2080 = vunpack.c.h.b16 %v1323
    %v2081 = vunpack.c.l.b16 %v1324
    %v2082 = vunpack.c.h.b16 %v1324
    %v2083 = vunpack.c.l.b16 %v1325
    %v2084 = vunpack.c.h.b16 %v1325
    %v2085 = vunpack.c.l.b16 %v1326
    %v2086 = vunpack.c.h.b16 %v1326
    %v2087 = vunpack.c.l.b16 %v1327
    %v2088 = vunpack.c.h.b16 %v1327
    %v2089 = vunpack.c.l.b16 %v1328
    %v2090 = vunpack.c.h.b16 %v1328
    %v2091 = vunpack.c.l.b16 %v1329
    %v2092 = vunpack.c.h.b16 %v1329
    %v2093 = vunpack.c.l.b16 %v1330
    %v2094 = vunpack.c.h.b16 %v1330
    %v2095 = vunpack.c.l.b16 %v1331
    %v2096 = vunpack.c.h.b16 %v1331
    %v2097 = vunpack.c.l.b16 %v1332
    %v2098 = vunpack.c.h.b16 %v1332
    %v2099 = vunpack.c.l.b16 %v1333
    %v2100 = vunpack.c.h.b16 %v1333
    %v2101 = vunpack.c.l.b16 %v1334
    %v2102 = vunpack.c.h.b16 %v1334
    %v2103 = vunpack.c.l.b16 %v1335
    %v2104 = vunpack.c.h.b16 %v1335
    %v2105 = vunpack.c.l.b16 %v1336
    %v2106 = vunpack.c.h.b16 %v1336
    %v2107 = vunpack.c.l.b16 %v1337
    %v2108 = vunpack.c.h.b16 %v1337
    %v2109 = vunpack.c.l.b16 %v1338
    %v2110 = vunpack.c.h.b16 %v1338
    %v2111 = vunpack.c.l.b16 %v1339
    %v2112 = vunpack.c.h.b16 %v1339
    %v2113 = vunpack.c.l.b16 %v1340
    %v2114 = vunpack.c.h.b16 %v1340
    %v2115 = vunpack.c.l.b16 %v1341
    %v2116 = vunpack.c.h.b16 %v1341
    %v2117 = vunpack.c.l.b16 %v1342
    %v2118 = vunpack.c.h.b16 %v1342
    %v2119 = vunpack.c.l.b16 %v1343
    %v2120 = vunpack.c.h.b16 %v1343
    %v2121 = vunpack.c.l.b16 %v1344
    %v2122 = vunpack.c.h.b16 %v1344
    %v2123 = vunpack.c.l.b16 %v1345
    %v2124 = vunpack.c.h.b16 %v1345
    %v2125 = vunpack.c.l.b16 %v1346
    %v2126 = vunpack.c.h.b16 %v1346
    %v2127 = vunpack.c.l.b16 %v1347
    %v2128 = vunpack.c.h.b16 %v1347
    %v2129 = vunpack.c.l.b16 %v1348
    %v2130 = vunpack.c.h.b16 %v1348
    %v2131 = vunpack.c.l.b16 %v1349
    %v2132 = vunpack.c.h.b16 %v1349
    %v2133 = vunpack.c.l.b16 %v1350
    %v2134 = vunpack.c.h.b16 %v1350
    %v2135 = vunpack.c.l.b16 %v1351
    %v2136 = vunpack.c.h.b16 %v1351
    %v2137 = vunpack.c.l.b16 %v1352
    %v2138 = vunpack.c.h.b16 %v1352
    %v2139 = vunpack.c.l.b16 %v1353
    %v2140 = vunpack.c.h.b16 %v1353
    %v2141 = vunpack.c.l.b16 %v1354
    %v2142 = vunpack.c.h.b16 %v1354
    %v2143 = vunpack.c.l.b16 %v1355
    %v2144 = vunpack.c.h.b16 %v1355
    %v2145 = vunpack.c.l.b16 %v1356
    %v2146 = vunpack.c.h.b16 %v1356
    %v2147 = vunpack.c.l.b16 %v1357
    %v2148 = vunpack.c.h.b16 %v1357
    %v2149 = vunpack.c.l.b16 %v1358
    %v2150 = vunpack.c.h.b16 %v1358
    %v2151 = vunpack.c.l.b16 %v1359
    %v2152 = vunpack.c.h.b16 %v1359
    %v2153 = vunpack.c.l.b16 %v1360
    %v2154 = vunpack.c.h.b16 %v1360
    %v2155 = vunpack.c.l.b16 %v1361
    %v2156 = vunpack.c.h.b16 %v1361
    %v2157 = vunpack.c.l.b16 %v1362
    %v2158 = vunpack.c.h.b16 %v1362
    %v2159 = vunpack.c.l.b16 %v1363
    %v2160 = vunpack.c.h.b16 %v1363
    %v2161 = vunpack.c.l.b16 %v1364
    %v2162 = vunpack.c.h.b16 %v1364
    %v2163 = vunpack.c.l.b16 %v1365
    %v2164 = vunpack.c.h.b16 %v1365
    %v2165 = vunpack.c.l.b16 %v1366
    %v2166 = vunpack.c.h.b16 %v1366
    %v2167 = vunpack.c.l.b16 %v1367
    %v2168 = vunpack.c.h.b16 %v1367
    %v2169 = vunpack.c.l.b16 %v1368
    %v2170 = vunpack.c.h.b16 %v1368
    %v2171 = vunpack.c.l.b16 %v1369
    %v2172 = vunpack.c.h.b16 %v1369
    %v2173 = vunpack.c.l.b16 %v1370
    %v2174 = vunpack.c.h.b16 %v1370
    %v2175 = vunpack.c.l.b16 %v1371
    %v2176 = vunpack.c.h.b16 %v1371
    %v2177 = vunpack.c.l.b16 %v1372
    %v2178 = vunpack.c.h.b16 %v1372
    %v2179 = vunpack.c.l.b16 %v1373
    %v2180 = vunpack.c.h.b16 %v1373
    %v2181 = vunpack.c.l.b16 %v1374
    %v2182 = vunpack.c.h.b16 %v1374
    %v2183 = vunpack.c.l.b16 %v1375
    %v2184 = vunpack.c.h.b16 %v1375
    %v2185 = vunpack.c.l.b16 %v1376
    %v2186 = vunpack.c.h.b16 %v1376
    %v2187 = vpack.c.b16 %v1683, %v1675
    %v2188 = vpack.c.b16 %v1684, %v1676
    %v2189 = vpack.c.b16 %v1685, %v1677
    %v2190 = vpack.c.b16 %v1686, %v1678
    %v2191 = vpack.c.b16 %v1687, %v1679
    %v2192 = vpack.c.b16 %v1688, %v1680
    %v2193 = vpack.c.b16 %v1689, %v1681
    %v2194 = vpack.c.b16 %v1690, %v1682
    %v2195 = vpack.c.b16 %v1699, %v1691
    %v2196 = vpack.c.b16 %v1700, %v1692
    %v2197 = vpack.c.b16 %v1701, %v1693
    %v2198 = vpack.c.b16 %v1702, %v1694
    %v2199 = vpack.c.b16 %v1703, %v1695
    %v2200 = vpack.c.b16 %v1704, %v1696
    %v2201 = vpack.c.b16 %v1705, %v1697
    %v2202 = vpack.c.b16 %v1706, %v1698
    %v2203 = vpack.c.b16 %v1715, %v1707
    %v2204 = vpack.c.b16 %v1716, %v1708
    %v2205 = vpack.c.b16 %v1717, %v1709
    %v2206 = vpack.c.b16 %v1718, %v1710
    %v2207 = vpack.c.b16 %v1719, %v1711
    %v2208 = vpack.c.b16 %v1720, %v1712
    %v2209 = vpack.c.b16 %v1721, %v1713
    %v2210 = vpack.c.b16 %v1722, %v1714
    %v2211 = vpack.c.b16 %v1731, %v1723
    %v2212 = vpack.c.b16 %v1732, %v1724
    %v2213 = vpack.c.b16 %v1733, %v1725
    %v2214 = vpack.c.b16 %v1734, %v1726
    %v2215 = vpack.c.b16 %v1735, %v1727
    %v2216 = vpack.c.b16 %v1736, %v1728
    %v2217 = vpack.c.b16 %v1737, %v1729
    %v2218 = vpack.c.b16 %v1738, %v1730
    %v2219 = vpack.c.b16 %v1747, %v1739
    %v2220 = vpack.c.b16 %v1748, %v1740
    %v2221 = vpack.c.b16 %v1749, %v1741
    %v2222 = vpack.c.b16 %v1750, %v1742
    %v2223 = vpack.c.b16 %v1751, %v1743
    %v2224 = vpack.c.b16 %v1752, %v1744
    %v2225 = vpack.c.b16 %v1753, %v1745
    %v2226 = vpack.c.b16 %v1754, %v1746
    %v2227 = vpack.c.b16 %v1763, %v1755
    %v2228 = vpack.c.b16 %v1764, %v1756
    %v2229 = vpack.c.b16 %v1765, %v1757
    %v2230 = vpack.c.b16 %v1766, %v1758
    %v2231 = vpack.c.b16 %v1767, %v1759
    %v2232 = vpack.c.b16 %v1768, %v1760
    %v2233 = vpack.c.b16 %v1769, %v1761
    %v2234 = vpack.c.b16 %v1770, %v1762
    %v2235 = vpack.c.b16 %v1779, %v1771
    %v2236 = vpack.c.b16 %v1780, %v1772
    %v2237 = vpack.c.b16 %v1781, %v1773
    %v2238 = vpack.c.b16 %v1782, %v1774
    %v2239 = vpack.c.b16 %v1783, %v1775
    %v2240 = vpack.c.b16 %v1784, %v1776
    %v2241 = vpack.c.b16 %v1785, %v1777
    %v2242 = vpack.c.b16 %v1786, %v1778
    %v2243 = vpack.c.b16 %v1795, %v1787
    %v2244 = vpack.c.b16 %v1796, %v1788
    %v2245 = vpack.c.b16 %v1797, %v1789
    %v2246 = vpack.c.b16 %v1798, %v1790
    %v2247 = vpack.c.b16 %v1799, %v1791
    %v2248 = vpack.c.b16 %v1800, %v1792
    %v2249 = vpack.c.b16 %v1801, %v1793
    %v2250 = vpack.c.b16 %v1802, %v1794
    %v2251 = vpack.c.b16 %v1811, %v1803
    %v2252 = vpack.c.b16 %v1812, %v1804
    %v2253 = vpack.c.b16 %v1813, %v1805
    %v2254 = vpack.c.b16 %v1814, %v1806
    %v2255 = vpack.c.b16 %v1815, %v1807
    %v2256 = vpack.c.b16 %v1816, %v1808
    %v2257 = vpack.c.b16 %v1817, %v1809
    %v2258 = vpack.c.b16 %v1818, %v1810
    %v2259 = vpack.c.b16 %v1827, %v1819
    %v2260 = vpack.c.b16 %v1828, %v1820
    %v2261 = vpack.c.b16 %v1829, %v1821
    %v2262 = vpack.c.b16 %v1830, %v1822
    %v2263 = vpack.c.b16 %v1831, %v1823
    %v2264 = vpack.c.b16 %v1832, %v1824
    %v2265 = vpack.c.b16 %v1833, %v1825
    %v2266 = vpack.c.b16 %v1834, %v1826
    %v2267 = vpack.c.b16 %v1843, %v1835
    %v2268 = vpack.c.b16 %v1844, %v1836
    %v2269 = vpack.c.b16 %v1845, %v1837
    %v2270 = vpack.c.b16 %v1846, %v1838
    %v2271 = vpack.c.b16 %v1847, %v1839
    %v2272 = vpack.c.b16 %v1848, %v1840
    %v2273 = vpack.c.b16 %v1849, %v1841
    %v2274 = vpack.c.b16 %v1850, %v1842
    %v2275 = vpack.c.b16 %v1859, %v1851
    %v2276 = vpack.c.b16 %v1860, %v1852
    %v2277 = vpack.c.b16 %v1861, %v1853
    %v2278 = vpack.c.b16 %v1862, %v1854
    %v2279 = vpack.c.b16 %v1863, %v1855
    %v2280 = vpack.c.b16 %v1864, %v1856
    %v2281 = vpack.c.b16 %v1865, %v1857
    %v2282 = vpack.c.b16 %v1866, %v1858
    %v2283 = vpack.c.b16 %v1875, %v1867
    %v2284 = vpack.c.b16 %v1876, %v1868
    %v2285 = vpack.c.b16 %v1877, %v1869
    %v2286 = vpack.c.b16 %v1878, %v1870
    %v2287 = vpack.c.b16 %v1879, %v1871
    %v2288 = vpack.c.b16 %v1880, %v1872
    %v2289 = vpack.c.b16 %v1881, %v1873
    %v2290 = vpack.c.b16 %v1882, %v1874
    %v2291 = vpack.c.b16 %v1891, %v1883
    %v2292 = vpack.c.b16 %v1892, %v1884
    %v2293 = vpack.c.b16 %v1893, %v1885
    %v2294 = vpack.c.b16 %v1894, %v1886
    %v2295 = vpack.c.b16 %v1895, %v1887
    %v2296 = vpack.c.b16 %v1896, %v1888
    %v2297 = vpack.c.b16 %v1897, %v1889
    %v2298 = vpack.c.b16 %v1898, %v1890
    %v2299 = vpack.c.b16 %v1907, %v1899
    %v2300 = vpack.c.b16 %v1908, %v1900
    %v2301 = vpack.c.b16 %v1909, %v1901
    %v2302 = vpack.c.b16 %v1910, %v1902
    %v2303 = vpack.c.b16 %v1911, %v1903
    %v2304 = vpack.c.b16 %v1912, %v1904
    %v2305 = vpack.c.b16 %v1913, %v1905
    %v2306 = vpack.c.b16 %v1914, %v1906
    %v2307 = vpack.c.b16 %v1923, %v1915
    %v2308 = vpack.c.b16 %v1924, %v1916
    %v2309 = vpack.c.b16 %v1925, %v1917
    %v2310 = vpack.c.b16 %v1926, %v1918
    %v2311 = vpack.c.b16 %v1927, %v1919
    %v2312 = vpack.c.b16 %v1928, %v1920
    %v2313 = vpack.c.b16 %v1929, %v1921
    %v2314 = vpack.c.b16 %v1930, %v1922
    %v2315 = vpack.c.b16 %v1939, %v1931
    %v2316 = vpack.c.b16 %v1940, %v1932
    %v2317 = vpack.c.b16 %v1941, %v1933
    %v2318 = vpack.c.b16 %v1942, %v1934
    %v2319 = vpack.c.b16 %v1943, %v1935
    %v2320 = vpack.c.b16 %v1944, %v1936
    %v2321 = vpack.c.b16 %v1945, %v1937
    %v2322 = vpack.c.b16 %v1946, %v1938
    %v2323 = vpack.c.b16 %v1955, %v1947
    %v2324 = vpack.c.b16 %v1956, %v1948
    %v2325 = vpack.c.b16 %v1957, %v1949
    %v2326 = vpack.c.b16 %v1958, %v1950
    %v2327 = vpack.c.b16 %v1959, %v1951
    %v2328 = vpack.c.b16 %v1960, %v1952
    %v2329 = vpack.c.b16 %v1961, %v1953
    %v2330 = vpack.c.b16 %v1962, %v1954
    %v2331 = vpack.c.b16 %v1971, %v1963
    %v2332 = vpack.c.b16 %v1972, %v1964
    %v2333 = vpack.c.b16 %v1973, %v1965
    %v2334 = vpack.c.b16 %v1974, %v1966
    %v2335 = vpack.c.b16 %v1975, %v1967
    %v2336 = vpack.c.b16 %v1976, %v1968
    %v2337 = vpack.c.b16 %v1977, %v1969
    %v2338 = vpack.c.b16 %v1978, %v1970
    %v2339 = vpack.c.b16 %v1987, %v1979
    %v2340 = vpack.c.b16 %v1988, %v1980
    %v2341 = vpack.c.b16 %v1989, %v1981
    %v2342 = vpack.c.b16 %v1990, %v1982
    %v2343 = vpack.c.b16 %v1991, %v1983
    %v2344 = vpack.c.b16 %v1992, %v1984
    %v2345 = vpack.c.b16 %v1993, %v1985
    %v2346 = vpack.c.b16 %v1994, %v1986
    %v2347 = vpack.c.b16 %v2003, %v1995
    %v2348 = vpack.c.b16 %v2004, %v1996
    %v2349 = vpack.c.b16 %v2005, %v1997
    %v2350 = vpack.c.b16 %v2006, %v1998
    %v2351 = vpack.c.b16 %v2007, %v1999
    %v2352 = vpack.c.b16 %v2008, %v2000
    %v2353 = vpack.c.b16 %v2009, %v2001
    %v2354 = vpack.c.b16 %v2010, %v2002
    %v2355 = vpack.c.b16 %v2019, %v2011
    %v2356 = vpack.c.b16 %v2020, %v2012
    %v2357 = vpack.c.b16 %v2021, %v2013
    %v2358 = vpack.c.b16 %v2022, %v2014
    %v2359 = vpack.c.b16 %v2023, %v2015
    %v2360 = vpack.c.b16 %v2024, %v2016
    %v2361 = vpack.c.b16 %v2025, %v2017
    %v2362 = vpack.c.b16 %v2026, %v2018
    %v2363 = vpack.c.b16 %v2035, %v2027
    %v2364 = vpack.c.b16 %v2036, %v2028
    %v2365 = vpack.c.b16 %v2037, %v2029
    %v2366 = vpack.c.b16 %v2038, %v2030
    %v2367 = vpack.c.b16 %v2039, %v2031
    %v2368 = vpack.c.b16 %v2040, %v2032
    %v2369 = vpack.c.b16 %v2041, %v2033
    %v2370 = vpack.c.b16 %v2042, %v2034
    %v2371 = vpack.c.b16 %v2051, %v2043
    %v2372 = vpack.c.b16 %v2052, %v2044
    %v2373 = vpack.c.b16 %v2053, %v2045
    %v2374 = vpack.c.b16 %v2054, %v2046
    %v2375 = vpack.c.b16 %v2055, %v2047
    %v2376 = vpack.c.b16 %v2056, %v2048
    %v2377 = vpack.c.b16 %v2057, %v2049
    %v2378 = vpack.c.b16 %v2058, %v2050
    %v2379 = vpack.c.b16 %v2067, %v2059
    %v2380 = vpack.c.b16 %v2068, %v2060
    %v2381 = vpack.c.b16 %v2069, %v2061
    %v2382 = vpack.c.b16 %v2070, %v2062
    %v2383 = vpack.c.b16 %v2071, %v2063
    %v2384 = vpack.c.b16 %v2072, %v2064
    %v2385 = vpack.c.b16 %v2073, %v2065
    %v2386 = vpack.c.b16 %v2074, %v2066
    %v2387 = vpack.c.b16 %v2083, %v2075
    %v2388 = vpack.c.b16 %v2084, %v2076
    %v2389 = vpack.c.b16 %v2085, %v2077
    %v2390 = vpack.c.b16 %v2086, %v2078
    %v2391 = vpack.c.b16 %v2087, %v2079
    %v2392 = vpack.c.b16 %v2088, %v2080
    %v2393 = vpack.c.b16 %v2089, %v2081
    %v2394 = vpack.c.b16 %v2090, %v2082
    %v2395 = vpack.c.b16 %v2099, %v2091
    %v2396 = vpack.c.b16 %v2100, %v2092
    %v2397 = vpack.c.b16 %v2101, %v2093
    %v2398 = vpack.c.b16 %v2102, %v2094
    %v2399 = vpack.c.b16 %v2103, %v2095
    %v2400 = vpack.c.b16 %v2104, %v2096
    %v2401 = vpack.c.b16 %v2105, %v2097
    %v2402 = vpack.c.b16 %v2106, %v2098
    %v2403 = vpack.c.b16 %v2115, %v2107
    %v2404 = vpack.c.b16 %v2116, %v2108
    %v2405 = vpack.c.b16 %v2117, %v2109
    %v2406 = vpack.c.b16 %v2118, %v2110
    %v2407 = vpack.c.b16 %v2119, %v2111
    %v2408 = vpack.c.b16 %v2120, %v2112
    %v2409 = vpack.c.b16 %v2121, %v2113
    %v2410 = vpack.c.b16 %v2122, %v2114
    %v2411 = vpack.c.b16 %v2131, %v2123
    %v2412 = vpack.c.b16 %v2132, %v2124
    %v2413 = vpack.c.b16 %v2133, %v2125
    %v2414 = vpack.c.b16 %v2134, %v2126
    %v2415 = vpack.c.b16 %v2135, %v2127
    %v2416 = vpack.c.b16 %v2136, %v2128
    %v2417 = vpack.c.b16 %v2137, %v2129
    %v2418 = vpack.c.b16 %v2138, %v2130
    %v2419 = vpack.c.b16 %v2147, %v2139
    %v2420 = vpack.c.b16 %v2148, %v2140
    %v2421 = vpack.c.b16 %v2149, %v2141
    %v2422 = vpack.c.b16 %v2150, %v2142
    %v2423 = vpack.c.b16 %v2151, %v2143
    %v2424 = vpack.c.b16 %v2152, %v2144
    %v2425 = vpack.c.b16 %v2153, %v2145
    %v2426 = vpack.c.b16 %v2154, %v2146
    %v2427 = vpack.c.b16 %v2163, %v2155
    %v2428 = vpack.c.b16 %v2164, %v2156
    %v2429 = vpack.c.b16 %v2165, %v2157
    %v2430 = vpack.c.b16 %v2166, %v2158
    %v2431 = vpack.c.b16 %v2167, %v2159
    %v2432 = vpack.c.b16 %v2168, %v2160
    %v2433 = vpack.c.b16 %v2169, %v2161
    %v2434 = vpack.c.b16 %v2170, %v2162
    %v2435 = vpack.c.b16 %v2179, %v2171
    %v2436 = vpack.c.b16 %v2180, %v2172
    %v2437 = vpack.c.b16 %v2181, %v2173
    %v2438 = vpack.c.b16 %v2182, %v2174
    %v2439 = vpack.c.b16 %v2183, %v2175
    %v2440 = vpack.c.b16 %v2184, %v2176
    %v2441 = vpack.c.b16 %v2185, %v2177
    %v2442 = vpack.c.b16 %v2186, %v2178
    %2699 = vmatprep.subr.bf16.mxu0 %v2244
    %2700 = vmatpush1.bf16.msra.mxu0 %v2243
    %2701 = vmatprep.subr.bf16.mxu0 %v2236
    %2702 = vmatpush1.bf16.msra.mxu0 %v2235
    %2703 = vmatprep.subr.bf16.mxu0 %v2228
    %2704 = vmatpush1.bf16.msra.mxu0 %v2227
    %2705 = vmatprep.subr.bf16.mxu0 %v2220
    %2706 = vmatpush1.bf16.msra.mxu0 %v2219
    %2707 = vmatprep.subr.bf16.mxu0 %v2212
    %2708 = vmatpush1.bf16.msra.mxu0 %v2211
    %2709 = vmatprep.subr.bf16.mxu0 %v2204
    %2710 = vmatpush1.bf16.msra.mxu0 %v2203
    %2711 = vmatprep.subr.bf16.mxu0 %v2196
    %2712 = vmatpush1.bf16.msra.mxu0 %v2195
    %2713 = vmatprep.subr.bf16.mxu0 %v2188
    %2714 = vmatpush1.bf16.msra.mxu0 %v2187
    %2715 = vmatprep.subr.bf16.mxu0 %v2308
    %2716 = vmatpush2.bf16.msra.mxu0 %v2307
    %2717 = vmatprep.subr.bf16.mxu0 %v2300
    %2718 = vmatpush2.bf16.msra.mxu0 %v2299
    %2719 = vmatprep.subr.bf16.mxu0 %v2292
    %2720 = vmatpush2.bf16.msra.mxu0 %v2291
    %2721 = vmatprep.subr.bf16.mxu0 %v2284
    %2722 = vmatpush2.bf16.msra.mxu0 %v2283
    %2723 = vmatprep.subr.bf16.mxu0 %v2276
    %2724 = vmatpush2.bf16.msra.mxu0 %v2275
    %2725 = vmatprep.subr.bf16.mxu0 %v2268
    %2726 = vmatpush2.bf16.msra.mxu0 %v2267
    %2727 = vmatprep.subr.bf16.mxu0 %v2260
    %2728 = vmatpush2.bf16.msra.mxu0 %v2259
    %2729 = vmatprep.subr.bf16.mxu0 %v2252
    %2730 = vmatpush2.bf16.msra.mxu0 %v2251
    %2731 = vmatprep.mubr.bf16.mxu0 %v1118
    %2732 = vmatmul.mubr.bf16.gmra.mxu0 %v1117
    %v2733 = vpop.f32.mrf.mxu0
    %v2734 = vadd.f32 %v1382, %v2733
    %v2735 = vpop.f32.mrf.mxu0
    %v2736 = vadd.f32 %v1386, %v2735
    %v2737 = vpop.f32.mrf.mxu0
    %v2738 = vpop.f32.mrf.mxu0
    %2739 = vdwg.mxu0
    %2740 = vmatprep.subr.bf16.mxu0 %v2372
    %2741 = vmatpush1.bf16.msra.mxu0 %v2371
    %2742 = vmatprep.subr.bf16.mxu0 %v2364
    %2743 = vmatpush1.bf16.msra.mxu0 %v2363
    %2744 = vmatprep.subr.bf16.mxu0 %v2356
    %2745 = vmatpush1.bf16.msra.mxu0 %v2355
    %2746 = vmatprep.subr.bf16.mxu0 %v2348
    %2747 = vmatpush1.bf16.msra.mxu0 %v2347
    %2748 = vmatprep.subr.bf16.mxu0 %v2340
    %2749 = vmatpush1.bf16.msra.mxu0 %v2339
    %2750 = vmatprep.subr.bf16.mxu0 %v2332
    %2751 = vmatpush1.bf16.msra.mxu0 %v2331
    %2752 = vmatprep.subr.bf16.mxu0 %v2324
    %2753 = vmatpush1.bf16.msra.mxu0 %v2323
    %2754 = vmatprep.subr.bf16.mxu0 %v2316
    %2755 = vmatpush1.bf16.msra.mxu0 %v2315
    %2756 = vmatprep.subr.bf16.mxu0 %v2436
    %2757 = vmatpush2.bf16.msra.mxu0 %v2435
    %2758 = vmatprep.subr.bf16.mxu0 %v2428
    %2759 = vmatpush2.bf16.msra.mxu0 %v2427
    %2760 = vmatprep.subr.bf16.mxu0 %v2420
    %2761 = vmatpush2.bf16.msra.mxu0 %v2419
    %2762 = vmatprep.subr.bf16.mxu0 %v2412
    %2763 = vmatpush2.bf16.msra.mxu0 %v2411
    %2764 = vmatprep.subr.bf16.mxu0 %v2404
    %2765 = vmatpush2.bf16.msra.mxu0 %v2403
    %2766 = vmatprep.subr.bf16.mxu0 %v2396
    %2767 = vmatpush2.bf16.msra.mxu0 %v2395
    %2768 = vmatprep.subr.bf16.mxu0 %v2388
    %2769 = vmatpush2.bf16.msra.mxu0 %v2387
    %2770 = vmatprep.subr.bf16.mxu0 %v2380
    %2771 = vmatpush2.bf16.msra.mxu0 %v2379
    %2772 = vmatprep.mubr.bf16.mxu0 %v1120
    %2773 = vmatmul.mubr.bf16.gmra.mxu0 %v1119
    %v2774 = vpop.f32.mrf.mxu0
    %v2775 = vadd.f32 %v2734, %v2774
    %v2776 = vpop.f32.mrf.mxu0
    %v2777 = vadd.f32 %v2736, %v2776
    %v2778 = vpop.f32.mrf.mxu0
    %v2779 = vpop.f32.mrf.mxu0
    %2780 = vdwg.mxu0
    %2781 = vmatprep.subr.bf16.mxu0 %v2246
    %2782 = vmatpush1.bf16.msra.mxu0 %v2245
    %2783 = vmatprep.subr.bf16.mxu0 %v2238
    %2784 = vmatpush1.bf16.msra.mxu0 %v2237
    %2785 = vmatprep.subr.bf16.mxu0 %v2230
    %2786 = vmatpush1.bf16.msra.mxu0 %v2229
    %2787 = vmatprep.subr.bf16.mxu0 %v2222
    %2788 = vmatpush1.bf16.msra.mxu0 %v2221
    %2789 = vmatprep.subr.bf16.mxu0 %v2214
    %2790 = vmatpush1.bf16.msra.mxu0 %v2213
    %2791 = vmatprep.subr.bf16.mxu0 %v2206
    %2792 = vmatpush1.bf16.msra.mxu0 %v2205
    %2793 = vmatprep.subr.bf16.mxu0 %v2198
    %2794 = vmatpush1.bf16.msra.mxu0 %v2197
    %2795 = vmatprep.subr.bf16.mxu0 %v2190
    %2796 = vmatpush1.bf16.msra.mxu0 %v2189
    %2797 = vmatprep.subr.bf16.mxu0 %v2310
    %2798 = vmatpush2.bf16.msra.mxu0 %v2309
    %2799 = vmatprep.subr.bf16.mxu0 %v2302
    %2800 = vmatpush2.bf16.msra.mxu0 %v2301
    %2801 = vmatprep.subr.bf16.mxu0 %v2294
    %2802 = vmatpush2.bf16.msra.mxu0 %v2293
    %2803 = vmatprep.subr.bf16.mxu0 %v2286
    %2804 = vmatpush2.bf16.msra.mxu0 %v2285
    %2805 = vmatprep.subr.bf16.mxu0 %v2278
    %2806 = vmatpush2.bf16.msra.mxu0 %v2277
    %2807 = vmatprep.subr.bf16.mxu0 %v2270
    %2808 = vmatpush2.bf16.msra.mxu0 %v2269
    %2809 = vmatprep.subr.bf16.mxu0 %v2262
    %2810 = vmatpush2.bf16.msra.mxu0 %v2261
    %2811 = vmatprep.subr.bf16.mxu0 %v2254
    %2812 = vmatpush2.bf16.msra.mxu0 %v2253
    %2813 = vmatprep.mubr.bf16.mxu0 %v1118
    %2814 = vmatmul.mubr.bf16.gmra.mxu0 %v1117
    %v2815 = vpop.f32.mrf.mxu0
    %v2816 = vadd.f32 %v1390, %v2815
    %v2817 = vpop.f32.mrf.mxu0
    %v2818 = vadd.f32 %v1394, %v2817
    %v2819 = vpop.f32.mrf.mxu0
    %v2820 = vpop.f32.mrf.mxu0
    %2821 = vdwg.mxu0
    %2822 = vmatprep.subr.bf16.mxu0 %v2374
    %2823 = vmatpush1.bf16.msra.mxu0 %v2373
    %2824 = vmatprep.subr.bf16.mxu0 %v2366
    %2825 = vmatpush1.bf16.msra.mxu0 %v2365
    %2826 = vmatprep.subr.bf16.mxu0 %v2358
    %2827 = vmatpush1.bf16.msra.mxu0 %v2357
    %2828 = vmatprep.subr.bf16.mxu0 %v2350
    %2829 = vmatpush1.bf16.msra.mxu0 %v2349
    %2830 = vmatprep.subr.bf16.mxu0 %v2342
    %2831 = vmatpush1.bf16.msra.mxu0 %v2341
    %2832 = vmatprep.subr.bf16.mxu0 %v2334
    %2833 = vmatpush1.bf16.msra.mxu0 %v2333
    %2834 = vmatprep.subr.bf16.mxu0 %v2326
    %2835 = vmatpush1.bf16.msra.mxu0 %v2325
    %2836 = vmatprep.subr.bf16.mxu0 %v2318
    %2837 = vmatpush1.bf16.msra.mxu0 %v2317
    %2838 = vmatprep.subr.bf16.mxu0 %v2438
    %2839 = vmatpush2.bf16.msra.mxu0 %v2437
    %2840 = vmatprep.subr.bf16.mxu0 %v2430
    %2841 = vmatpush2.bf16.msra.mxu0 %v2429
    %2842 = vmatprep.subr.bf16.mxu0 %v2422
    %2843 = vmatpush2.bf16.msra.mxu0 %v2421
    %2844 = vmatprep.subr.bf16.mxu0 %v2414
    %2845 = vmatpush2.bf16.msra.mxu0 %v2413
    %2846 = vmatprep.subr.bf16.mxu0 %v2406
    %2847 = vmatpush2.bf16.msra.mxu0 %v2405
    %2848 = vmatprep.subr.bf16.mxu0 %v2398
    %2849 = vmatpush2.bf16.msra.mxu0 %v2397
    %2850 = vmatprep.subr.bf16.mxu0 %v2390
    %2851 = vmatpush2.bf16.msra.mxu0 %v2389
    %2852 = vmatprep.subr.bf16.mxu0 %v2382
    %2853 = vmatpush2.bf16.msra.mxu0 %v2381
    %2854 = vmatprep.mubr.bf16.mxu0 %v1120
    %2855 = vmatmul.mubr.bf16.gmra.mxu0 %v1119
    %v2856 = vpop.f32.mrf.mxu0
    %v2857 = vadd.f32 %v2816, %v2856
    %v2858 = vpop.f32.mrf.mxu0
    %v2859 = vadd.f32 %v2818, %v2858
    %v2860 = vpop.f32.mrf.mxu0
    %v2861 = vpop.f32.mrf.mxu0
    %2862 = vdwg.mxu0
    %2863 = vmatprep.subr.bf16.mxu0 %v2248
    %2864 = vmatpush1.bf16.msra.mxu0 %v2247
    %2865 = vmatprep.subr.bf16.mxu0 %v2240
    %2866 = vmatpush1.bf16.msra.mxu0 %v2239
    %2867 = vmatprep.subr.bf16.mxu0 %v2232
    %2868 = vmatpush1.bf16.msra.mxu0 %v2231
    %2869 = vmatprep.subr.bf16.mxu0 %v2224
    %2870 = vmatpush1.bf16.msra.mxu0 %v2223
    %2871 = vmatprep.subr.bf16.mxu0 %v2216
    %2872 = vmatpush1.bf16.msra.mxu0 %v2215
    %2873 = vmatprep.subr.bf16.mxu0 %v2208
    %2874 = vmatpush1.bf16.msra.mxu0 %v2207
    %2875 = vmatprep.subr.bf16.mxu0 %v2200
    %2876 = vmatpush1.bf16.msra.mxu0 %v2199
    %2877 = vmatprep.subr.bf16.mxu0 %v2192
    %2878 = vmatpush1.bf16.msra.mxu0 %v2191
    %2879 = vmatprep.subr.bf16.mxu0 %v2312
    %2880 = vmatpush2.bf16.msra.mxu0 %v2311
    %2881 = vmatprep.subr.bf16.mxu0 %v2304
    %2882 = vmatpush2.bf16.msra.mxu0 %v2303
    %2883 = vmatprep.subr.bf16.mxu0 %v2296
    %2884 = vmatpush2.bf16.msra.mxu0 %v2295
    %2885 = vmatprep.subr.bf16.mxu0 %v2288
    %2886 = vmatpush2.bf16.msra.mxu0 %v2287
    %2887 = vmatprep.subr.bf16.mxu0 %v2280
    %2888 = vmatpush2.bf16.msra.mxu0 %v2279
    %2889 = vmatprep.subr.bf16.mxu0 %v2272
    %2890 = vmatpush2.bf16.msra.mxu0 %v2271
    %2891 = vmatprep.subr.bf16.mxu0 %v2264
    %2892 = vmatpush2.bf16.msra.mxu0 %v2263
    %2893 = vmatprep.subr.bf16.mxu0 %v2256
    %2894 = vmatpush2.bf16.msra.mxu0 %v2255
    %2895 = vmatprep.mubr.bf16.mxu0 %v1118
    %2896 = vmatmul.mubr.bf16.gmra.mxu0 %v1117
    %v2897 = vpop.f32.mrf.mxu0
    %v2898 = vadd.f32 %v1398, %v2897
    %v2899 = vpop.f32.mrf.mxu0
    %v2900 = vadd.f32 %v1402, %v2899
    %v2901 = vpop.f32.mrf.mxu0
    %v2902 = vpop.f32.mrf.mxu0
    %2903 = vdwg.mxu0
    %2904 = vmatprep.subr.bf16.mxu0 %v2376
    %2905 = vmatpush1.bf16.msra.mxu0 %v2375
    %2906 = vmatprep.subr.bf16.mxu0 %v2368
    %2907 = vmatpush1.bf16.msra.mxu0 %v2367
    %2908 = vmatprep.subr.bf16.mxu0 %v2360
    %2909 = vmatpush1.bf16.msra.mxu0 %v2359
    %2910 = vmatprep.subr.bf16.mxu0 %v2352
    %2911 = vmatpush1.bf16.msra.mxu0 %v2351
    %2912 = vmatprep.subr.bf16.mxu0 %v2344
    %2913 = vmatpush1.bf16.msra.mxu0 %v2343
    %2914 = vmatprep.subr.bf16.mxu0 %v2336
    %2915 = vmatpush1.bf16.msra.mxu0 %v2335
    %2916 = vmatprep.subr.bf16.mxu0 %v2328
    %2917 = vmatpush1.bf16.msra.mxu0 %v2327
    %2918 = vmatprep.subr.bf16.mxu0 %v2320
    %2919 = vmatpush1.bf16.msra.mxu0 %v2319
    %2920 = vmatprep.subr.bf16.mxu0 %v2440
    %2921 = vmatpush2.bf16.msra.mxu0 %v2439
    %2922 = vmatprep.subr.bf16.mxu0 %v2432
    %2923 = vmatpush2.bf16.msra.mxu0 %v2431
    %2924 = vmatprep.subr.bf16.mxu0 %v2424
    %2925 = vmatpush2.bf16.msra.mxu0 %v2423
    %2926 = vmatprep.subr.bf16.mxu0 %v2416
    %2927 = vmatpush2.bf16.msra.mxu0 %v2415
    %2928 = vmatprep.subr.bf16.mxu0 %v2408
    %2929 = vmatpush2.bf16.msra.mxu0 %v2407
    %2930 = vmatprep.subr.bf16.mxu0 %v2400
    %2931 = vmatpush2.bf16.msra.mxu0 %v2399
    %2932 = vmatprep.subr.bf16.mxu0 %v2392
    %2933 = vmatpush2.bf16.msra.mxu0 %v2391
    %2934 = vmatprep.subr.bf16.mxu0 %v2384
    %2935 = vmatpush2.bf16.msra.mxu0 %v2383
    %2936 = vmatprep.mubr.bf16.mxu0 %v1120
    %2937 = vmatmul.mubr.bf16.gmra.mxu0 %v1119
    %v2938 = vpop.f32.mrf.mxu0
    %v2939 = vadd.f32 %v2898, %v2938
    %v2940 = vpop.f32.mrf.mxu0
    %v2941 = vadd.f32 %v2900, %v2940
    %v2942 = vpop.f32.mrf.mxu0
    %v2943 = vpop.f32.mrf.mxu0
    %2944 = vdwg.mxu0
    %2945 = vmatprep.subr.bf16.mxu0 %v2250
    %2946 = vmatpush1.bf16.msra.mxu0 %v2249
    %2947 = vmatprep.subr.bf16.mxu0 %v2242
    %2948 = vmatpush1.bf16.msra.mxu0 %v2241
    %2949 = vmatprep.subr.bf16.mxu0 %v2234
    %2950 = vmatpush1.bf16.msra.mxu0 %v2233
    %2951 = vmatprep.subr.bf16.mxu0 %v2226
    %2952 = vmatpush1.bf16.msra.mxu0 %v2225
    %2953 = vmatprep.subr.bf16.mxu0 %v2218
    %2954 = vmatpush1.bf16.msra.mxu0 %v2217
    %2955 = vmatprep.subr.bf16.mxu0 %v2210
    %2956 = vmatpush1.bf16.msra.mxu0 %v2209
    %2957 = vmatprep.subr.bf16.mxu0 %v2202
    %2958 = vmatpush1.bf16.msra.mxu0 %v2201
    %2959 = vmatprep.subr.bf16.mxu0 %v2194
    %2960 = vmatpush1.bf16.msra.mxu0 %v2193
    %2961 = vmatprep.subr.bf16.mxu0 %v2314
    %2962 = vmatpush2.bf16.msra.mxu0 %v2313
    %2963 = vmatprep.subr.bf16.mxu0 %v2306
    %2964 = vmatpush2.bf16.msra.mxu0 %v2305
    %2965 = vmatprep.subr.bf16.mxu0 %v2298
    %2966 = vmatpush2.bf16.msra.mxu0 %v2297
    %2967 = vmatprep.subr.bf16.mxu0 %v2290
    %2968 = vmatpush2.bf16.msra.mxu0 %v2289
    %2969 = vmatprep.subr.bf16.mxu0 %v2282
    %2970 = vmatpush2.bf16.msra.mxu0 %v2281
    %2971 = vmatprep.subr.bf16.mxu0 %v2274
    %2972 = vmatpush2.bf16.msra.mxu0 %v2273
    %2973 = vmatprep.subr.bf16.mxu0 %v2266
    %2974 = vmatpush2.bf16.msra.mxu0 %v2265
    %2975 = vmatprep.subr.bf16.mxu0 %v2258
    %2976 = vmatpush2.bf16.msra.mxu0 %v2257
    %2977 = vmatprep.mubr.bf16.mxu0 %v1118
    %2978 = vmatmul.mubr.bf16.gmra.mxu0 %v1117
    %v2979 = vpop.f32.mrf.mxu0
    %v2980 = vadd.f32 %v1406, %v2979
    %v2981 = vpop.f32.mrf.mxu0
    %v2982 = vadd.f32 %v1410, %v2981
    %v2983 = vpop.f32.mrf.mxu0
    %v2984 = vpop.f32.mrf.mxu0
    %2985 = vdwg.mxu0
    %2986 = vmatprep.subr.bf16.mxu0 %v2378
    %2987 = vmatpush1.bf16.msra.mxu0 %v2377
    %2988 = vmatprep.subr.bf16.mxu0 %v2370
    %2989 = vmatpush1.bf16.msra.mxu0 %v2369
    %2990 = vmatprep.subr.bf16.mxu0 %v2362
    %2991 = vmatpush1.bf16.msra.mxu0 %v2361
    %2992 = vmatprep.subr.bf16.mxu0 %v2354
    %2993 = vmatpush1.bf16.msra.mxu0 %v2353
    %2994 = vmatprep.subr.bf16.mxu0 %v2346
    %2995 = vmatpush1.bf16.msra.mxu0 %v2345
    %2996 = vmatprep.subr.bf16.mxu0 %v2338
    %2997 = vmatpush1.bf16.msra.mxu0 %v2337
    %2998 = vmatprep.subr.bf16.mxu0 %v2330
    %2999 = vmatpush1.bf16.msra.mxu0 %v2329
    %3000 = vmatprep.subr.bf16.mxu0 %v2322
    %3001 = vmatpush1.bf16.msra.mxu0 %v2321
    %3002 = vmatprep.subr.bf16.mxu0 %v2442
    %3003 = vmatpush2.bf16.msra.mxu0 %v2441
    %3004 = vmatprep.subr.bf16.mxu0 %v2434
    %3005 = vmatpush2.bf16.msra.mxu0 %v2433
    %3006 = vmatprep.subr.bf16.mxu0 %v2426
    %3007 = vmatpush2.bf16.msra.mxu0 %v2425
    %3008 = vmatprep.subr.bf16.mxu0 %v2418
    %3009 = vmatpush2.bf16.msra.mxu0 %v2417
    %3010 = vmatprep.subr.bf16.mxu0 %v2410
    %3011 = vmatpush2.bf16.msra.mxu0 %v2409
    %3012 = vmatprep.subr.bf16.mxu0 %v2402
    %3013 = vmatpush2.bf16.msra.mxu0 %v2401
    %3014 = vmatprep.subr.bf16.mxu0 %v2394
    %3015 = vmatpush2.bf16.msra.mxu0 %v2393
    %3016 = vmatprep.subr.bf16.mxu0 %v2386
    %3017 = vmatpush2.bf16.msra.mxu0 %v2385
    %3018 = vmatprep.mubr.bf16.mxu0 %v1120
    %3019 = vmatmul.mubr.bf16.gmra.mxu0 %v1119
    %v3020 = vpop.f32.mrf.mxu0
    %v3021 = vadd.f32 %v2980, %v3020
    %v3022 = vpop.f32.mrf.mxu0
    %v3023 = vadd.f32 %v2982, %v3022
    %v3024 = vpop.f32.mrf.mxu0
    %v3025 = vpop.f32.mrf.mxu0
    %3026 = vdwg.mxu0
    %v3027 = vld [vmem:[#allocation23] sm:$0xff]
    %v3029 = vlaneseq
    %v3030 = vshrl.u32 %v3029, 7
    %v3031 = vsub.s32 0, %v3030
    %v3032 = vrot.slane %v3027, %v3031
    %v3033 = vlaneseq
    %v3034 = vshrl.u32 %v3033, 7
    %v3035 = vsub.s32 1, %v3034
    %v3036 = vrot.slane %v3027, %v3035
    %v3037 = vlaneseq
    %v3038 = vshrl.u32 %v3037, 7
    %v3039 = vsub.s32 2, %v3038
    %v3040 = vrot.slane %v3027, %v3039
    %v3041 = vlaneseq
    %v3042 = vshrl.u32 %v3041, 7
    %v3043 = vsub.s32 3, %v3042
    %v3044 = vrot.slane %v3027, %v3043
    %v3045 = vlaneseq
    %v3046 = vshrl.u32 %v3045, 7
    %v3047 = vsub.s32 4, %v3046
    %v3048 = vrot.slane %v3027, %v3047
    %v3049 = vlaneseq
    %v3050 = vshrl.u32 %v3049, 7
    %v3051 = vsub.s32 5, %v3050
    %v3052 = vrot.slane %v3027, %v3051
    %v3053 = vlaneseq
    %v3054 = vshrl.u32 %v3053, 7
    %v3055 = vsub.s32 6, %v3054
    %v3056 = vrot.slane %v3027, %v3055
    %v3057 = vlaneseq
    %v3058 = vshrl.u32 %v3057, 7
    %v3059 = vsub.s32 7, %v3058
    %v3060 = vrot.slane %v3027, %v3059
    %v3069 = vmul.f32 %v2775, %v3032
    %v3070 = vmul.f32 %v2777, %v3036
    %v3071 = vmul.f32 %v2857, %v3040
    %v3072 = vmul.f32 %v2859, %v3044
    %v3073 = vmul.f32 %v2939, %v3048
    %v3074 = vmul.f32 %v2941, %v3052
    %v3075 = vmul.f32 %v3021, %v3056
    %v3076 = vmul.f32 %v3023, %v3060
    %v3077 = vld [vmem:[#allocation25] sm:$0xff]
    %v3079 = vlaneseq
    %v3080 = vshrl.u32 %v3079, 7
    %v3081 = vsub.s32 0, %v3080
    %v3082 = vrot.slane %v3077, %v3081
    %v3083 = vlaneseq
    %v3084 = vshrl.u32 %v3083, 7
    %v3085 = vsub.s32 1, %v3084
    %v3086 = vrot.slane %v3077, %v3085
    %v3087 = vlaneseq
    %v3088 = vshrl.u32 %v3087, 7
    %v3089 = vsub.s32 2, %v3088
    %v3090 = vrot.slane %v3077, %v3089
    %v3091 = vlaneseq
    %v3092 = vshrl.u32 %v3091, 7
    %v3093 = vsub.s32 3, %v3092
    %v3094 = vrot.slane %v3077, %v3093
    %v3095 = vlaneseq
    %v3096 = vshrl.u32 %v3095, 7
    %v3097 = vsub.s32 4, %v3096
    %v3098 = vrot.slane %v3077, %v3097
    %v3099 = vlaneseq
    %v3100 = vshrl.u32 %v3099, 7
    %v3101 = vsub.s32 5, %v3100
    %v3102 = vrot.slane %v3077, %v3101
    %v3103 = vlaneseq
    %v3104 = vshrl.u32 %v3103, 7
    %v3105 = vsub.s32 6, %v3104
    %v3106 = vrot.slane %v3077, %v3105
    %v3107 = vlaneseq
    %v3108 = vshrl.u32 %v3107, 7
    %v3109 = vsub.s32 7, %v3108
    %v3110 = vrot.slane %v3077, %v3109
    %v3119 = vadd.f32 %v3069, %v3082
    %v3120 = vadd.f32 %v3070, %v3086
    %v3121 = vadd.f32 %v3071, %v3090
    %v3122 = vadd.f32 %v3072, %v3094
    %v3123 = vadd.f32 %v3073, %v3098
    %v3124 = vadd.f32 %v3074, %v3102
    %v3125 = vadd.f32 %v3075, %v3106
    %v3126 = vadd.f32 %v3076, %v3110
    %vm3127 = vcmp.gt.f32.partialorder %v3119, 0.0
    %vm3128 = vcmp.gt.f32.partialorder %v3120, 0.0
    %vm3129 = vcmp.gt.f32.partialorder %v3121, 0.0
    %vm3130 = vcmp.gt.f32.partialorder %v3122, 0.0
    %vm3131 = vcmp.gt.f32.partialorder %v3123, 0.0
    %vm3132 = vcmp.gt.f32.partialorder %v3124, 0.0
    %vm3133 = vcmp.gt.f32.partialorder %v3125, 0.0
    %vm3134 = vcmp.gt.f32.partialorder %v3126, 0.0
    %v3135 = vmul.f32 %v3119, 0.2
    %v3136 = vmul.f32 %v3120, 0.2
    %v3137 = vmul.f32 %v3121, 0.2
    %v3138 = vmul.f32 %v3122, 0.2
    %v3139 = vmul.f32 %v3123, 0.2
    %v3140 = vmul.f32 %v3124, 0.2
    %v3141 = vmul.f32 %v3125, 0.2
    %v3142 = vmul.f32 %v3126, 0.2
    %v3143 = vsel %vm3127, %v3119, %v3135
    %v3144 = vsel %vm3128, %v3120, %v3136
    %v3145 = vsel %vm3129, %v3121, %v3137
    %v3146 = vsel %vm3130, %v3122, %v3138
    %v3147 = vsel %vm3131, %v3123, %v3139
    %v3148 = vsel %vm3132, %v3124, %v3140
    %v3149 = vsel %vm3133, %v3125, %v3141
    %v3150 = vsel %vm3134, %v3126, %v3142
    %v3151 = vpack.c.bf16 %v3143, %v3143
    %v3152 = vpack.c.bf16 %v3144, %v3144
    %v3153 = vpack.c.bf16 %v3145, %v3145
    %v3154 = vpack.c.bf16 %v3146, %v3146
    %v3155 = vpack.c.bf16 %v3147, %v3147
    %v3156 = vpack.c.bf16 %v3148, %v3148
    %v3157 = vpack.c.bf16 %v3149, %v3149
    %v3158 = vpack.c.bf16 %v3150, %v3150
    %v3159 = vld [vmem:[#allocation26] sm:$0xff]
    %v3160 = vld [vmem:[#allocation26 + $0x8] sm:$0xff]
    %v3161 = vld [vmem:[#allocation26 + $0x10] sm:$0xff]
    %v3162 = vld [vmem:[#allocation26 + $0x18] sm:$0xf]
    %v3163 = vld [vmem:[#allocation26 + $0x1c] sm:$0xff]
    %v3164 = vld [vmem:[#allocation26 + $0x24] sm:$0xff]
    %v3165 = vld [vmem:[#allocation26 + $0x2c] sm:$0xff]
    %v3166 = vld [vmem:[#allocation26 + $0x34] sm:$0xf]
    %v3167 = vld [vmem:[#allocation26 + $0x38] sm:$0xff]
    %v3168 = vld [vmem:[#allocation26 + $0x40] sm:$0xff]
    %v3169 = vld [vmem:[#allocation26 + $0x48] sm:$0xff]
    %v3170 = vld [vmem:[#allocation26 + $0x50] sm:$0xf]
    %v3171 = vld [vmem:[#allocation26 + $0x54] sm:$0xff]
    %v3172 = vld [vmem:[#allocation26 + $0x5c] sm:$0xff]
    %v3173 = vld [vmem:[#allocation26 + $0x64] sm:$0xff]
    %v3174 = vld [vmem:[#allocation26 + $0x6c] sm:$0xf]
    %v3175 = vld [vmem:[#allocation26 + $0x70] sm:$0xff]
    %v3176 = vld [vmem:[#allocation26 + $0x78] sm:$0xff]
    %v3177 = vld [vmem:[#allocation26 + $0x80] sm:$0xff]
    %v3178 = vld [vmem:[#allocation26 + $0x88] sm:$0xf]
    %v3179 = vld [vmem:[#allocation26 + $0x8c] sm:$0xff]
    %v3180 = vld [vmem:[#allocation26 + $0x94] sm:$0xff]
    %v3181 = vld [vmem:[#allocation26 + $0x9c] sm:$0xff]
    %v3182 = vld [vmem:[#allocation26 + $0xa4] sm:$0xf]
    %v3183 = vld [vmem:[#allocation26 + $0xa8] sm:$0xff]
    %v3184 = vld [vmem:[#allocation26 + $0xb0] sm:$0xff]
    %v3185 = vld [vmem:[#allocation26 + $0xb8] sm:$0xff]
    %v3186 = vld [vmem:[#allocation26 + $0xc0] sm:$0xf]
    %v3187 = vld [vmem:[#allocation26 + $0xc4] sm:$0xff]
    %v3188 = vld [vmem:[#allocation26 + $0xcc] sm:$0xff]
    %v3189 = vld [vmem:[#allocation26 + $0xd4] sm:$0xff]
    %v3190 = vld [vmem:[#allocation26 + $0xdc] sm:$0xf]
    %v3191 = vld [vmem:[#allocation26 + $0xe0] sm:$0xff]
    %v3192 = vld [vmem:[#allocation26 + $0xe8] sm:$0xff]
    %v3193 = vld [vmem:[#allocation26 + $0xf0] sm:$0xff]
    %v3194 = vld [vmem:[#allocation26 + $0xf8] sm:$0xf]
    %v3195 = vld [vmem:[#allocation26 + $0xfc] sm:$0xff]
    %v3196 = vld [vmem:[#allocation26 + $0x104] sm:$0xff]
    %v3197 = vld [vmem:[#allocation26 + $0x10c] sm:$0xff]
    %v3198 = vld [vmem:[#allocation26 + $0x114] sm:$0xf]
    %v3199 = vld [vmem:[#allocation26 + $0x118] sm:$0xff]
    %v3200 = vld [vmem:[#allocation26 + $0x120] sm:$0xff]
    %v3201 = vld [vmem:[#allocation26 + $0x128] sm:$0xff]
    %v3202 = vld [vmem:[#allocation26 + $0x130] sm:$0xf]
    %v3203 = vld [vmem:[#allocation26 + $0x134] sm:$0xff]
    %v3204 = vld [vmem:[#allocation26 + $0x13c] sm:$0xff]
    %v3205 = vld [vmem:[#allocation26 + $0x144] sm:$0xff]
    %v3206 = vld [vmem:[#allocation26 + $0x14c] sm:$0xf]
    %v3207 = vld [vmem:[#allocation26 + $0x150] sm:$0xff]
    %v3208 = vld [vmem:[#allocation26 + $0x158] sm:$0xff]
    %v3209 = vld [vmem:[#allocation26 + $0x160] sm:$0xff]
    %v3210 = vld [vmem:[#allocation26 + $0x168] sm:$0xf]
    %v3211 = vld [vmem:[#allocation26 + $0x16c] sm:$0xff]
    %v3212 = vld [vmem:[#allocation26 + $0x174] sm:$0xff]
    %v3213 = vld [vmem:[#allocation26 + $0x17c] sm:$0xff]
    %v3214 = vld [vmem:[#allocation26 + $0x184] sm:$0xf]
    %v3215 = vld [vmem:[#allocation26 + $0x188] sm:$0xff]
    %v3216 = vld [vmem:[#allocation26 + $0x190] sm:$0xff]
    %v3217 = vld [vmem:[#allocation26 + $0x198] sm:$0xff]
    %v3218 = vld [vmem:[#allocation26 + $0x1a0] sm:$0xf]
    %v3219 = vld [vmem:[#allocation26 + $0x1a4] sm:$0xff]
    %v3220 = vld [vmem:[#allocation26 + $0x1ac] sm:$0xff]
    %v3221 = vld [vmem:[#allocation26 + $0x1b4] sm:$0xff]
    %v3222 = vld [vmem:[#allocation26 + $0x1bc] sm:$0xf]
    %v3223 = vld [vmem:[#allocation26 + $0x1c0] sm:$0xff]
    %v3224 = vld [vmem:[#allocation26 + $0x1c8] sm:$0xff]
    %v3225 = vld [vmem:[#allocation26 + $0x1d0] sm:$0xff]
    %v3226 = vld [vmem:[#allocation26 + $0x1d8] sm:$0xf]
    %v3227 = vld [vmem:[#allocation26 + $0x1dc] sm:$0xff]
    %v3228 = vld [vmem:[#allocation26 + $0x1e4] sm:$0xff]
    %v3229 = vld [vmem:[#allocation26 + $0x1ec] sm:$0xff]
    %v3230 = vld [vmem:[#allocation26 + $0x1f4] sm:$0xf]
    %v3231 = vld [vmem:[#allocation26 + $0x1f8] sm:$0xff]
    %v3232 = vld [vmem:[#allocation26 + $0x200] sm:$0xff]
    %v3233 = vld [vmem:[#allocation26 + $0x208] sm:$0xff]
    %v3234 = vld [vmem:[#allocation26 + $0x210] sm:$0xf]
    %v3235 = vld [vmem:[#allocation26 + $0x214] sm:$0xff]
    %v3236 = vld [vmem:[#allocation26 + $0x21c] sm:$0xff]
    %v3237 = vld [vmem:[#allocation26 + $0x224] sm:$0xff]
    %v3238 = vld [vmem:[#allocation26 + $0x22c] sm:$0xf]
    %v3239 = vld [vmem:[#allocation26 + $0x230] sm:$0xff]
    %v3240 = vld [vmem:[#allocation26 + $0x238] sm:$0xff]
    %v3241 = vld [vmem:[#allocation26 + $0x240] sm:$0xff]
    %v3242 = vld [vmem:[#allocation26 + $0x248] sm:$0xf]
    %v3243 = vld [vmem:[#allocation26 + $0x24c] sm:$0xff]
    %v3244 = vld [vmem:[#allocation26 + $0x254] sm:$0xff]
    %v3245 = vld [vmem:[#allocation26 + $0x25c] sm:$0xff]
    %v3246 = vld [vmem:[#allocation26 + $0x264] sm:$0xf]
    %v3247 = vld [vmem:[#allocation26 + $0x268] sm:$0xff]
    %v3248 = vld [vmem:[#allocation26 + $0x270] sm:$0xff]
    %v3249 = vld [vmem:[#allocation26 + $0x278] sm:$0xff]
    %v3250 = vld [vmem:[#allocation26 + $0x280] sm:$0xf]
    %v3251 = vld [vmem:[#allocation26 + $0x284] sm:$0xff]
    %v3252 = vld [vmem:[#allocation26 + $0x28c] sm:$0xff]
    %v3253 = vld [vmem:[#allocation26 + $0x294] sm:$0xff]
    %v3254 = vld [vmem:[#allocation26 + $0x29c] sm:$0xf]
    %v3255 = vld [vmem:[#allocation26 + $0x2a0] sm:$0xff]
    %v3256 = vld [vmem:[#allocation26 + $0x2a8] sm:$0xff]
    %v3257 = vld [vmem:[#allocation26 + $0x2b0] sm:$0xff]
    %v3258 = vld [vmem:[#allocation26 + $0x2b8] sm:$0xf]
    %v3259 = vld [vmem:[#allocation26 + $0x2bc] sm:$0xff]
    %v3260 = vld [vmem:[#allocation26 + $0x2c4] sm:$0xff]
    %v3261 = vld [vmem:[#allocation26 + $0x2cc] sm:$0xff]
    %v3262 = vld [vmem:[#allocation26 + $0x2d4] sm:$0xf]
    %v3263 = vld [vmem:[#allocation26 + $0x2d8] sm:$0xff]
    %v3264 = vld [vmem:[#allocation26 + $0x2e0] sm:$0xff]
    %v3265 = vld [vmem:[#allocation26 + $0x2e8] sm:$0xff]
    %v3266 = vld [vmem:[#allocation26 + $0x2f0] sm:$0xf]
    %v3267 = vld [vmem:[#allocation26 + $0x2f4] sm:$0xff]
    %v3268 = vld [vmem:[#allocation26 + $0x2fc] sm:$0xff]
    %v3269 = vld [vmem:[#allocation26 + $0x304] sm:$0xff]
    %v3270 = vld [vmem:[#allocation26 + $0x30c] sm:$0xf]
    %v3271 = vld [vmem:[#allocation26 + $0x310] sm:$0xff]
    %v3272 = vld [vmem:[#allocation26 + $0x318] sm:$0xff]
    %v3273 = vld [vmem:[#allocation26 + $0x320] sm:$0xff]
    %v3274 = vld [vmem:[#allocation26 + $0x328] sm:$0xf]
    %v3275 = vld [vmem:[#allocation26 + $0x32c] sm:$0xff]
    %v3276 = vld [vmem:[#allocation26 + $0x334] sm:$0xff]
    %v3277 = vld [vmem:[#allocation26 + $0x33c] sm:$0xff]
    %v3278 = vld [vmem:[#allocation26 + $0x344] sm:$0xf]
    %v3279 = vld [vmem:[#allocation26 + $0x348] sm:$0xff]
    %v3280 = vld [vmem:[#allocation26 + $0x350] sm:$0xff]
    %v3281 = vld [vmem:[#allocation26 + $0x358] sm:$0xff]
    %v3282 = vld [vmem:[#allocation26 + $0x360] sm:$0xf]
    %v3283 = vld [vmem:[#allocation26 + $0x364] sm:$0xff]
    %v3284 = vld [vmem:[#allocation26 + $0x36c] sm:$0xff]
    %v3285 = vld [vmem:[#allocation26 + $0x374] sm:$0xff]
    %v3286 = vld [vmem:[#allocation26 + $0x37c] sm:$0xf]
    %v3287 = vld [vmem:[#allocation26 + $0x380] sm:$0xff]
    %v3288 = vld [vmem:[#allocation26 + $0x388] sm:$0xff]
    %v3289 = vld [vmem:[#allocation26 + $0x390] sm:$0xff]
    %v3290 = vld [vmem:[#allocation26 + $0x398] sm:$0xf]
    %v3291 = vld [vmem:[#allocation26 + $0x39c] sm:$0xff]
    %v3292 = vld [vmem:[#allocation26 + $0x3a4] sm:$0xff]
    %v3293 = vld [vmem:[#allocation26 + $0x3ac] sm:$0xff]
    %v3294 = vld [vmem:[#allocation26 + $0x3b4] sm:$0xf]
    %v3295 = vld [vmem:[#allocation26 + $0x3b8] sm:$0xff]
    %v3296 = vld [vmem:[#allocation26 + $0x3c0] sm:$0xff]
    %v3297 = vld [vmem:[#allocation26 + $0x3c8] sm:$0xff]
    %v3298 = vld [vmem:[#allocation26 + $0x3d0] sm:$0xf]
    %v3299 = vld [vmem:[#allocation26 + $0x3d4] sm:$0xff]
    %v3300 = vld [vmem:[#allocation26 + $0x3dc] sm:$0xff]
    %v3301 = vld [vmem:[#allocation26 + $0x3e4] sm:$0xff]
    %v3302 = vld [vmem:[#allocation26 + $0x3ec] sm:$0xf]
    %v3303 = vld [vmem:[#allocation26 + $0x3f0] sm:$0xff]
    %v3304 = vld [vmem:[#allocation26 + $0x3f8] sm:$0xff]
    %v3305 = vld [vmem:[#allocation26 + $0x400] sm:$0xff]
    %v3306 = vld [vmem:[#allocation26 + $0x408] sm:$0xf]
    %v3307 = vld [vmem:[#allocation26 + $0x40c] sm:$0xff]
    %v3308 = vld [vmem:[#allocation26 + $0x414] sm:$0xff]
    %v3309 = vld [vmem:[#allocation26 + $0x41c] sm:$0xff]
    %v3310 = vld [vmem:[#allocation26 + $0x424] sm:$0xf]
    %v3311 = vld [vmem:[#allocation26 + $0x428] sm:$0xff]
    %v3312 = vld [vmem:[#allocation26 + $0x430] sm:$0xff]
    %v3313 = vld [vmem:[#allocation26 + $0x438] sm:$0xff]
    %v3314 = vld [vmem:[#allocation26 + $0x440] sm:$0xf]
    %v3315 = vld [vmem:[#allocation26 + $0x444] sm:$0xff]
    %v3316 = vld [vmem:[#allocation26 + $0x44c] sm:$0xff]
    %v3317 = vld [vmem:[#allocation26 + $0x454] sm:$0xff]
    %v3318 = vld [vmem:[#allocation26 + $0x45c] sm:$0xf]
    %v3319 = vld [vmem:[#allocation26 + $0x460] sm:$0xff]
    %v3320 = vld [vmem:[#allocation26 + $0x468] sm:$0xff]
    %v3321 = vld [vmem:[#allocation26 + $0x470] sm:$0xff]
    %v3322 = vld [vmem:[#allocation26 + $0x478] sm:$0xf]
    %v3323 = vld [vmem:[#allocation26 + $0x47c] sm:$0xff]
    %v3324 = vld [vmem:[#allocation26 + $0x484] sm:$0xff]
    %v3325 = vld [vmem:[#allocation26 + $0x48c] sm:$0xff]
    %v3326 = vld [vmem:[#allocation26 + $0x494] sm:$0xf]
    %v3327 = vld [vmem:[#allocation26 + $0x498] sm:$0xff]
    %v3328 = vld [vmem:[#allocation26 + $0x4a0] sm:$0xff]
    %v3329 = vld [vmem:[#allocation26 + $0x4a8] sm:$0xff]
    %v3330 = vld [vmem:[#allocation26 + $0x4b0] sm:$0xf]
    %v3331 = vld [vmem:[#allocation26 + $0x4b4] sm:$0xff]
    %v3332 = vld [vmem:[#allocation26 + $0x4bc] sm:$0xff]
    %v3333 = vld [vmem:[#allocation26 + $0x4c4] sm:$0xff]
    %v3334 = vld [vmem:[#allocation26 + $0x4cc] sm:$0xf]
    %v3335 = vld [vmem:[#allocation26 + $0x4d0] sm:$0xff]
    %v3336 = vld [vmem:[#allocation26 + $0x4d8] sm:$0xff]
    %v3337 = vld [vmem:[#allocation26 + $0x4e0] sm:$0xff]
    %v3338 = vld [vmem:[#allocation26 + $0x4e8] sm:$0xf]
    %v3339 = vld [vmem:[#allocation26 + $0x4ec] sm:$0xff]
    %v3340 = vld [vmem:[#allocation26 + $0x4f4] sm:$0xff]
    %v3341 = vld [vmem:[#allocation26 + $0x4fc] sm:$0xff]
    %v3342 = vld [vmem:[#allocation26 + $0x504] sm:$0xf]
    %v3343 = vld [vmem:[#allocation26 + $0x508] sm:$0xff]
    %v3344 = vld [vmem:[#allocation26 + $0x510] sm:$0xff]
    %v3345 = vld [vmem:[#allocation26 + $0x518] sm:$0xff]
    %v3346 = vld [vmem:[#allocation26 + $0x520] sm:$0xf]
    %v3347 = vld [vmem:[#allocation26 + $0x524] sm:$0xff]
    %v3348 = vld [vmem:[#allocation26 + $0x52c] sm:$0xff]
    %v3349 = vld [vmem:[#allocation26 + $0x534] sm:$0xff]
    %v3350 = vld [vmem:[#allocation26 + $0x53c] sm:$0xf]
    %v3351 = vld [vmem:[#allocation26 + $0x540] sm:$0xff]
    %v3352 = vld [vmem:[#allocation26 + $0x548] sm:$0xff]
    %v3353 = vld [vmem:[#allocation26 + $0x550] sm:$0xff]
    %v3354 = vld [vmem:[#allocation26 + $0x558] sm:$0xf]
    %v3355 = vld [vmem:[#allocation26 + $0x55c] sm:$0xff]
    %v3356 = vld [vmem:[#allocation26 + $0x564] sm:$0xff]
    %v3357 = vld [vmem:[#allocation26 + $0x56c] sm:$0xff]
    %v3358 = vld [vmem:[#allocation26 + $0x574] sm:$0xf]
    %v3359 = vld [vmem:[#allocation26 + $0x578] sm:$0xff]
    %v3360 = vld [vmem:[#allocation26 + $0x580] sm:$0xff]
    %v3361 = vld [vmem:[#allocation26 + $0x588] sm:$0xff]
    %v3362 = vld [vmem:[#allocation26 + $0x590] sm:$0xf]
    %v3363 = vld [vmem:[#allocation26 + $0x594] sm:$0xff]
    %v3364 = vld [vmem:[#allocation26 + $0x59c] sm:$0xff]
    %v3365 = vld [vmem:[#allocation26 + $0x5a4] sm:$0xff]
    %v3366 = vld [vmem:[#allocation26 + $0x5ac] sm:$0xf]
    %v3367 = vld [vmem:[#allocation26 + $0x5b0] sm:$0xff]
    %v3368 = vld [vmem:[#allocation26 + $0x5b8] sm:$0xff]
    %v3369 = vld [vmem:[#allocation26 + $0x5c0] sm:$0xff]
    %v3370 = vld [vmem:[#allocation26 + $0x5c8] sm:$0xf]
    %v3371 = vld [vmem:[#allocation26 + $0x5cc] sm:$0xff]
    %v3372 = vld [vmem:[#allocation26 + $0x5d4] sm:$0xff]
    %v3373 = vld [vmem:[#allocation26 + $0x5dc] sm:$0xff]
    %v3374 = vld [vmem:[#allocation26 + $0x5e4] sm:$0xf]
    %v3375 = vld [vmem:[#allocation26 + $0x5e8] sm:$0xff]
    %v3376 = vld [vmem:[#allocation26 + $0x5f0] sm:$0xff]
    %v3377 = vld [vmem:[#allocation26 + $0x5f8] sm:$0xff]
    %v3378 = vld [vmem:[#allocation26 + $0x600] sm:$0xf]
    %v3379 = vld [vmem:[#allocation26 + $0x604] sm:$0xff]
    %v3380 = vld [vmem:[#allocation26 + $0x60c] sm:$0xff]
    %v3381 = vld [vmem:[#allocation26 + $0x614] sm:$0xff]
    %v3382 = vld [vmem:[#allocation26 + $0x61c] sm:$0xf]
    %v3383 = vld [vmem:[#allocation26 + $0x620] sm:$0xff]
    %v3384 = vld [vmem:[#allocation26 + $0x628] sm:$0xff]
    %v3385 = vld [vmem:[#allocation26 + $0x630] sm:$0xff]
    %v3386 = vld [vmem:[#allocation26 + $0x638] sm:$0xf]
    %v3387 = vld [vmem:[#allocation26 + $0x63c] sm:$0xff]
    %v3388 = vld [vmem:[#allocation26 + $0x644] sm:$0xff]
    %v3389 = vld [vmem:[#allocation26 + $0x64c] sm:$0xff]
    %v3390 = vld [vmem:[#allocation26 + $0x654] sm:$0xf]
    %v3391 = vld [vmem:[#allocation26 + $0x658] sm:$0xff]
    %v3392 = vld [vmem:[#allocation26 + $0x660] sm:$0xff]
    %v3393 = vld [vmem:[#allocation26 + $0x668] sm:$0xff]
    %v3394 = vld [vmem:[#allocation26 + $0x670] sm:$0xf]
    %v3395 = vld [vmem:[#allocation26 + $0x674] sm:$0xff]
    %v3396 = vld [vmem:[#allocation26 + $0x67c] sm:$0xff]
    %v3397 = vld [vmem:[#allocation26 + $0x684] sm:$0xff]
    %v3398 = vld [vmem:[#allocation26 + $0x68c] sm:$0xf]
    %v3399 = vld [vmem:[#allocation26 + $0x690] sm:$0xff]
    %v3400 = vld [vmem:[#allocation26 + $0x698] sm:$0xff]
    %v3401 = vld [vmem:[#allocation26 + $0x6a0] sm:$0xff]
    %v3402 = vld [vmem:[#allocation26 + $0x6a8] sm:$0xf]
    %v3403 = vld [vmem:[#allocation26 + $0x6ac] sm:$0xff]
    %v3404 = vld [vmem:[#allocation26 + $0x6b4] sm:$0xff]
    %v3405 = vld [vmem:[#allocation26 + $0x6bc] sm:$0xff]
    %v3406 = vld [vmem:[#allocation26 + $0x6c4] sm:$0xf]
    %v3407 = vld [vmem:[#allocation26 + $0x6c8] sm:$0xff]
    %v3408 = vld [vmem:[#allocation26 + $0x6d0] sm:$0xff]
    %v3409 = vld [vmem:[#allocation26 + $0x6d8] sm:$0xff]
    %v3410 = vld [vmem:[#allocation26 + $0x6e0] sm:$0xf]
    %v3411 = vld [vmem:[#allocation26 + $0x6e4] sm:$0xff]
    %v3412 = vld [vmem:[#allocation26 + $0x6ec] sm:$0xff]
    %v3413 = vld [vmem:[#allocation26 + $0x6f4] sm:$0xff]
    %v3414 = vld [vmem:[#allocation26 + $0x6fc] sm:$0xf]
    %v3415 = vld [vmem:[#allocation26 + $0x700] sm:$0xff]
    %v3416 = vld [vmem:[#allocation26 + $0x708] sm:$0xff]
    %v3417 = vld [vmem:[#allocation26 + $0x710] sm:$0xff]
    %v3418 = vld [vmem:[#allocation26 + $0x718] sm:$0xf]
    %v3419 = vld [vmem:[#allocation26 + $0x71c] sm:$0xff]
    %v3420 = vld [vmem:[#allocation26 + $0x724] sm:$0xff]
    %v3421 = vld [vmem:[#allocation26 + $0x72c] sm:$0xff]
    %v3422 = vld [vmem:[#allocation26 + $0x734] sm:$0xf]
    %v3423 = vld [vmem:[#allocation26 + $0x738] sm:$0xff]
    %v3424 = vld [vmem:[#allocation26 + $0x740] sm:$0xff]
    %v3425 = vld [vmem:[#allocation26 + $0x748] sm:$0xff]
    %v3426 = vld [vmem:[#allocation26 + $0x750] sm:$0xf]
    %v3427 = vld [vmem:[#allocation26 + $0x754] sm:$0xff]
    %v3428 = vld [vmem:[#allocation26 + $0x75c] sm:$0xff]
    %v3429 = vld [vmem:[#allocation26 + $0x764] sm:$0xff]
    %v3430 = vld [vmem:[#allocation26 + $0x76c] sm:$0xf]
    %v3431 = vld [vmem:[#allocation26 + $0x770] sm:$0xff]
    %v3432 = vld [vmem:[#allocation26 + $0x778] sm:$0xff]
    %v3433 = vld [vmem:[#allocation26 + $0x780] sm:$0xff]
    %v3434 = vld [vmem:[#allocation26 + $0x788] sm:$0xf]
    %v3435 = vld [vmem:[#allocation26 + $0x78c] sm:$0xff]
    %v3436 = vld [vmem:[#allocation26 + $0x794] sm:$0xff]
    %v3437 = vld [vmem:[#allocation26 + $0x79c] sm:$0xff]
    %v3438 = vld [vmem:[#allocation26 + $0x7a4] sm:$0xf]
    %v3439 = vld [vmem:[#allocation26 + $0x7a8] sm:$0xff]
    %v3440 = vld [vmem:[#allocation26 + $0x7b0] sm:$0xff]
    %v3441 = vld [vmem:[#allocation26 + $0x7b8] sm:$0xff]
    %v3442 = vld [vmem:[#allocation26 + $0x7c0] sm:$0xf]
    %v3443 = vld [vmem:[#allocation26 + $0x7c4] sm:$0xff]
    %v3444 = vld [vmem:[#allocation26 + $0x7cc] sm:$0xff]
    %v3445 = vld [vmem:[#allocation26 + $0x7d4] sm:$0xff]
    %v3446 = vld [vmem:[#allocation26 + $0x7dc] sm:$0xf]
    %v3447 = vld [vmem:[#allocation26 + $0x7e0] sm:$0xff]
    %v3448 = vld [vmem:[#allocation26 + $0x7e8] sm:$0xff]
    %v3449 = vld [vmem:[#allocation26 + $0x7f0] sm:$0xff]
    %v3450 = vld [vmem:[#allocation26 + $0x7f8] sm:$0xf]
    %v3451 = vld [vmem:[#allocation26 + $0x7fc] sm:$0xff]
    %v3452 = vld [vmem:[#allocation26 + $0x804] sm:$0xff]
    %v3453 = vld [vmem:[#allocation26 + $0x80c] sm:$0xff]
    %v3454 = vld [vmem:[#allocation26 + $0x814] sm:$0xf]
    %v3455 = vld [vmem:[#allocation26 + $0x818] sm:$0xff]
    %v3456 = vld [vmem:[#allocation26 + $0x820] sm:$0xff]
    %v3457 = vld [vmem:[#allocation26 + $0x828] sm:$0xff]
    %v3458 = vld [vmem:[#allocation26 + $0x830] sm:$0xf]
    %v3459 = vld [vmem:[#allocation26 + $0x834] sm:$0xff]
    %v3460 = vld [vmem:[#allocation26 + $0x83c] sm:$0xff]
    %v3461 = vld [vmem:[#allocation26 + $0x844] sm:$0xff]
    %v3462 = vld [vmem:[#allocation26 + $0x84c] sm:$0xf]
    %v3463 = vld [vmem:[#allocation26 + $0x850] sm:$0xff]
    %v3464 = vld [vmem:[#allocation26 + $0x858] sm:$0xff]
    %v3465 = vld [vmem:[#allocation26 + $0x860] sm:$0xff]
    %v3466 = vld [vmem:[#allocation26 + $0x868] sm:$0xf]
    %v3467 = vld [vmem:[#allocation26 + $0x86c] sm:$0xff]
    %v3468 = vld [vmem:[#allocation26 + $0x874] sm:$0xff]
    %v3469 = vld [vmem:[#allocation26 + $0x87c] sm:$0xff]
    %v3470 = vld [vmem:[#allocation26 + $0x884] sm:$0xf]
    %v3471 = vld [vmem:[#allocation26 + $0x888] sm:$0xff]
    %v3472 = vld [vmem:[#allocation26 + $0x890] sm:$0xff]
    %v3473 = vld [vmem:[#allocation26 + $0x898] sm:$0xff]
    %v3474 = vld [vmem:[#allocation26 + $0x8a0] sm:$0xf]
    %v3475 = vld [vmem:[#allocation26 + $0x8a4] sm:$0xff]
    %v3476 = vld [vmem:[#allocation26 + $0x8ac] sm:$0xff]
    %v3477 = vld [vmem:[#allocation26 + $0x8b4] sm:$0xff]
    %v3478 = vld [vmem:[#allocation26 + $0x8bc] sm:$0xf]
    %v3479 = vld [vmem:[#allocation26 + $0x8c0] sm:$0xff]
    %v3480 = vld [vmem:[#allocation26 + $0x8c8] sm:$0xff]
    %v3481 = vld [vmem:[#allocation26 + $0x8d0] sm:$0xff]
    %v3482 = vld [vmem:[#allocation26 + $0x8d8] sm:$0xf]
    %v3483 = vld [vmem:[#allocation26 + $0x8dc] sm:$0xff]
    %v3484 = vld [vmem:[#allocation26 + $0x8e4] sm:$0xff]
    %v3485 = vld [vmem:[#allocation26 + $0x8ec] sm:$0xff]
    %v3486 = vld [vmem:[#allocation26 + $0x8f4] sm:$0xf]
    %v3487 = vld [vmem:[#allocation26 + $0x8f8] sm:$0xff]
    %v3488 = vld [vmem:[#allocation26 + $0x900] sm:$0xff]
    %v3489 = vld [vmem:[#allocation26 + $0x908] sm:$0xff]
    %v3490 = vld [vmem:[#allocation26 + $0x910] sm:$0xf]
    %v3491 = vld [vmem:[#allocation26 + $0x914] sm:$0xff]
    %v3492 = vld [vmem:[#allocation26 + $0x91c] sm:$0xff]
    %v3493 = vld [vmem:[#allocation26 + $0x924] sm:$0xff]
    %v3494 = vld [vmem:[#allocation26 + $0x92c] sm:$0xf]
    %v3495 = vld [vmem:[#allocation26 + $0x930] sm:$0xff]
    %v3496 = vld [vmem:[#allocation26 + $0x938] sm:$0xff]
    %v3497 = vld [vmem:[#allocation26 + $0x940] sm:$0xff]
    %v3498 = vld [vmem:[#allocation26 + $0x948] sm:$0xf]
    %v3499 = vld [vmem:[#allocation26 + $0x94c] sm:$0xff]
    %v3500 = vld [vmem:[#allocation26 + $0x954] sm:$0xff]
    %v3501 = vld [vmem:[#allocation26 + $0x95c] sm:$0xff]
    %v3502 = vld [vmem:[#allocation26 + $0x964] sm:$0xf]
    %v3503 = vld [vmem:[#allocation26 + $0x968] sm:$0xff]
    %v3504 = vld [vmem:[#allocation26 + $0x970] sm:$0xff]
    %v3505 = vld [vmem:[#allocation26 + $0x978] sm:$0xff]
    %v3506 = vld [vmem:[#allocation26 + $0x980] sm:$0xf]
    %v3507 = vld [vmem:[#allocation26 + $0x984] sm:$0xff]
    %v3508 = vld [vmem:[#allocation26 + $0x98c] sm:$0xff]
    %v3509 = vld [vmem:[#allocation26 + $0x994] sm:$0xff]
    %v3510 = vld [vmem:[#allocation26 + $0x99c] sm:$0xf]
    %v3511 = vld [vmem:[#allocation26 + $0x9a0] sm:$0xff]
    %v3512 = vld [vmem:[#allocation26 + $0x9a8] sm:$0xff]
    %v3513 = vld [vmem:[#allocation26 + $0x9b0] sm:$0xff]
    %v3514 = vld [vmem:[#allocation26 + $0x9b8] sm:$0xf]
    %v3515 = vld [vmem:[#allocation26 + $0x9bc] sm:$0xff]
    %v3516 = vld [vmem:[#allocation26 + $0x9c4] sm:$0xff]
    %v3517 = vld [vmem:[#allocation26 + $0x9cc] sm:$0xff]
    %v3518 = vld [vmem:[#allocation26 + $0x9d4] sm:$0xf]
    %v3519 = vld [vmem:[#allocation26 + $0x9d8] sm:$0xff]
    %v3520 = vld [vmem:[#allocation26 + $0x9e0] sm:$0xff]
    %v3521 = vld [vmem:[#allocation26 + $0x9e8] sm:$0xff]
    %v3522 = vld [vmem:[#allocation26 + $0x9f0] sm:$0xf]
    %v3523 = vld [vmem:[#allocation26 + $0x9f4] sm:$0xff]
    %v3524 = vld [vmem:[#allocation26 + $0x9fc] sm:$0xff]
    %v3525 = vld [vmem:[#allocation26 + $0xa04] sm:$0xff]
    %v3526 = vld [vmem:[#allocation26 + $0xa0c] sm:$0xf]
    %v3527 = vld [vmem:[#allocation26 + $0xa10] sm:$0xff]
    %v3528 = vld [vmem:[#allocation26 + $0xa18] sm:$0xff]
    %v3529 = vld [vmem:[#allocation26 + $0xa20] sm:$0xff]
    %v3530 = vld [vmem:[#allocation26 + $0xa28] sm:$0xf]
    %v3531 = vld [vmem:[#allocation26 + $0xa2c] sm:$0xff]
    %v3532 = vld [vmem:[#allocation26 + $0xa34] sm:$0xff]
    %v3533 = vld [vmem:[#allocation26 + $0xa3c] sm:$0xff]
    %v3534 = vld [vmem:[#allocation26 + $0xa44] sm:$0xf]
    %v3535 = vld [vmem:[#allocation26 + $0xa48] sm:$0xff]
    %v3536 = vld [vmem:[#allocation26 + $0xa50] sm:$0xff]
    %v3537 = vld [vmem:[#allocation26 + $0xa58] sm:$0xff]
    %v3538 = vld [vmem:[#allocation26 + $0xa60] sm:$0xf]
    %v3539 = vld [vmem:[#allocation26 + $0xa64] sm:$0xff]
    %v3540 = vld [vmem:[#allocation26 + $0xa6c] sm:$0xff]
    %v3541 = vld [vmem:[#allocation26 + $0xa74] sm:$0xff]
    %v3542 = vld [vmem:[#allocation26 + $0xa7c] sm:$0xf]
    %v3543 = vld [vmem:[#allocation26 + $0xa80] sm:$0xff]
    %v3544 = vld [vmem:[#allocation26 + $0xa88] sm:$0xff]
    %v3545 = vld [vmem:[#allocation26 + $0xa90] sm:$0xff]
    %v3546 = vld [vmem:[#allocation26 + $0xa98] sm:$0xf]
    %v3547 = vld [vmem:[#allocation26 + $0xa9c] sm:$0xff]
    %v3548 = vld [vmem:[#allocation26 + $0xaa4] sm:$0xff]
    %v3549 = vld [vmem:[#allocation26 + $0xaac] sm:$0xff]
    %v3550 = vld [vmem:[#allocation26 + $0xab4] sm:$0xf]
    %v3551 = vld [vmem:[#allocation26 + $0xab8] sm:$0xff]
    %v3552 = vld [vmem:[#allocation26 + $0xac0] sm:$0xff]
    %v3553 = vld [vmem:[#allocation26 + $0xac8] sm:$0xff]
    %v3554 = vld [vmem:[#allocation26 + $0xad0] sm:$0xf]
    %v3555 = vld [vmem:[#allocation26 + $0xad4] sm:$0xff]
    %v3556 = vld [vmem:[#allocation26 + $0xadc] sm:$0xff]
    %v3557 = vld [vmem:[#allocation26 + $0xae4] sm:$0xff]
    %v3558 = vld [vmem:[#allocation26 + $0xaec] sm:$0xf]
    %v3559 = vld [vmem:[#allocation26 + $0xaf0] sm:$0xff]
    %v3560 = vld [vmem:[#allocation26 + $0xaf8] sm:$0xff]
    %v3561 = vld [vmem:[#allocation26 + $0xb00] sm:$0xff]
    %v3562 = vld [vmem:[#allocation26 + $0xb08] sm:$0xf]
    %v3563 = vld [vmem:[#allocation26 + $0xb0c] sm:$0xff]
    %v3564 = vld [vmem:[#allocation26 + $0xb14] sm:$0xff]
    %v3565 = vld [vmem:[#allocation26 + $0xb1c] sm:$0xff]
    %v3566 = vld [vmem:[#allocation26 + $0xb24] sm:$0xf]
    %v3567 = vld [vmem:[#allocation26 + $0xb28] sm:$0xff]
    %v3568 = vld [vmem:[#allocation26 + $0xb30] sm:$0xff]
    %v3569 = vld [vmem:[#allocation26 + $0xb38] sm:$0xff]
    %v3570 = vld [vmem:[#allocation26 + $0xb40] sm:$0xf]
    %v3571 = vld [vmem:[#allocation26 + $0xb44] sm:$0xff]
    %v3572 = vld [vmem:[#allocation26 + $0xb4c] sm:$0xff]
    %v3573 = vld [vmem:[#allocation26 + $0xb54] sm:$0xff]
    %v3574 = vld [vmem:[#allocation26 + $0xb5c] sm:$0xf]
    %v3575 = vld [vmem:[#allocation26 + $0xb60] sm:$0xff]
    %v3576 = vld [vmem:[#allocation26 + $0xb68] sm:$0xff]
    %v3577 = vld [vmem:[#allocation26 + $0xb70] sm:$0xff]
    %v3578 = vld [vmem:[#allocation26 + $0xb78] sm:$0xf]
    %v3579 = vld [vmem:[#allocation26 + $0xb7c] sm:$0xff]
    %v3580 = vld [vmem:[#allocation26 + $0xb84] sm:$0xff]
    %v3581 = vld [vmem:[#allocation26 + $0xb8c] sm:$0xff]
    %v3582 = vld [vmem:[#allocation26 + $0xb94] sm:$0xf]
    %v3583 = vld [vmem:[#allocation26 + $0xb98] sm:$0xff]
    %v3584 = vld [vmem:[#allocation26 + $0xba0] sm:$0xff]
    %v3585 = vld [vmem:[#allocation26 + $0xba8] sm:$0xff]
    %v3586 = vld [vmem:[#allocation26 + $0xbb0] sm:$0xf]
    %v3587 = vld [vmem:[#allocation26 + $0xbb4] sm:$0xff]
    %v3588 = vld [vmem:[#allocation26 + $0xbbc] sm:$0xff]
    %v3589 = vld [vmem:[#allocation26 + $0xbc4] sm:$0xff]
    %v3590 = vld [vmem:[#allocation26 + $0xbcc] sm:$0xf]
    %v3591 = vld [vmem:[#allocation26 + $0xbd0] sm:$0xff]
    %v3592 = vld [vmem:[#allocation26 + $0xbd8] sm:$0xff]
    %v3593 = vld [vmem:[#allocation26 + $0xbe0] sm:$0xff]
    %v3594 = vld [vmem:[#allocation26 + $0xbe8] sm:$0xf]
    %v3595 = vld [vmem:[#allocation26 + $0xbec] sm:$0xff]
    %v3596 = vld [vmem:[#allocation26 + $0xbf4] sm:$0xff]
    %v3597 = vld [vmem:[#allocation26 + $0xbfc] sm:$0xff]
    %v3598 = vld [vmem:[#allocation26 + $0xc04] sm:$0xf]
    %v3599 = vld [vmem:[#allocation26 + $0xc08] sm:$0xff]
    %v3600 = vld [vmem:[#allocation26 + $0xc10] sm:$0xff]
    %v3601 = vld [vmem:[#allocation26 + $0xc18] sm:$0xff]
    %v3602 = vld [vmem:[#allocation26 + $0xc20] sm:$0xf]
    %v3603 = vld [vmem:[#allocation26 + $0xc24] sm:$0xff]
    %v3604 = vld [vmem:[#allocation26 + $0xc2c] sm:$0xff]
    %v3605 = vld [vmem:[#allocation26 + $0xc34] sm:$0xff]
    %v3606 = vld [vmem:[#allocation26 + $0xc3c] sm:$0xf]
    %v3607 = vld [vmem:[#allocation26 + $0xc40] sm:$0xff]
    %v3608 = vld [vmem:[#allocation26 + $0xc48] sm:$0xff]
    %v3609 = vld [vmem:[#allocation26 + $0xc50] sm:$0xff]
    %v3610 = vld [vmem:[#allocation26 + $0xc58] sm:$0xf]
    %v3611 = vld [vmem:[#allocation26 + $0xc5c] sm:$0xff]
    %v3612 = vld [vmem:[#allocation26 + $0xc64] sm:$0xff]
    %v3613 = vld [vmem:[#allocation26 + $0xc6c] sm:$0xff]
    %v3614 = vld [vmem:[#allocation26 + $0xc74] sm:$0xf]
    %v3615 = vld [vmem:[#allocation26 + $0xc78] sm:$0xff]
    %v3616 = vld [vmem:[#allocation26 + $0xc80] sm:$0xff]
    %v3617 = vld [vmem:[#allocation26 + $0xc88] sm:$0xff]
    %v3618 = vld [vmem:[#allocation26 + $0xc90] sm:$0xf]
    %v3619 = vld [vmem:[#allocation26 + $0xc94] sm:$0xff]
    %v3620 = vld [vmem:[#allocation26 + $0xc9c] sm:$0xff]
    %v3621 = vld [vmem:[#allocation26 + $0xca4] sm:$0xff]
    %v3622 = vld [vmem:[#allocation26 + $0xcac] sm:$0xf]
    %v3623 = vld [vmem:[#allocation26 + $0xcb0] sm:$0xff]
    %v3624 = vld [vmem:[#allocation26 + $0xcb8] sm:$0xff]
    %v3625 = vld [vmem:[#allocation26 + $0xcc0] sm:$0xff]
    %v3626 = vld [vmem:[#allocation26 + $0xcc8] sm:$0xf]
    %v3627 = vld [vmem:[#allocation26 + $0xccc] sm:$0xff]
    %v3628 = vld [vmem:[#allocation26 + $0xcd4] sm:$0xff]
    %v3629 = vld [vmem:[#allocation26 + $0xcdc] sm:$0xff]
    %v3630 = vld [vmem:[#allocation26 + $0xce4] sm:$0xf]
    %v3631 = vld [vmem:[#allocation26 + $0xce8] sm:$0xff]
    %v3632 = vld [vmem:[#allocation26 + $0xcf0] sm:$0xff]
    %v3633 = vld [vmem:[#allocation26 + $0xcf8] sm:$0xff]
    %v3634 = vld [vmem:[#allocation26 + $0xd00] sm:$0xf]
    %v3635 = vld [vmem:[#allocation26 + $0xd04] sm:$0xff]
    %v3636 = vld [vmem:[#allocation26 + $0xd0c] sm:$0xff]
    %v3637 = vld [vmem:[#allocation26 + $0xd14] sm:$0xff]
    %v3638 = vld [vmem:[#allocation26 + $0xd1c] sm:$0xf]
    %v3639 = vld [vmem:[#allocation26 + $0xd20] sm:$0xff]
    %v3640 = vld [vmem:[#allocation26 + $0xd28] sm:$0xff]
    %v3641 = vld [vmem:[#allocation26 + $0xd30] sm:$0xff]
    %v3642 = vld [vmem:[#allocation26 + $0xd38] sm:$0xf]
    %v3643 = vld [vmem:[#allocation26 + $0xd3c] sm:$0xff]
    %v3644 = vld [vmem:[#allocation26 + $0xd44] sm:$0xff]
    %v3645 = vld [vmem:[#allocation26 + $0xd4c] sm:$0xff]
    %v3646 = vld [vmem:[#allocation26 + $0xd54] sm:$0xf]
    %v3647 = vld [vmem:[#allocation26 + $0xd58] sm:$0xff]
    %v3648 = vld [vmem:[#allocation26 + $0xd60] sm:$0xff]
    %v3649 = vld [vmem:[#allocation26 + $0xd68] sm:$0xff]
    %v3650 = vld [vmem:[#allocation26 + $0xd70] sm:$0xf]
    %v3651 = vld [vmem:[#allocation26 + $0xd74] sm:$0xff]
    %v3652 = vld [vmem:[#allocation26 + $0xd7c] sm:$0xff]
    %v3653 = vld [vmem:[#allocation26 + $0xd84] sm:$0xff]
    %v3654 = vld [vmem:[#allocation26 + $0xd8c] sm:$0xf]
    %v3655 = vld [vmem:[#allocation26 + $0xd90] sm:$0xff]
    %v3656 = vld [vmem:[#allocation26 + $0xd98] sm:$0xff]
    %v3657 = vld [vmem:[#allocation26 + $0xda0] sm:$0xff]
    %v3658 = vld [vmem:[#allocation26 + $0xda8] sm:$0xf]
    %v3659 = vld [vmem:[#allocation26 + $0xdac] sm:$0xff]
    %v3660 = vld [vmem:[#allocation26 + $0xdb4] sm:$0xff]
    %v3661 = vld [vmem:[#allocation26 + $0xdbc] sm:$0xff]
    %v3662 = vld [vmem:[#allocation26 + $0xdc4] sm:$0xf]
    %v3663 = vld [vmem:[#allocation26 + $0xdc8] sm:$0xff]
    %v3664 = vld [vmem:[#allocation26 + $0xdd0] sm:$0xff]
    %v3665 = vld [vmem:[#allocation26 + $0xdd8] sm:$0xff]
    %v3666 = vld [vmem:[#allocation26 + $0xde0] sm:$0xf]
    %v3667 = vld [vmem:[#allocation26 + $0xde4] sm:$0xff]
    %v3668 = vld [vmem:[#allocation26 + $0xdec] sm:$0xff]
    %v3669 = vld [vmem:[#allocation26 + $0xdf4] sm:$0xff]
    %v3670 = vld [vmem:[#allocation26 + $0xdfc] sm:$0xf]
    %v3671 = vld [vmem:[#allocation28] sm:$0xff]
    %v3673 = vlaneseq
    %v3674 = vshrl.u32 %v3673, 7
    %v3675 = vsub.s32 0, %v3674
    %v3676 = vrot.slane %v3671, %v3675
    %v3677 = vlaneseq
    %v3678 = vshrl.u32 %v3677, 7
    %v3679 = vsub.s32 1, %v3678
    %v3680 = vrot.slane %v3671, %v3679
    %v3681 = vlaneseq
    %v3682 = vshrl.u32 %v3681, 7
    %v3683 = vsub.s32 2, %v3682
    %v3684 = vrot.slane %v3671, %v3683
    %v3685 = vlaneseq
    %v3686 = vshrl.u32 %v3685, 7
    %v3687 = vsub.s32 3, %v3686
    %v3688 = vrot.slane %v3671, %v3687
    %v3689 = vlaneseq
    %v3690 = vshrl.u32 %v3689, 7
    %v3691 = vsub.s32 4, %v3690
    %v3692 = vrot.slane %v3671, %v3691
    %v3693 = vlaneseq
    %v3694 = vshrl.u32 %v3693, 7
    %v3695 = vsub.s32 5, %v3694
    %v3696 = vrot.slane %v3671, %v3695
    %v3697 = vlaneseq
    %v3698 = vshrl.u32 %v3697, 7
    %v3699 = vsub.s32 6, %v3698
    %v3700 = vrot.slane %v3671, %v3699
    %v4220 = vunpack.c.l.b16 %v3159
    %v4221 = vunpack.c.h.b16 %v3159
    %v4222 = vunpack.c.l.b16 %v3160
    %v4223 = vunpack.c.h.b16 %v3160
    %v4224 = vunpack.c.l.b16 %v3161
    %v4225 = vunpack.c.h.b16 %v3161
    %v4226 = vunpack.c.l.b16 %v3162
    %v4227 = vunpack.c.l.b16 %v3163
    %v4228 = vunpack.c.h.b16 %v3163
    %v4229 = vunpack.c.l.b16 %v3164
    %v4230 = vunpack.c.h.b16 %v3164
    %v4231 = vunpack.c.l.b16 %v3165
    %v4232 = vunpack.c.h.b16 %v3165
    %v4233 = vunpack.c.l.b16 %v3166
    %v4234 = vunpack.c.l.b16 %v3167
    %v4235 = vunpack.c.h.b16 %v3167
    %v4236 = vunpack.c.l.b16 %v3168
    %v4237 = vunpack.c.h.b16 %v3168
    %v4238 = vunpack.c.l.b16 %v3169
    %v4239 = vunpack.c.h.b16 %v3169
    %v4240 = vunpack.c.l.b16 %v3170
    %v4241 = vunpack.c.l.b16 %v3171
    %v4242 = vunpack.c.h.b16 %v3171
    %v4243 = vunpack.c.l.b16 %v3172
    %v4244 = vunpack.c.h.b16 %v3172
    %v4245 = vunpack.c.l.b16 %v3173
    %v4246 = vunpack.c.h.b16 %v3173
    %v4247 = vunpack.c.l.b16 %v3174
    %v4248 = vunpack.c.l.b16 %v3175
    %v4249 = vunpack.c.h.b16 %v3175
    %v4250 = vunpack.c.l.b16 %v3176
    %v4251 = vunpack.c.h.b16 %v3176
    %v4252 = vunpack.c.l.b16 %v3177
    %v4253 = vunpack.c.h.b16 %v3177
    %v4254 = vunpack.c.l.b16 %v3178
    %v4255 = vunpack.c.l.b16 %v3179
    %v4256 = vunpack.c.h.b16 %v3179
    %v4257 = vunpack.c.l.b16 %v3180
    %v4258 = vunpack.c.h.b16 %v3180
    %v4259 = vunpack.c.l.b16 %v3181
    %v4260 = vunpack.c.h.b16 %v3181
    %v4261 = vunpack.c.l.b16 %v3182
    %v4262 = vunpack.c.l.b16 %v3183
    %v4263 = vunpack.c.h.b16 %v3183
    %v4264 = vunpack.c.l.b16 %v3184
    %v4265 = vunpack.c.h.b16 %v3184
    %v4266 = vunpack.c.l.b16 %v3185
    %v4267 = vunpack.c.h.b16 %v3185
    %v4268 = vunpack.c.l.b16 %v3186
    %v4269 = vunpack.c.l.b16 %v3187
    %v4270 = vunpack.c.h.b16 %v3187
    %v4271 = vunpack.c.l.b16 %v3188
    %v4272 = vunpack.c.h.b16 %v3188
    %v4273 = vunpack.c.l.b16 %v3189
    %v4274 = vunpack.c.h.b16 %v3189
    %v4275 = vunpack.c.l.b16 %v3190
    %v4276 = vunpack.c.l.b16 %v3191
    %v4277 = vunpack.c.h.b16 %v3191
    %v4278 = vunpack.c.l.b16 %v3192
    %v4279 = vunpack.c.h.b16 %v3192
    %v4280 = vunpack.c.l.b16 %v3193
    %v4281 = vunpack.c.h.b16 %v3193
    %v4282 = vunpack.c.l.b16 %v3194
    %v4283 = vunpack.c.l.b16 %v3195
    %v4284 = vunpack.c.h.b16 %v3195
    %v4285 = vunpack.c.l.b16 %v3196
    %v4286 = vunpack.c.h.b16 %v3196
    %v4287 = vunpack.c.l.b16 %v3197
    %v4288 = vunpack.c.h.b16 %v3197
    %v4289 = vunpack.c.l.b16 %v3198
    %v4290 = vunpack.c.l.b16 %v3199
    %v4291 = vunpack.c.h.b16 %v3199
    %v4292 = vunpack.c.l.b16 %v3200
    %v4293 = vunpack.c.h.b16 %v3200
    %v4294 = vunpack.c.l.b16 %v3201
    %v4295 = vunpack.c.h.b16 %v3201
    %v4296 = vunpack.c.l.b16 %v3202
    %v4297 = vunpack.c.l.b16 %v3203
    %v4298 = vunpack.c.h.b16 %v3203
    %v4299 = vunpack.c.l.b16 %v3204
    %v4300 = vunpack.c.h.b16 %v3204
    %v4301 = vunpack.c.l.b16 %v3205
    %v4302 = vunpack.c.h.b16 %v3205
    %v4303 = vunpack.c.l.b16 %v3206
    %v4304 = vunpack.c.l.b16 %v3207
    %v4305 = vunpack.c.h.b16 %v3207
    %v4306 = vunpack.c.l.b16 %v3208
    %v4307 = vunpack.c.h.b16 %v3208
    %v4308 = vunpack.c.l.b16 %v3209
    %v4309 = vunpack.c.h.b16 %v3209
    %v4310 = vunpack.c.l.b16 %v3210
    %v4311 = vunpack.c.l.b16 %v3211
    %v4312 = vunpack.c.h.b16 %v3211
    %v4313 = vunpack.c.l.b16 %v3212
    %v4314 = vunpack.c.h.b16 %v3212
    %v4315 = vunpack.c.l.b16 %v3213
    %v4316 = vunpack.c.h.b16 %v3213
    %v4317 = vunpack.c.l.b16 %v3214
    %v4318 = vunpack.c.l.b16 %v3215
    %v4319 = vunpack.c.h.b16 %v3215
    %v4320 = vunpack.c.l.b16 %v3216
    %v4321 = vunpack.c.h.b16 %v3216
    %v4322 = vunpack.c.l.b16 %v3217
    %v4323 = vunpack.c.h.b16 %v3217
    %v4324 = vunpack.c.l.b16 %v3218
    %v4325 = vunpack.c.l.b16 %v3219
    %v4326 = vunpack.c.h.b16 %v3219
    %v4327 = vunpack.c.l.b16 %v3220
    %v4328 = vunpack.c.h.b16 %v3220
    %v4329 = vunpack.c.l.b16 %v3221
    %v4330 = vunpack.c.h.b16 %v3221
    %v4331 = vunpack.c.l.b16 %v3222
    %v4332 = vunpack.c.l.b16 %v3223
    %v4333 = vunpack.c.h.b16 %v3223
    %v4334 = vunpack.c.l.b16 %v3224
    %v4335 = vunpack.c.h.b16 %v3224
    %v4336 = vunpack.c.l.b16 %v3225
    %v4337 = vunpack.c.h.b16 %v3225
    %v4338 = vunpack.c.l.b16 %v3226
    %v4339 = vunpack.c.l.b16 %v3227
    %v4340 = vunpack.c.h.b16 %v3227
    %v4341 = vunpack.c.l.b16 %v3228
    %v4342 = vunpack.c.h.b16 %v3228
    %v4343 = vunpack.c.l.b16 %v3229
    %v4344 = vunpack.c.h.b16 %v3229
    %v4345 = vunpack.c.l.b16 %v3230
    %v4346 = vunpack.c.l.b16 %v3231
    %v4347 = vunpack.c.h.b16 %v3231
    %v4348 = vunpack.c.l.b16 %v3232
    %v4349 = vunpack.c.h.b16 %v3232
    %v4350 = vunpack.c.l.b16 %v3233
    %v4351 = vunpack.c.h.b16 %v3233
    %v4352 = vunpack.c.l.b16 %v3234
    %v4353 = vunpack.c.l.b16 %v3235
    %v4354 = vunpack.c.h.b16 %v3235
    %v4355 = vunpack.c.l.b16 %v3236
    %v4356 = vunpack.c.h.b16 %v3236
    %v4357 = vunpack.c.l.b16 %v3237
    %v4358 = vunpack.c.h.b16 %v3237
    %v4359 = vunpack.c.l.b16 %v3238
    %v4360 = vunpack.c.l.b16 %v3239
    %v4361 = vunpack.c.h.b16 %v3239
    %v4362 = vunpack.c.l.b16 %v3240
    %v4363 = vunpack.c.h.b16 %v3240
    %v4364 = vunpack.c.l.b16 %v3241
    %v4365 = vunpack.c.h.b16 %v3241
    %v4366 = vunpack.c.l.b16 %v3242
    %v4367 = vunpack.c.l.b16 %v3243
    %v4368 = vunpack.c.h.b16 %v3243
    %v4369 = vunpack.c.l.b16 %v3244
    %v4370 = vunpack.c.h.b16 %v3244
    %v4371 = vunpack.c.l.b16 %v3245
    %v4372 = vunpack.c.h.b16 %v3245
    %v4373 = vunpack.c.l.b16 %v3246
    %v4374 = vunpack.c.l.b16 %v3247
    %v4375 = vunpack.c.h.b16 %v3247
    %v4376 = vunpack.c.l.b16 %v3248
    %v4377 = vunpack.c.h.b16 %v3248
    %v4378 = vunpack.c.l.b16 %v3249
    %v4379 = vunpack.c.h.b16 %v3249
    %v4380 = vunpack.c.l.b16 %v3250
    %v4381 = vunpack.c.l.b16 %v3251
    %v4382 = vunpack.c.h.b16 %v3251
    %v4383 = vunpack.c.l.b16 %v3252
    %v4384 = vunpack.c.h.b16 %v3252
    %v4385 = vunpack.c.l.b16 %v3253
    %v4386 = vunpack.c.h.b16 %v3253
    %v4387 = vunpack.c.l.b16 %v3254
    %v4388 = vunpack.c.l.b16 %v3255
    %v4389 = vunpack.c.h.b16 %v3255
    %v4390 = vunpack.c.l.b16 %v3256
    %v4391 = vunpack.c.h.b16 %v3256
    %v4392 = vunpack.c.l.b16 %v3257
    %v4393 = vunpack.c.h.b16 %v3257
    %v4394 = vunpack.c.l.b16 %v3258
    %v4395 = vunpack.c.l.b16 %v3259
    %v4396 = vunpack.c.h.b16 %v3259
    %v4397 = vunpack.c.l.b16 %v3260
    %v4398 = vunpack.c.h.b16 %v3260
    %v4399 = vunpack.c.l.b16 %v3261
    %v4400 = vunpack.c.h.b16 %v3261
    %v4401 = vunpack.c.l.b16 %v3262
    %v4402 = vunpack.c.l.b16 %v3263
    %v4403 = vunpack.c.h.b16 %v3263
    %v4404 = vunpack.c.l.b16 %v3264
    %v4405 = vunpack.c.h.b16 %v3264
    %v4406 = vunpack.c.l.b16 %v3265
    %v4407 = vunpack.c.h.b16 %v3265
    %v4408 = vunpack.c.l.b16 %v3266
    %v4409 = vunpack.c.l.b16 %v3267
    %v4410 = vunpack.c.h.b16 %v3267
    %v4411 = vunpack.c.l.b16 %v3268
    %v4412 = vunpack.c.h.b16 %v3268
    %v4413 = vunpack.c.l.b16 %v3269
    %v4414 = vunpack.c.h.b16 %v3269
    %v4415 = vunpack.c.l.b16 %v3270
    %v4416 = vunpack.c.l.b16 %v3271
    %v4417 = vunpack.c.h.b16 %v3271
    %v4418 = vunpack.c.l.b16 %v3272
    %v4419 = vunpack.c.h.b16 %v3272
    %v4420 = vunpack.c.l.b16 %v3273
    %v4421 = vunpack.c.h.b16 %v3273
    %v4422 = vunpack.c.l.b16 %v3274
    %v4423 = vunpack.c.l.b16 %v3275
    %v4424 = vunpack.c.h.b16 %v3275
    %v4425 = vunpack.c.l.b16 %v3276
    %v4426 = vunpack.c.h.b16 %v3276
    %v4427 = vunpack.c.l.b16 %v3277
    %v4428 = vunpack.c.h.b16 %v3277
    %v4429 = vunpack.c.l.b16 %v3278
    %v4430 = vunpack.c.l.b16 %v3279
    %v4431 = vunpack.c.h.b16 %v3279
    %v4432 = vunpack.c.l.b16 %v3280
    %v4433 = vunpack.c.h.b16 %v3280
    %v4434 = vunpack.c.l.b16 %v3281
    %v4435 = vunpack.c.h.b16 %v3281
    %v4436 = vunpack.c.l.b16 %v3282
    %v4437 = vunpack.c.l.b16 %v3283
    %v4438 = vunpack.c.h.b16 %v3283
    %v4439 = vunpack.c.l.b16 %v3284
    %v4440 = vunpack.c.h.b16 %v3284
    %v4441 = vunpack.c.l.b16 %v3285
    %v4442 = vunpack.c.h.b16 %v3285
    %v4443 = vunpack.c.l.b16 %v3286
    %v4444 = vunpack.c.l.b16 %v3287
    %v4445 = vunpack.c.h.b16 %v3287
    %v4446 = vunpack.c.l.b16 %v3288
    %v4447 = vunpack.c.h.b16 %v3288
    %v4448 = vunpack.c.l.b16 %v3289
    %v4449 = vunpack.c.h.b16 %v3289
    %v4450 = vunpack.c.l.b16 %v3290
    %v4451 = vunpack.c.l.b16 %v3291
    %v4452 = vunpack.c.h.b16 %v3291
    %v4453 = vunpack.c.l.b16 %v3292
    %v4454 = vunpack.c.h.b16 %v3292
    %v4455 = vunpack.c.l.b16 %v3293
    %v4456 = vunpack.c.h.b16 %v3293
    %v4457 = vunpack.c.l.b16 %v3294
    %v4458 = vunpack.c.l.b16 %v3295
    %v4459 = vunpack.c.h.b16 %v3295
    %v4460 = vunpack.c.l.b16 %v3296
    %v4461 = vunpack.c.h.b16 %v3296
    %v4462 = vunpack.c.l.b16 %v3297
    %v4463 = vunpack.c.h.b16 %v3297
    %v4464 = vunpack.c.l.b16 %v3298
    %v4465 = vunpack.c.l.b16 %v3299
    %v4466 = vunpack.c.h.b16 %v3299
    %v4467 = vunpack.c.l.b16 %v3300
    %v4468 = vunpack.c.h.b16 %v3300
    %v4469 = vunpack.c.l.b16 %v3301
    %v4470 = vunpack.c.h.b16 %v3301
    %v4471 = vunpack.c.l.b16 %v3302
    %v4472 = vunpack.c.l.b16 %v3303
    %v4473 = vunpack.c.h.b16 %v3303
    %v4474 = vunpack.c.l.b16 %v3304
    %v4475 = vunpack.c.h.b16 %v3304
    %v4476 = vunpack.c.l.b16 %v3305
    %v4477 = vunpack.c.h.b16 %v3305
    %v4478 = vunpack.c.l.b16 %v3306
    %v4479 = vunpack.c.l.b16 %v3307
    %v4480 = vunpack.c.h.b16 %v3307
    %v4481 = vunpack.c.l.b16 %v3308
    %v4482 = vunpack.c.h.b16 %v3308
    %v4483 = vunpack.c.l.b16 %v3309
    %v4484 = vunpack.c.h.b16 %v3309
    %v4485 = vunpack.c.l.b16 %v3310
    %v4486 = vunpack.c.l.b16 %v3311
    %v4487 = vunpack.c.h.b16 %v3311
    %v4488 = vunpack.c.l.b16 %v3312
    %v4489 = vunpack.c.h.b16 %v3312
    %v4490 = vunpack.c.l.b16 %v3313
    %v4491 = vunpack.c.h.b16 %v3313
    %v4492 = vunpack.c.l.b16 %v3314
    %v4493 = vunpack.c.l.b16 %v3315
    %v4494 = vunpack.c.h.b16 %v3315
    %v4495 = vunpack.c.l.b16 %v3316
    %v4496 = vunpack.c.h.b16 %v3316
    %v4497 = vunpack.c.l.b16 %v3317
    %v4498 = vunpack.c.h.b16 %v3317
    %v4499 = vunpack.c.l.b16 %v3318
    %v4500 = vunpack.c.l.b16 %v3319
    %v4501 = vunpack.c.h.b16 %v3319
    %v4502 = vunpack.c.l.b16 %v3320
    %v4503 = vunpack.c.h.b16 %v3320
    %v4504 = vunpack.c.l.b16 %v3321
    %v4505 = vunpack.c.h.b16 %v3321
    %v4506 = vunpack.c.l.b16 %v3322
    %v4507 = vunpack.c.l.b16 %v3323
    %v4508 = vunpack.c.h.b16 %v3323
    %v4509 = vunpack.c.l.b16 %v3324
    %v4510 = vunpack.c.h.b16 %v3324
    %v4511 = vunpack.c.l.b16 %v3325
    %v4512 = vunpack.c.h.b16 %v3325
    %v4513 = vunpack.c.l.b16 %v3326
    %v4514 = vunpack.c.l.b16 %v3327
    %v4515 = vunpack.c.h.b16 %v3327
    %v4516 = vunpack.c.l.b16 %v3328
    %v4517 = vunpack.c.h.b16 %v3328
    %v4518 = vunpack.c.l.b16 %v3329
    %v4519 = vunpack.c.h.b16 %v3329
    %v4520 = vunpack.c.l.b16 %v3330
    %v4521 = vunpack.c.l.b16 %v3331
    %v4522 = vunpack.c.h.b16 %v3331
    %v4523 = vunpack.c.l.b16 %v3332
    %v4524 = vunpack.c.h.b16 %v3332
    %v4525 = vunpack.c.l.b16 %v3333
    %v4526 = vunpack.c.h.b16 %v3333
    %v4527 = vunpack.c.l.b16 %v3334
    %v4528 = vunpack.c.l.b16 %v3335
    %v4529 = vunpack.c.h.b16 %v3335
    %v4530 = vunpack.c.l.b16 %v3336
    %v4531 = vunpack.c.h.b16 %v3336
    %v4532 = vunpack.c.l.b16 %v3337
    %v4533 = vunpack.c.h.b16 %v3337
    %v4534 = vunpack.c.l.b16 %v3338
    %v4535 = vunpack.c.l.b16 %v3339
    %v4536 = vunpack.c.h.b16 %v3339
    %v4537 = vunpack.c.l.b16 %v3340
    %v4538 = vunpack.c.h.b16 %v3340
    %v4539 = vunpack.c.l.b16 %v3341
    %v4540 = vunpack.c.h.b16 %v3341
    %v4541 = vunpack.c.l.b16 %v3342
    %v4542 = vunpack.c.l.b16 %v3343
    %v4543 = vunpack.c.h.b16 %v3343
    %v4544 = vunpack.c.l.b16 %v3344
    %v4545 = vunpack.c.h.b16 %v3344
    %v4546 = vunpack.c.l.b16 %v3345
    %v4547 = vunpack.c.h.b16 %v3345
    %v4548 = vunpack.c.l.b16 %v3346
    %v4549 = vunpack.c.l.b16 %v3347
    %v4550 = vunpack.c.h.b16 %v3347
    %v4551 = vunpack.c.l.b16 %v3348
    %v4552 = vunpack.c.h.b16 %v3348
    %v4553 = vunpack.c.l.b16 %v3349
    %v4554 = vunpack.c.h.b16 %v3349
    %v4555 = vunpack.c.l.b16 %v3350
    %v4556 = vunpack.c.l.b16 %v3351
    %v4557 = vunpack.c.h.b16 %v3351
    %v4558 = vunpack.c.l.b16 %v3352
    %v4559 = vunpack.c.h.b16 %v3352
    %v4560 = vunpack.c.l.b16 %v3353
    %v4561 = vunpack.c.h.b16 %v3353
    %v4562 = vunpack.c.l.b16 %v3354
    %v4563 = vunpack.c.l.b16 %v3355
    %v4564 = vunpack.c.h.b16 %v3355
    %v4565 = vunpack.c.l.b16 %v3356
    %v4566 = vunpack.c.h.b16 %v3356
    %v4567 = vunpack.c.l.b16 %v3357
    %v4568 = vunpack.c.h.b16 %v3357
    %v4569 = vunpack.c.l.b16 %v3358
    %v4570 = vunpack.c.l.b16 %v3359
    %v4571 = vunpack.c.h.b16 %v3359
    %v4572 = vunpack.c.l.b16 %v3360
    %v4573 = vunpack.c.h.b16 %v3360
    %v4574 = vunpack.c.l.b16 %v3361
    %v4575 = vunpack.c.h.b16 %v3361
    %v4576 = vunpack.c.l.b16 %v3362
    %v4577 = vunpack.c.l.b16 %v3363
    %v4578 = vunpack.c.h.b16 %v3363
    %v4579 = vunpack.c.l.b16 %v3364
    %v4580 = vunpack.c.h.b16 %v3364
    %v4581 = vunpack.c.l.b16 %v3365
    %v4582 = vunpack.c.h.b16 %v3365
    %v4583 = vunpack.c.l.b16 %v3366
    %v4584 = vunpack.c.l.b16 %v3367
    %v4585 = vunpack.c.h.b16 %v3367
    %v4586 = vunpack.c.l.b16 %v3368
    %v4587 = vunpack.c.h.b16 %v3368
    %v4588 = vunpack.c.l.b16 %v3369
    %v4589 = vunpack.c.h.b16 %v3369
    %v4590 = vunpack.c.l.b16 %v3370
    %v4591 = vunpack.c.l.b16 %v3371
    %v4592 = vunpack.c.h.b16 %v3371
    %v4593 = vunpack.c.l.b16 %v3372
    %v4594 = vunpack.c.h.b16 %v3372
    %v4595 = vunpack.c.l.b16 %v3373
    %v4596 = vunpack.c.h.b16 %v3373
    %v4597 = vunpack.c.l.b16 %v3374
    %v4598 = vunpack.c.l.b16 %v3375
    %v4599 = vunpack.c.h.b16 %v3375
    %v4600 = vunpack.c.l.b16 %v3376
    %v4601 = vunpack.c.h.b16 %v3376
    %v4602 = vunpack.c.l.b16 %v3377
    %v4603 = vunpack.c.h.b16 %v3377
    %v4604 = vunpack.c.l.b16 %v3378
    %v4605 = vunpack.c.l.b16 %v3379
    %v4606 = vunpack.c.h.b16 %v3379
    %v4607 = vunpack.c.l.b16 %v3380
    %v4608 = vunpack.c.h.b16 %v3380
    %v4609 = vunpack.c.l.b16 %v3381
    %v4610 = vunpack.c.h.b16 %v3381
    %v4611 = vunpack.c.l.b16 %v3382
    %v4612 = vunpack.c.l.b16 %v3383
    %v4613 = vunpack.c.h.b16 %v3383
    %v4614 = vunpack.c.l.b16 %v3384
    %v4615 = vunpack.c.h.b16 %v3384
    %v4616 = vunpack.c.l.b16 %v3385
    %v4617 = vunpack.c.h.b16 %v3385
    %v4618 = vunpack.c.l.b16 %v3386
    %v4619 = vunpack.c.l.b16 %v3387
    %v4620 = vunpack.c.h.b16 %v3387
    %v4621 = vunpack.c.l.b16 %v3388
    %v4622 = vunpack.c.h.b16 %v3388
    %v4623 = vunpack.c.l.b16 %v3389
    %v4624 = vunpack.c.h.b16 %v3389
    %v4625 = vunpack.c.l.b16 %v3390
    %v4626 = vunpack.c.l.b16 %v3391
    %v4627 = vunpack.c.h.b16 %v3391
    %v4628 = vunpack.c.l.b16 %v3392
    %v4629 = vunpack.c.h.b16 %v3392
    %v4630 = vunpack.c.l.b16 %v3393
    %v4631 = vunpack.c.h.b16 %v3393
    %v4632 = vunpack.c.l.b16 %v3394
    %v4633 = vunpack.c.l.b16 %v3395
    %v4634 = vunpack.c.h.b16 %v3395
    %v4635 = vunpack.c.l.b16 %v3396
    %v4636 = vunpack.c.h.b16 %v3396
    %v4637 = vunpack.c.l.b16 %v3397
    %v4638 = vunpack.c.h.b16 %v3397
    %v4639 = vunpack.c.l.b16 %v3398
    %v4640 = vunpack.c.l.b16 %v3399
    %v4641 = vunpack.c.h.b16 %v3399
    %v4642 = vunpack.c.l.b16 %v3400
    %v4643 = vunpack.c.h.b16 %v3400
    %v4644 = vunpack.c.l.b16 %v3401
    %v4645 = vunpack.c.h.b16 %v3401
    %v4646 = vunpack.c.l.b16 %v3402
    %v4647 = vunpack.c.l.b16 %v3403
    %v4648 = vunpack.c.h.b16 %v3403
    %v4649 = vunpack.c.l.b16 %v3404
    %v4650 = vunpack.c.h.b16 %v3404
    %v4651 = vunpack.c.l.b16 %v3405
    %v4652 = vunpack.c.h.b16 %v3405
    %v4653 = vunpack.c.l.b16 %v3406
    %v4654 = vunpack.c.l.b16 %v3407
    %v4655 = vunpack.c.h.b16 %v3407
    %v4656 = vunpack.c.l.b16 %v3408
    %v4657 = vunpack.c.h.b16 %v3408
    %v4658 = vunpack.c.l.b16 %v3409
    %v4659 = vunpack.c.h.b16 %v3409
    %v4660 = vunpack.c.l.b16 %v3410
    %v4661 = vunpack.c.l.b16 %v3411
    %v4662 = vunpack.c.h.b16 %v3411
    %v4663 = vunpack.c.l.b16 %v3412
    %v4664 = vunpack.c.h.b16 %v3412
    %v4665 = vunpack.c.l.b16 %v3413
    %v4666 = vunpack.c.h.b16 %v3413
    %v4667 = vunpack.c.l.b16 %v3414
    %v4668 = vunpack.c.l.b16 %v3415
    %v4669 = vunpack.c.h.b16 %v3415
    %v4670 = vunpack.c.l.b16 %v3416
    %v4671 = vunpack.c.h.b16 %v3416
    %v4672 = vunpack.c.l.b16 %v3417
    %v4673 = vunpack.c.h.b16 %v3417
    %v4674 = vunpack.c.l.b16 %v3418
    %v4675 = vunpack.c.l.b16 %v3419
    %v4676 = vunpack.c.h.b16 %v3419
    %v4677 = vunpack.c.l.b16 %v3420
    %v4678 = vunpack.c.h.b16 %v3420
    %v4679 = vunpack.c.l.b16 %v3421
    %v4680 = vunpack.c.h.b16 %v3421
    %v4681 = vunpack.c.l.b16 %v3422
    %v4682 = vunpack.c.l.b16 %v3423
    %v4683 = vunpack.c.h.b16 %v3423
    %v4684 = vunpack.c.l.b16 %v3424
    %v4685 = vunpack.c.h.b16 %v3424
    %v4686 = vunpack.c.l.b16 %v3425
    %v4687 = vunpack.c.h.b16 %v3425
    %v4688 = vunpack.c.l.b16 %v3426
    %v4689 = vunpack.c.l.b16 %v3427
    %v4690 = vunpack.c.h.b16 %v3427
    %v4691 = vunpack.c.l.b16 %v3428
    %v4692 = vunpack.c.h.b16 %v3428
    %v4693 = vunpack.c.l.b16 %v3429
    %v4694 = vunpack.c.h.b16 %v3429
    %v4695 = vunpack.c.l.b16 %v3430
    %v4696 = vunpack.c.l.b16 %v3431
    %v4697 = vunpack.c.h.b16 %v3431
    %v4698 = vunpack.c.l.b16 %v3432
    %v4699 = vunpack.c.h.b16 %v3432
    %v4700 = vunpack.c.l.b16 %v3433
    %v4701 = vunpack.c.h.b16 %v3433
    %v4702 = vunpack.c.l.b16 %v3434
    %v4703 = vunpack.c.l.b16 %v3435
    %v4704 = vunpack.c.h.b16 %v3435
    %v4705 = vunpack.c.l.b16 %v3436
    %v4706 = vunpack.c.h.b16 %v3436
    %v4707 = vunpack.c.l.b16 %v3437
    %v4708 = vunpack.c.h.b16 %v3437
    %v4709 = vunpack.c.l.b16 %v3438
    %v4710 = vunpack.c.l.b16 %v3439
    %v4711 = vunpack.c.h.b16 %v3439
    %v4712 = vunpack.c.l.b16 %v3440
    %v4713 = vunpack.c.h.b16 %v3440
    %v4714 = vunpack.c.l.b16 %v3441
    %v4715 = vunpack.c.h.b16 %v3441
    %v4716 = vunpack.c.l.b16 %v3442
    %v4717 = vunpack.c.l.b16 %v3443
    %v4718 = vunpack.c.h.b16 %v3443
    %v4719 = vunpack.c.l.b16 %v3444
    %v4720 = vunpack.c.h.b16 %v3444
    %v4721 = vunpack.c.l.b16 %v3445
    %v4722 = vunpack.c.h.b16 %v3445
    %v4723 = vunpack.c.l.b16 %v3446
    %v4724 = vunpack.c.l.b16 %v3447
    %v4725 = vunpack.c.h.b16 %v3447
    %v4726 = vunpack.c.l.b16 %v3448
    %v4727 = vunpack.c.h.b16 %v3448
    %v4728 = vunpack.c.l.b16 %v3449
    %v4729 = vunpack.c.h.b16 %v3449
    %v4730 = vunpack.c.l.b16 %v3450
    %v4731 = vunpack.c.l.b16 %v3451
    %v4732 = vunpack.c.h.b16 %v3451
    %v4733 = vunpack.c.l.b16 %v3452
    %v4734 = vunpack.c.h.b16 %v3452
    %v4735 = vunpack.c.l.b16 %v3453
    %v4736 = vunpack.c.h.b16 %v3453
    %v4737 = vunpack.c.l.b16 %v3454
    %v4738 = vunpack.c.l.b16 %v3455
    %v4739 = vunpack.c.h.b16 %v3455
    %v4740 = vunpack.c.l.b16 %v3456
    %v4741 = vunpack.c.h.b16 %v3456
    %v4742 = vunpack.c.l.b16 %v3457
    %v4743 = vunpack.c.h.b16 %v3457
    %v4744 = vunpack.c.l.b16 %v3458
    %v4745 = vunpack.c.l.b16 %v3459
    %v4746 = vunpack.c.h.b16 %v3459
    %v4747 = vunpack.c.l.b16 %v3460
    %v4748 = vunpack.c.h.b16 %v3460
    %v4749 = vunpack.c.l.b16 %v3461
    %v4750 = vunpack.c.h.b16 %v3461
    %v4751 = vunpack.c.l.b16 %v3462
    %v4752 = vunpack.c.l.b16 %v3463
    %v4753 = vunpack.c.h.b16 %v3463
    %v4754 = vunpack.c.l.b16 %v3464
    %v4755 = vunpack.c.h.b16 %v3464
    %v4756 = vunpack.c.l.b16 %v3465
    %v4757 = vunpack.c.h.b16 %v3465
    %v4758 = vunpack.c.l.b16 %v3466
    %v4759 = vunpack.c.l.b16 %v3467
    %v4760 = vunpack.c.h.b16 %v3467
    %v4761 = vunpack.c.l.b16 %v3468
    %v4762 = vunpack.c.h.b16 %v3468
    %v4763 = vunpack.c.l.b16 %v3469
    %v4764 = vunpack.c.h.b16 %v3469
    %v4765 = vunpack.c.l.b16 %v3470
    %v4766 = vunpack.c.l.b16 %v3471
    %v4767 = vunpack.c.h.b16 %v3471
    %v4768 = vunpack.c.l.b16 %v3472
    %v4769 = vunpack.c.h.b16 %v3472
    %v4770 = vunpack.c.l.b16 %v3473
    %v4771 = vunpack.c.h.b16 %v3473
    %v4772 = vunpack.c.l.b16 %v3474
    %v4773 = vunpack.c.l.b16 %v3475
    %v4774 = vunpack.c.h.b16 %v3475
    %v4775 = vunpack.c.l.b16 %v3476
    %v4776 = vunpack.c.h.b16 %v3476
    %v4777 = vunpack.c.l.b16 %v3477
    %v4778 = vunpack.c.h.b16 %v3477
    %v4779 = vunpack.c.l.b16 %v3478
    %v4780 = vunpack.c.l.b16 %v3479
    %v4781 = vunpack.c.h.b16 %v3479
    %v4782 = vunpack.c.l.b16 %v3480
    %v4783 = vunpack.c.h.b16 %v3480
    %v4784 = vunpack.c.l.b16 %v3481
    %v4785 = vunpack.c.h.b16 %v3481
    %v4786 = vunpack.c.l.b16 %v3482
    %v4787 = vunpack.c.l.b16 %v3483
    %v4788 = vunpack.c.h.b16 %v3483
    %v4789 = vunpack.c.l.b16 %v3484
    %v4790 = vunpack.c.h.b16 %v3484
    %v4791 = vunpack.c.l.b16 %v3485
    %v4792 = vunpack.c.h.b16 %v3485
    %v4793 = vunpack.c.l.b16 %v3486
    %v4794 = vunpack.c.l.b16 %v3487
    %v4795 = vunpack.c.h.b16 %v3487
    %v4796 = vunpack.c.l.b16 %v3488
    %v4797 = vunpack.c.h.b16 %v3488
    %v4798 = vunpack.c.l.b16 %v3489
    %v4799 = vunpack.c.h.b16 %v3489
    %v4800 = vunpack.c.l.b16 %v3490
    %v4801 = vunpack.c.l.b16 %v3491
    %v4802 = vunpack.c.h.b16 %v3491
    %v4803 = vunpack.c.l.b16 %v3492
    %v4804 = vunpack.c.h.b16 %v3492
    %v4805 = vunpack.c.l.b16 %v3493
    %v4806 = vunpack.c.h.b16 %v3493
    %v4807 = vunpack.c.l.b16 %v3494
    %v4808 = vunpack.c.l.b16 %v3495
    %v4809 = vunpack.c.h.b16 %v3495
    %v4810 = vunpack.c.l.b16 %v3496
    %v4811 = vunpack.c.h.b16 %v3496
    %v4812 = vunpack.c.l.b16 %v3497
    %v4813 = vunpack.c.h.b16 %v3497
    %v4814 = vunpack.c.l.b16 %v3498
    %v4815 = vunpack.c.l.b16 %v3499
    %v4816 = vunpack.c.h.b16 %v3499
    %v4817 = vunpack.c.l.b16 %v3500
    %v4818 = vunpack.c.h.b16 %v3500
    %v4819 = vunpack.c.l.b16 %v3501
    %v4820 = vunpack.c.h.b16 %v3501
    %v4821 = vunpack.c.l.b16 %v3502
    %v4822 = vunpack.c.l.b16 %v3503
    %v4823 = vunpack.c.h.b16 %v3503
    %v4824 = vunpack.c.l.b16 %v3504
    %v4825 = vunpack.c.h.b16 %v3504
    %v4826 = vunpack.c.l.b16 %v3505
    %v4827 = vunpack.c.h.b16 %v3505
    %v4828 = vunpack.c.l.b16 %v3506
    %v4829 = vunpack.c.l.b16 %v3507
    %v4830 = vunpack.c.h.b16 %v3507
    %v4831 = vunpack.c.l.b16 %v3508
    %v4832 = vunpack.c.h.b16 %v3508
    %v4833 = vunpack.c.l.b16 %v3509
    %v4834 = vunpack.c.h.b16 %v3509
    %v4835 = vunpack.c.l.b16 %v3510
    %v4836 = vunpack.c.l.b16 %v3511
    %v4837 = vunpack.c.h.b16 %v3511
    %v4838 = vunpack.c.l.b16 %v3512
    %v4839 = vunpack.c.h.b16 %v3512
    %v4840 = vunpack.c.l.b16 %v3513
    %v4841 = vunpack.c.h.b16 %v3513
    %v4842 = vunpack.c.l.b16 %v3514
    %v4843 = vunpack.c.l.b16 %v3515
    %v4844 = vunpack.c.h.b16 %v3515
    %v4845 = vunpack.c.l.b16 %v3516
    %v4846 = vunpack.c.h.b16 %v3516
    %v4847 = vunpack.c.l.b16 %v3517
    %v4848 = vunpack.c.h.b16 %v3517
    %v4849 = vunpack.c.l.b16 %v3518
    %v4850 = vunpack.c.l.b16 %v3519
    %v4851 = vunpack.c.h.b16 %v3519
    %v4852 = vunpack.c.l.b16 %v3520
    %v4853 = vunpack.c.h.b16 %v3520
    %v4854 = vunpack.c.l.b16 %v3521
    %v4855 = vunpack.c.h.b16 %v3521
    %v4856 = vunpack.c.l.b16 %v3522
    %v4857 = vunpack.c.l.b16 %v3523
    %v4858 = vunpack.c.h.b16 %v3523
    %v4859 = vunpack.c.l.b16 %v3524
    %v4860 = vunpack.c.h.b16 %v3524
    %v4861 = vunpack.c.l.b16 %v3525
    %v4862 = vunpack.c.h.b16 %v3525
    %v4863 = vunpack.c.l.b16 %v3526
    %v4864 = vunpack.c.l.b16 %v3527
    %v4865 = vunpack.c.h.b16 %v3527
    %v4866 = vunpack.c.l.b16 %v3528
    %v4867 = vunpack.c.h.b16 %v3528
    %v4868 = vunpack.c.l.b16 %v3529
    %v4869 = vunpack.c.h.b16 %v3529
    %v4870 = vunpack.c.l.b16 %v3530
    %v4871 = vunpack.c.l.b16 %v3531
    %v4872 = vunpack.c.h.b16 %v3531
    %v4873 = vunpack.c.l.b16 %v3532
    %v4874 = vunpack.c.h.b16 %v3532
    %v4875 = vunpack.c.l.b16 %v3533
    %v4876 = vunpack.c.h.b16 %v3533
    %v4877 = vunpack.c.l.b16 %v3534
    %v4878 = vunpack.c.l.b16 %v3535
    %v4879 = vunpack.c.h.b16 %v3535
    %v4880 = vunpack.c.l.b16 %v3536
    %v4881 = vunpack.c.h.b16 %v3536
    %v4882 = vunpack.c.l.b16 %v3537
    %v4883 = vunpack.c.h.b16 %v3537
    %v4884 = vunpack.c.l.b16 %v3538
    %v4885 = vunpack.c.l.b16 %v3539
    %v4886 = vunpack.c.h.b16 %v3539
    %v4887 = vunpack.c.l.b16 %v3540
    %v4888 = vunpack.c.h.b16 %v3540
    %v4889 = vunpack.c.l.b16 %v3541
    %v4890 = vunpack.c.h.b16 %v3541
    %v4891 = vunpack.c.l.b16 %v3542
    %v4892 = vunpack.c.l.b16 %v3543
    %v4893 = vunpack.c.h.b16 %v3543
    %v4894 = vunpack.c.l.b16 %v3544
    %v4895 = vunpack.c.h.b16 %v3544
    %v4896 = vunpack.c.l.b16 %v3545
    %v4897 = vunpack.c.h.b16 %v3545
    %v4898 = vunpack.c.l.b16 %v3546
    %v4899 = vunpack.c.l.b16 %v3547
    %v4900 = vunpack.c.h.b16 %v3547
    %v4901 = vunpack.c.l.b16 %v3548
    %v4902 = vunpack.c.h.b16 %v3548
    %v4903 = vunpack.c.l.b16 %v3549
    %v4904 = vunpack.c.h.b16 %v3549
    %v4905 = vunpack.c.l.b16 %v3550
    %v4906 = vunpack.c.l.b16 %v3551
    %v4907 = vunpack.c.h.b16 %v3551
    %v4908 = vunpack.c.l.b16 %v3552
    %v4909 = vunpack.c.h.b16 %v3552
    %v4910 = vunpack.c.l.b16 %v3553
    %v4911 = vunpack.c.h.b16 %v3553
    %v4912 = vunpack.c.l.b16 %v3554
    %v4913 = vunpack.c.l.b16 %v3555
    %v4914 = vunpack.c.h.b16 %v3555
    %v4915 = vunpack.c.l.b16 %v3556
    %v4916 = vunpack.c.h.b16 %v3556
    %v4917 = vunpack.c.l.b16 %v3557
    %v4918 = vunpack.c.h.b16 %v3557
    %v4919 = vunpack.c.l.b16 %v3558
    %v4920 = vunpack.c.l.b16 %v3559
    %v4921 = vunpack.c.h.b16 %v3559
    %v4922 = vunpack.c.l.b16 %v3560
    %v4923 = vunpack.c.h.b16 %v3560
    %v4924 = vunpack.c.l.b16 %v3561
    %v4925 = vunpack.c.h.b16 %v3561
    %v4926 = vunpack.c.l.b16 %v3562
    %v4927 = vunpack.c.l.b16 %v3563
    %v4928 = vunpack.c.h.b16 %v3563
    %v4929 = vunpack.c.l.b16 %v3564
    %v4930 = vunpack.c.h.b16 %v3564
    %v4931 = vunpack.c.l.b16 %v3565
    %v4932 = vunpack.c.h.b16 %v3565
    %v4933 = vunpack.c.l.b16 %v3566
    %v4934 = vunpack.c.l.b16 %v3567
    %v4935 = vunpack.c.h.b16 %v3567
    %v4936 = vunpack.c.l.b16 %v3568
    %v4937 = vunpack.c.h.b16 %v3568
    %v4938 = vunpack.c.l.b16 %v3569
    %v4939 = vunpack.c.h.b16 %v3569
    %v4940 = vunpack.c.l.b16 %v3570
    %v4941 = vunpack.c.l.b16 %v3571
    %v4942 = vunpack.c.h.b16 %v3571
    %v4943 = vunpack.c.l.b16 %v3572
    %v4944 = vunpack.c.h.b16 %v3572
    %v4945 = vunpack.c.l.b16 %v3573
    %v4946 = vunpack.c.h.b16 %v3573
    %v4947 = vunpack.c.l.b16 %v3574
    %v4948 = vunpack.c.l.b16 %v3575
    %v4949 = vunpack.c.h.b16 %v3575
    %v4950 = vunpack.c.l.b16 %v3576
    %v4951 = vunpack.c.h.b16 %v3576
    %v4952 = vunpack.c.l.b16 %v3577
    %v4953 = vunpack.c.h.b16 %v3577
    %v4954 = vunpack.c.l.b16 %v3578
    %v4955 = vunpack.c.l.b16 %v3579
    %v4956 = vunpack.c.h.b16 %v3579
    %v4957 = vunpack.c.l.b16 %v3580
    %v4958 = vunpack.c.h.b16 %v3580
    %v4959 = vunpack.c.l.b16 %v3581
    %v4960 = vunpack.c.h.b16 %v3581
    %v4961 = vunpack.c.l.b16 %v3582
    %v4962 = vunpack.c.l.b16 %v3583
    %v4963 = vunpack.c.h.b16 %v3583
    %v4964 = vunpack.c.l.b16 %v3584
    %v4965 = vunpack.c.h.b16 %v3584
    %v4966 = vunpack.c.l.b16 %v3585
    %v4967 = vunpack.c.h.b16 %v3585
    %v4968 = vunpack.c.l.b16 %v3586
    %v4969 = vunpack.c.l.b16 %v3587
    %v4970 = vunpack.c.h.b16 %v3587
    %v4971 = vunpack.c.l.b16 %v3588
    %v4972 = vunpack.c.h.b16 %v3588
    %v4973 = vunpack.c.l.b16 %v3589
    %v4974 = vunpack.c.h.b16 %v3589
    %v4975 = vunpack.c.l.b16 %v3590
    %v4976 = vunpack.c.l.b16 %v3591
    %v4977 = vunpack.c.h.b16 %v3591
    %v4978 = vunpack.c.l.b16 %v3592
    %v4979 = vunpack.c.h.b16 %v3592
    %v4980 = vunpack.c.l.b16 %v3593
    %v4981 = vunpack.c.h.b16 %v3593
    %v4982 = vunpack.c.l.b16 %v3594
    %v4983 = vunpack.c.l.b16 %v3595
    %v4984 = vunpack.c.h.b16 %v3595
    %v4985 = vunpack.c.l.b16 %v3596
    %v4986 = vunpack.c.h.b16 %v3596
    %v4987 = vunpack.c.l.b16 %v3597
    %v4988 = vunpack.c.h.b16 %v3597
    %v4989 = vunpack.c.l.b16 %v3598
    %v4990 = vunpack.c.l.b16 %v3599
    %v4991 = vunpack.c.h.b16 %v3599
    %v4992 = vunpack.c.l.b16 %v3600
    %v4993 = vunpack.c.h.b16 %v3600
    %v4994 = vunpack.c.l.b16 %v3601
    %v4995 = vunpack.c.h.b16 %v3601
    %v4996 = vunpack.c.l.b16 %v3602
    %v4997 = vunpack.c.l.b16 %v3603
    %v4998 = vunpack.c.h.b16 %v3603
    %v4999 = vunpack.c.l.b16 %v3604
    %v5000 = vunpack.c.h.b16 %v3604
    %v5001 = vunpack.c.l.b16 %v3605
    %v5002 = vunpack.c.h.b16 %v3605
    %v5003 = vunpack.c.l.b16 %v3606
    %v5004 = vunpack.c.l.b16 %v3607
    %v5005 = vunpack.c.h.b16 %v3607
    %v5006 = vunpack.c.l.b16 %v3608
    %v5007 = vunpack.c.h.b16 %v3608
    %v5008 = vunpack.c.l.b16 %v3609
    %v5009 = vunpack.c.h.b16 %v3609
    %v5010 = vunpack.c.l.b16 %v3610
    %v5011 = vunpack.c.l.b16 %v3611
    %v5012 = vunpack.c.h.b16 %v3611
    %v5013 = vunpack.c.l.b16 %v3612
    %v5014 = vunpack.c.h.b16 %v3612
    %v5015 = vunpack.c.l.b16 %v3613
    %v5016 = vunpack.c.h.b16 %v3613
    %v5017 = vunpack.c.l.b16 %v3614
    %v5018 = vunpack.c.l.b16 %v3615
    %v5019 = vunpack.c.h.b16 %v3615
    %v5020 = vunpack.c.l.b16 %v3616
    %v5021 = vunpack.c.h.b16 %v3616
    %v5022 = vunpack.c.l.b16 %v3617
    %v5023 = vunpack.c.h.b16 %v3617
    %v5024 = vunpack.c.l.b16 %v3618
    %v5025 = vunpack.c.l.b16 %v3619
    %v5026 = vunpack.c.h.b16 %v3619
    %v5027 = vunpack.c.l.b16 %v3620
    %v5028 = vunpack.c.h.b16 %v3620
    %v5029 = vunpack.c.l.b16 %v3621
    %v5030 = vunpack.c.h.b16 %v3621
    %v5031 = vunpack.c.l.b16 %v3622
    %v5032 = vunpack.c.l.b16 %v3623
    %v5033 = vunpack.c.h.b16 %v3623
    %v5034 = vunpack.c.l.b16 %v3624
    %v5035 = vunpack.c.h.b16 %v3624
    %v5036 = vunpack.c.l.b16 %v3625
    %v5037 = vunpack.c.h.b16 %v3625
    %v5038 = vunpack.c.l.b16 %v3626
    %v5039 = vunpack.c.l.b16 %v3627
    %v5040 = vunpack.c.h.b16 %v3627
    %v5041 = vunpack.c.l.b16 %v3628
    %v5042 = vunpack.c.h.b16 %v3628
    %v5043 = vunpack.c.l.b16 %v3629
    %v5044 = vunpack.c.h.b16 %v3629
    %v5045 = vunpack.c.l.b16 %v3630
    %v5046 = vunpack.c.l.b16 %v3631
    %v5047 = vunpack.c.h.b16 %v3631
    %v5048 = vunpack.c.l.b16 %v3632
    %v5049 = vunpack.c.h.b16 %v3632
    %v5050 = vunpack.c.l.b16 %v3633
    %v5051 = vunpack.c.h.b16 %v3633
    %v5052 = vunpack.c.l.b16 %v3634
    %v5053 = vunpack.c.l.b16 %v3635
    %v5054 = vunpack.c.h.b16 %v3635
    %v5055 = vunpack.c.l.b16 %v3636
    %v5056 = vunpack.c.h.b16 %v3636
    %v5057 = vunpack.c.l.b16 %v3637
    %v5058 = vunpack.c.h.b16 %v3637
    %v5059 = vunpack.c.l.b16 %v3638
    %v5060 = vunpack.c.l.b16 %v3639
    %v5061 = vunpack.c.h.b16 %v3639
    %v5062 = vunpack.c.l.b16 %v3640
    %v5063 = vunpack.c.h.b16 %v3640
    %v5064 = vunpack.c.l.b16 %v3641
    %v5065 = vunpack.c.h.b16 %v3641
    %v5066 = vunpack.c.l.b16 %v3642
    %v5067 = vunpack.c.l.b16 %v3643
    %v5068 = vunpack.c.h.b16 %v3643
    %v5069 = vunpack.c.l.b16 %v3644
    %v5070 = vunpack.c.h.b16 %v3644
    %v5071 = vunpack.c.l.b16 %v3645
    %v5072 = vunpack.c.h.b16 %v3645
    %v5073 = vunpack.c.l.b16 %v3646
    %v5074 = vunpack.c.l.b16 %v3647
    %v5075 = vunpack.c.h.b16 %v3647
    %v5076 = vunpack.c.l.b16 %v3648
    %v5077 = vunpack.c.h.b16 %v3648
    %v5078 = vunpack.c.l.b16 %v3649
    %v5079 = vunpack.c.h.b16 %v3649
    %v5080 = vunpack.c.l.b16 %v3650
    %v5081 = vunpack.c.l.b16 %v3651
    %v5082 = vunpack.c.h.b16 %v3651
    %v5083 = vunpack.c.l.b16 %v3652
    %v5084 = vunpack.c.h.b16 %v3652
    %v5085 = vunpack.c.l.b16 %v3653
    %v5086 = vunpack.c.h.b16 %v3653
    %v5087 = vunpack.c.l.b16 %v3654
    %v5088 = vunpack.c.l.b16 %v3655
    %v5089 = vunpack.c.h.b16 %v3655
    %v5090 = vunpack.c.l.b16 %v3656
    %v5091 = vunpack.c.h.b16 %v3656
    %v5092 = vunpack.c.l.b16 %v3657
    %v5093 = vunpack.c.h.b16 %v3657
    %v5094 = vunpack.c.l.b16 %v3658
    %v5095 = vunpack.c.l.b16 %v3659
    %v5096 = vunpack.c.h.b16 %v3659
    %v5097 = vunpack.c.l.b16 %v3660
    %v5098 = vunpack.c.h.b16 %v3660
    %v5099 = vunpack.c.l.b16 %v3661
    %v5100 = vunpack.c.h.b16 %v3661
    %v5101 = vunpack.c.l.b16 %v3662
    %v5102 = vunpack.c.l.b16 %v3663
    %v5103 = vunpack.c.h.b16 %v3663
    %v5104 = vunpack.c.l.b16 %v3664
    %v5105 = vunpack.c.h.b16 %v3664
    %v5106 = vunpack.c.l.b16 %v3665
    %v5107 = vunpack.c.h.b16 %v3665
    %v5108 = vunpack.c.l.b16 %v3666
    %v5109 = vunpack.c.l.b16 %v3667
    %v5110 = vunpack.c.h.b16 %v3667
    %v5111 = vunpack.c.l.b16 %v3668
    %v5112 = vunpack.c.h.b16 %v3668
    %v5113 = vunpack.c.l.b16 %v3669
    %v5114 = vunpack.c.h.b16 %v3669
    %v5115 = vunpack.c.l.b16 %v3670
    %v5116 = vpack.c.b16 %v4227, %v4220
    %v5117 = vpack.c.b16 %v4228, %v4221
    %v5118 = vpack.c.b16 %v4229, %v4222
    %v5119 = vpack.c.b16 %v4230, %v4223
    %v5120 = vpack.c.b16 %v4231, %v4224
    %v5121 = vpack.c.b16 %v4232, %v4225
    %v5122 = vpack.c.b16 %v4233, %v4226
    %v5123 = vpack.c.b16 %v4241, %v4234
    %v5124 = vpack.c.b16 %v4242, %v4235
    %v5125 = vpack.c.b16 %v4243, %v4236
    %v5126 = vpack.c.b16 %v4244, %v4237
    %v5127 = vpack.c.b16 %v4245, %v4238
    %v5128 = vpack.c.b16 %v4246, %v4239
    %v5129 = vpack.c.b16 %v4247, %v4240
    %v5130 = vpack.c.b16 %v4255, %v4248
    %v5131 = vpack.c.b16 %v4256, %v4249
    %v5132 = vpack.c.b16 %v4257, %v4250
    %v5133 = vpack.c.b16 %v4258, %v4251
    %v5134 = vpack.c.b16 %v4259, %v4252
    %v5135 = vpack.c.b16 %v4260, %v4253
    %v5136 = vpack.c.b16 %v4261, %v4254
    %v5137 = vpack.c.b16 %v4269, %v4262
    %v5138 = vpack.c.b16 %v4270, %v4263
    %v5139 = vpack.c.b16 %v4271, %v4264
    %v5140 = vpack.c.b16 %v4272, %v4265
    %v5141 = vpack.c.b16 %v4273, %v4266
    %v5142 = vpack.c.b16 %v4274, %v4267
    %v5143 = vpack.c.b16 %v4275, %v4268
    %v5144 = vpack.c.b16 %v4283, %v4276
    %v5145 = vpack.c.b16 %v4284, %v4277
    %v5146 = vpack.c.b16 %v4285, %v4278
    %v5147 = vpack.c.b16 %v4286, %v4279
    %v5148 = vpack.c.b16 %v4287, %v4280
    %v5149 = vpack.c.b16 %v4288, %v4281
    %v5150 = vpack.c.b16 %v4289, %v4282
    %v5151 = vpack.c.b16 %v4297, %v4290
    %v5152 = vpack.c.b16 %v4298, %v4291
    %v5153 = vpack.c.b16 %v4299, %v4292
    %v5154 = vpack.c.b16 %v4300, %v4293
    %v5155 = vpack.c.b16 %v4301, %v4294
    %v5156 = vpack.c.b16 %v4302, %v4295
    %v5157 = vpack.c.b16 %v4303, %v4296
    %v5158 = vpack.c.b16 %v4311, %v4304
    %v5159 = vpack.c.b16 %v4312, %v4305
    %v5160 = vpack.c.b16 %v4313, %v4306
    %v5161 = vpack.c.b16 %v4314, %v4307
    %v5162 = vpack.c.b16 %v4315, %v4308
    %v5163 = vpack.c.b16 %v4316, %v4309
    %v5164 = vpack.c.b16 %v4317, %v4310
    %v5165 = vpack.c.b16 %v4325, %v4318
    %v5166 = vpack.c.b16 %v4326, %v4319
    %v5167 = vpack.c.b16 %v4327, %v4320
    %v5168 = vpack.c.b16 %v4328, %v4321
    %v5169 = vpack.c.b16 %v4329, %v4322
    %v5170 = vpack.c.b16 %v4330, %v4323
    %v5171 = vpack.c.b16 %v4331, %v4324
    %v5172 = vpack.c.b16 %v4339, %v4332
    %v5173 = vpack.c.b16 %v4340, %v4333
    %v5174 = vpack.c.b16 %v4341, %v4334
    %v5175 = vpack.c.b16 %v4342, %v4335
    %v5176 = vpack.c.b16 %v4343, %v4336
    %v5177 = vpack.c.b16 %v4344, %v4337
    %v5178 = vpack.c.b16 %v4345, %v4338
    %v5179 = vpack.c.b16 %v4353, %v4346
    %v5180 = vpack.c.b16 %v4354, %v4347
    %v5181 = vpack.c.b16 %v4355, %v4348
    %v5182 = vpack.c.b16 %v4356, %v4349
    %v5183 = vpack.c.b16 %v4357, %v4350
    %v5184 = vpack.c.b16 %v4358, %v4351
    %v5185 = vpack.c.b16 %v4359, %v4352
    %v5186 = vpack.c.b16 %v4367, %v4360
    %v5187 = vpack.c.b16 %v4368, %v4361
    %v5188 = vpack.c.b16 %v4369, %v4362
    %v5189 = vpack.c.b16 %v4370, %v4363
    %v5190 = vpack.c.b16 %v4371, %v4364
    %v5191 = vpack.c.b16 %v4372, %v4365
    %v5192 = vpack.c.b16 %v4373, %v4366
    %v5193 = vpack.c.b16 %v4381, %v4374
    %v5194 = vpack.c.b16 %v4382, %v4375
    %v5195 = vpack.c.b16 %v4383, %v4376
    %v5196 = vpack.c.b16 %v4384, %v4377
    %v5197 = vpack.c.b16 %v4385, %v4378
    %v5198 = vpack.c.b16 %v4386, %v4379
    %v5199 = vpack.c.b16 %v4387, %v4380
    %v5200 = vpack.c.b16 %v4395, %v4388
    %v5201 = vpack.c.b16 %v4396, %v4389
    %v5202 = vpack.c.b16 %v4397, %v4390
    %v5203 = vpack.c.b16 %v4398, %v4391
    %v5204 = vpack.c.b16 %v4399, %v4392
    %v5205 = vpack.c.b16 %v4400, %v4393
    %v5206 = vpack.c.b16 %v4401, %v4394
    %v5207 = vpack.c.b16 %v4409, %v4402
    %v5208 = vpack.c.b16 %v4410, %v4403
    %v5209 = vpack.c.b16 %v4411, %v4404
    %v5210 = vpack.c.b16 %v4412, %v4405
    %v5211 = vpack.c.b16 %v4413, %v4406
    %v5212 = vpack.c.b16 %v4414, %v4407
    %v5213 = vpack.c.b16 %v4415, %v4408
    %v5214 = vpack.c.b16 %v4423, %v4416
    %v5215 = vpack.c.b16 %v4424, %v4417
    %v5216 = vpack.c.b16 %v4425, %v4418
    %v5217 = vpack.c.b16 %v4426, %v4419
    %v5218 = vpack.c.b16 %v4427, %v4420
    %v5219 = vpack.c.b16 %v4428, %v4421
    %v5220 = vpack.c.b16 %v4429, %v4422
    %v5221 = vpack.c.b16 %v4437, %v4430
    %v5222 = vpack.c.b16 %v4438, %v4431
    %v5223 = vpack.c.b16 %v4439, %v4432
    %v5224 = vpack.c.b16 %v4440, %v4433
    %v5225 = vpack.c.b16 %v4441, %v4434
    %v5226 = vpack.c.b16 %v4442, %v4435
    %v5227 = vpack.c.b16 %v4443, %v4436
    %v5228 = vpack.c.b16 %v4451, %v4444
    %v5229 = vpack.c.b16 %v4452, %v4445
    %v5230 = vpack.c.b16 %v4453, %v4446
    %v5231 = vpack.c.b16 %v4454, %v4447
    %v5232 = vpack.c.b16 %v4455, %v4448
    %v5233 = vpack.c.b16 %v4456, %v4449
    %v5234 = vpack.c.b16 %v4457, %v4450
    %v5235 = vpack.c.b16 %v4465, %v4458
    %v5236 = vpack.c.b16 %v4466, %v4459
    %v5237 = vpack.c.b16 %v4467, %v4460
    %v5238 = vpack.c.b16 %v4468, %v4461
    %v5239 = vpack.c.b16 %v4469, %v4462
    %v5240 = vpack.c.b16 %v4470, %v4463
    %v5241 = vpack.c.b16 %v4471, %v4464
    %v5242 = vpack.c.b16 %v4479, %v4472
    %v5243 = vpack.c.b16 %v4480, %v4473
    %v5244 = vpack.c.b16 %v4481, %v4474
    %v5245 = vpack.c.b16 %v4482, %v4475
    %v5246 = vpack.c.b16 %v4483, %v4476
    %v5247 = vpack.c.b16 %v4484, %v4477
    %v5248 = vpack.c.b16 %v4485, %v4478
    %v5249 = vpack.c.b16 %v4493, %v4486
    %v5250 = vpack.c.b16 %v4494, %v4487
    %v5251 = vpack.c.b16 %v4495, %v4488
    %v5252 = vpack.c.b16 %v4496, %v4489
    %v5253 = vpack.c.b16 %v4497, %v4490
    %v5254 = vpack.c.b16 %v4498, %v4491
    %v5255 = vpack.c.b16 %v4499, %v4492
    %v5256 = vpack.c.b16 %v4507, %v4500
    %v5257 = vpack.c.b16 %v4508, %v4501
    %v5258 = vpack.c.b16 %v4509, %v4502
    %v5259 = vpack.c.b16 %v4510, %v4503
    %v5260 = vpack.c.b16 %v4511, %v4504
    %v5261 = vpack.c.b16 %v4512, %v4505
    %v5262 = vpack.c.b16 %v4513, %v4506
    %v5263 = vpack.c.b16 %v4521, %v4514
    %v5264 = vpack.c.b16 %v4522, %v4515
    %v5265 = vpack.c.b16 %v4523, %v4516
    %v5266 = vpack.c.b16 %v4524, %v4517
    %v5267 = vpack.c.b16 %v4525, %v4518
    %v5268 = vpack.c.b16 %v4526, %v4519
    %v5269 = vpack.c.b16 %v4527, %v4520
    %v5270 = vpack.c.b16 %v4535, %v4528
    %v5271 = vpack.c.b16 %v4536, %v4529
    %v5272 = vpack.c.b16 %v4537, %v4530
    %v5273 = vpack.c.b16 %v4538, %v4531
    %v5274 = vpack.c.b16 %v4539, %v4532
    %v5275 = vpack.c.b16 %v4540, %v4533
    %v5276 = vpack.c.b16 %v4541, %v4534
    %v5277 = vpack.c.b16 %v4549, %v4542
    %v5278 = vpack.c.b16 %v4550, %v4543
    %v5279 = vpack.c.b16 %v4551, %v4544
    %v5280 = vpack.c.b16 %v4552, %v4545
    %v5281 = vpack.c.b16 %v4553, %v4546
    %v5282 = vpack.c.b16 %v4554, %v4547
    %v5283 = vpack.c.b16 %v4555, %v4548
    %v5284 = vpack.c.b16 %v4563, %v4556
    %v5285 = vpack.c.b16 %v4564, %v4557
    %v5286 = vpack.c.b16 %v4565, %v4558
    %v5287 = vpack.c.b16 %v4566, %v4559
    %v5288 = vpack.c.b16 %v4567, %v4560
    %v5289 = vpack.c.b16 %v4568, %v4561
    %v5290 = vpack.c.b16 %v4569, %v4562
    %v5291 = vpack.c.b16 %v4577, %v4570
    %v5292 = vpack.c.b16 %v4578, %v4571
    %v5293 = vpack.c.b16 %v4579, %v4572
    %v5294 = vpack.c.b16 %v4580, %v4573
    %v5295 = vpack.c.b16 %v4581, %v4574
    %v5296 = vpack.c.b16 %v4582, %v4575
    %v5297 = vpack.c.b16 %v4583, %v4576
    %v5298 = vpack.c.b16 %v4591, %v4584
    %v5299 = vpack.c.b16 %v4592, %v4585
    %v5300 = vpack.c.b16 %v4593, %v4586
    %v5301 = vpack.c.b16 %v4594, %v4587
    %v5302 = vpack.c.b16 %v4595, %v4588
    %v5303 = vpack.c.b16 %v4596, %v4589
    %v5304 = vpack.c.b16 %v4597, %v4590
    %v5305 = vpack.c.b16 %v4605, %v4598
    %v5306 = vpack.c.b16 %v4606, %v4599
    %v5307 = vpack.c.b16 %v4607, %v4600
    %v5308 = vpack.c.b16 %v4608, %v4601
    %v5309 = vpack.c.b16 %v4609, %v4602
    %v5310 = vpack.c.b16 %v4610, %v4603
    %v5311 = vpack.c.b16 %v4611, %v4604
    %v5312 = vpack.c.b16 %v4619, %v4612
    %v5313 = vpack.c.b16 %v4620, %v4613
    %v5314 = vpack.c.b16 %v4621, %v4614
    %v5315 = vpack.c.b16 %v4622, %v4615
    %v5316 = vpack.c.b16 %v4623, %v4616
    %v5317 = vpack.c.b16 %v4624, %v4617
    %v5318 = vpack.c.b16 %v4625, %v4618
    %v5319 = vpack.c.b16 %v4633, %v4626
    %v5320 = vpack.c.b16 %v4634, %v4627
    %v5321 = vpack.c.b16 %v4635, %v4628
    %v5322 = vpack.c.b16 %v4636, %v4629
    %v5323 = vpack.c.b16 %v4637, %v4630
    %v5324 = vpack.c.b16 %v4638, %v4631
    %v5325 = vpack.c.b16 %v4639, %v4632
    %v5326 = vpack.c.b16 %v4647, %v4640
    %v5327 = vpack.c.b16 %v4648, %v4641
    %v5328 = vpack.c.b16 %v4649, %v4642
    %v5329 = vpack.c.b16 %v4650, %v4643
    %v5330 = vpack.c.b16 %v4651, %v4644
    %v5331 = vpack.c.b16 %v4652, %v4645
    %v5332 = vpack.c.b16 %v4653, %v4646
    %v5333 = vpack.c.b16 %v4661, %v4654
    %v5334 = vpack.c.b16 %v4662, %v4655
    %v5335 = vpack.c.b16 %v4663, %v4656
    %v5336 = vpack.c.b16 %v4664, %v4657
    %v5337 = vpack.c.b16 %v4665, %v4658
    %v5338 = vpack.c.b16 %v4666, %v4659
    %v5339 = vpack.c.b16 %v4667, %v4660
    %v5340 = vpack.c.b16 %v4675, %v4668
    %v5341 = vpack.c.b16 %v4676, %v4669
    %v5342 = vpack.c.b16 %v4677, %v4670
    %v5343 = vpack.c.b16 %v4678, %v4671
    %v5344 = vpack.c.b16 %v4679, %v4672
    %v5345 = vpack.c.b16 %v4680, %v4673
    %v5346 = vpack.c.b16 %v4681, %v4674
    %v5347 = vpack.c.b16 %v4689, %v4682
    %v5348 = vpack.c.b16 %v4690, %v4683
    %v5349 = vpack.c.b16 %v4691, %v4684
    %v5350 = vpack.c.b16 %v4692, %v4685
    %v5351 = vpack.c.b16 %v4693, %v4686
    %v5352 = vpack.c.b16 %v4694, %v4687
    %v5353 = vpack.c.b16 %v4695, %v4688
    %v5354 = vpack.c.b16 %v4703, %v4696
    %v5355 = vpack.c.b16 %v4704, %v4697
    %v5356 = vpack.c.b16 %v4705, %v4698
    %v5357 = vpack.c.b16 %v4706, %v4699
    %v5358 = vpack.c.b16 %v4707, %v4700
    %v5359 = vpack.c.b16 %v4708, %v4701
    %v5360 = vpack.c.b16 %v4709, %v4702
    %v5361 = vpack.c.b16 %v4717, %v4710
    %v5362 = vpack.c.b16 %v4718, %v4711
    %v5363 = vpack.c.b16 %v4719, %v4712
    %v5364 = vpack.c.b16 %v4720, %v4713
    %v5365 = vpack.c.b16 %v4721, %v4714
    %v5366 = vpack.c.b16 %v4722, %v4715
    %v5367 = vpack.c.b16 %v4723, %v4716
    %v5368 = vpack.c.b16 %v4731, %v4724
    %v5369 = vpack.c.b16 %v4732, %v4725
    %v5370 = vpack.c.b16 %v4733, %v4726
    %v5371 = vpack.c.b16 %v4734, %v4727
    %v5372 = vpack.c.b16 %v4735, %v4728
    %v5373 = vpack.c.b16 %v4736, %v4729
    %v5374 = vpack.c.b16 %v4737, %v4730
    %v5375 = vpack.c.b16 %v4745, %v4738
    %v5376 = vpack.c.b16 %v4746, %v4739
    %v5377 = vpack.c.b16 %v4747, %v4740
    %v5378 = vpack.c.b16 %v4748, %v4741
    %v5379 = vpack.c.b16 %v4749, %v4742
    %v5380 = vpack.c.b16 %v4750, %v4743
    %v5381 = vpack.c.b16 %v4751, %v4744
    %v5382 = vpack.c.b16 %v4759, %v4752
    %v5383 = vpack.c.b16 %v4760, %v4753
    %v5384 = vpack.c.b16 %v4761, %v4754
    %v5385 = vpack.c.b16 %v4762, %v4755
    %v5386 = vpack.c.b16 %v4763, %v4756
    %v5387 = vpack.c.b16 %v4764, %v4757
    %v5388 = vpack.c.b16 %v4765, %v4758
    %v5389 = vpack.c.b16 %v4773, %v4766
    %v5390 = vpack.c.b16 %v4774, %v4767
    %v5391 = vpack.c.b16 %v4775, %v4768
    %v5392 = vpack.c.b16 %v4776, %v4769
    %v5393 = vpack.c.b16 %v4777, %v4770
    %v5394 = vpack.c.b16 %v4778, %v4771
    %v5395 = vpack.c.b16 %v4779, %v4772
    %v5396 = vpack.c.b16 %v4787, %v4780
    %v5397 = vpack.c.b16 %v4788, %v4781
    %v5398 = vpack.c.b16 %v4789, %v4782
    %v5399 = vpack.c.b16 %v4790, %v4783
    %v5400 = vpack.c.b16 %v4791, %v4784
    %v5401 = vpack.c.b16 %v4792, %v4785
    %v5402 = vpack.c.b16 %v4793, %v4786
    %v5403 = vpack.c.b16 %v4801, %v4794
    %v5404 = vpack.c.b16 %v4802, %v4795
    %v5405 = vpack.c.b16 %v4803, %v4796
    %v5406 = vpack.c.b16 %v4804, %v4797
    %v5407 = vpack.c.b16 %v4805, %v4798
    %v5408 = vpack.c.b16 %v4806, %v4799
    %v5409 = vpack.c.b16 %v4807, %v4800
    %v5410 = vpack.c.b16 %v4815, %v4808
    %v5411 = vpack.c.b16 %v4816, %v4809
    %v5412 = vpack.c.b16 %v4817, %v4810
    %v5413 = vpack.c.b16 %v4818, %v4811
    %v5414 = vpack.c.b16 %v4819, %v4812
    %v5415 = vpack.c.b16 %v4820, %v4813
    %v5416 = vpack.c.b16 %v4821, %v4814
    %v5417 = vpack.c.b16 %v4829, %v4822
    %v5418 = vpack.c.b16 %v4830, %v4823
    %v5419 = vpack.c.b16 %v4831, %v4824
    %v5420 = vpack.c.b16 %v4832, %v4825
    %v5421 = vpack.c.b16 %v4833, %v4826
    %v5422 = vpack.c.b16 %v4834, %v4827
    %v5423 = vpack.c.b16 %v4835, %v4828
    %v5424 = vpack.c.b16 %v4843, %v4836
    %v5425 = vpack.c.b16 %v4844, %v4837
    %v5426 = vpack.c.b16 %v4845, %v4838
    %v5427 = vpack.c.b16 %v4846, %v4839
    %v5428 = vpack.c.b16 %v4847, %v4840
    %v5429 = vpack.c.b16 %v4848, %v4841
    %v5430 = vpack.c.b16 %v4849, %v4842
    %v5431 = vpack.c.b16 %v4857, %v4850
    %v5432 = vpack.c.b16 %v4858, %v4851
    %v5433 = vpack.c.b16 %v4859, %v4852
    %v5434 = vpack.c.b16 %v4860, %v4853
    %v5435 = vpack.c.b16 %v4861, %v4854
    %v5436 = vpack.c.b16 %v4862, %v4855
    %v5437 = vpack.c.b16 %v4863, %v4856
    %v5438 = vpack.c.b16 %v4871, %v4864
    %v5439 = vpack.c.b16 %v4872, %v4865
    %v5440 = vpack.c.b16 %v4873, %v4866
    %v5441 = vpack.c.b16 %v4874, %v4867
    %v5442 = vpack.c.b16 %v4875, %v4868
    %v5443 = vpack.c.b16 %v4876, %v4869
    %v5444 = vpack.c.b16 %v4877, %v4870
    %v5445 = vpack.c.b16 %v4885, %v4878
    %v5446 = vpack.c.b16 %v4886, %v4879
    %v5447 = vpack.c.b16 %v4887, %v4880
    %v5448 = vpack.c.b16 %v4888, %v4881
    %v5449 = vpack.c.b16 %v4889, %v4882
    %v5450 = vpack.c.b16 %v4890, %v4883
    %v5451 = vpack.c.b16 %v4891, %v4884
    %v5452 = vpack.c.b16 %v4899, %v4892
    %v5453 = vpack.c.b16 %v4900, %v4893
    %v5454 = vpack.c.b16 %v4901, %v4894
    %v5455 = vpack.c.b16 %v4902, %v4895
    %v5456 = vpack.c.b16 %v4903, %v4896
    %v5457 = vpack.c.b16 %v4904, %v4897
    %v5458 = vpack.c.b16 %v4905, %v4898
    %v5459 = vpack.c.b16 %v4913, %v4906
    %v5460 = vpack.c.b16 %v4914, %v4907
    %v5461 = vpack.c.b16 %v4915, %v4908
    %v5462 = vpack.c.b16 %v4916, %v4909
    %v5463 = vpack.c.b16 %v4917, %v4910
    %v5464 = vpack.c.b16 %v4918, %v4911
    %v5465 = vpack.c.b16 %v4919, %v4912
    %v5466 = vpack.c.b16 %v4927, %v4920
    %v5467 = vpack.c.b16 %v4928, %v4921
    %v5468 = vpack.c.b16 %v4929, %v4922
    %v5469 = vpack.c.b16 %v4930, %v4923
    %v5470 = vpack.c.b16 %v4931, %v4924
    %v5471 = vpack.c.b16 %v4932, %v4925
    %v5472 = vpack.c.b16 %v4933, %v4926
    %v5473 = vpack.c.b16 %v4941, %v4934
    %v5474 = vpack.c.b16 %v4942, %v4935
    %v5475 = vpack.c.b16 %v4943, %v4936
    %v5476 = vpack.c.b16 %v4944, %v4937
    %v5477 = vpack.c.b16 %v4945, %v4938
    %v5478 = vpack.c.b16 %v4946, %v4939
    %v5479 = vpack.c.b16 %v4947, %v4940
    %v5480 = vpack.c.b16 %v4955, %v4948
    %v5481 = vpack.c.b16 %v4956, %v4949
    %v5482 = vpack.c.b16 %v4957, %v4950
    %v5483 = vpack.c.b16 %v4958, %v4951
    %v5484 = vpack.c.b16 %v4959, %v4952
    %v5485 = vpack.c.b16 %v4960, %v4953
    %v5486 = vpack.c.b16 %v4961, %v4954
    %v5487 = vpack.c.b16 %v4969, %v4962
    %v5488 = vpack.c.b16 %v4970, %v4963
    %v5489 = vpack.c.b16 %v4971, %v4964
    %v5490 = vpack.c.b16 %v4972, %v4965
    %v5491 = vpack.c.b16 %v4973, %v4966
    %v5492 = vpack.c.b16 %v4974, %v4967
    %v5493 = vpack.c.b16 %v4975, %v4968
    %v5494 = vpack.c.b16 %v4983, %v4976
    %v5495 = vpack.c.b16 %v4984, %v4977
    %v5496 = vpack.c.b16 %v4985, %v4978
    %v5497 = vpack.c.b16 %v4986, %v4979
    %v5498 = vpack.c.b16 %v4987, %v4980
    %v5499 = vpack.c.b16 %v4988, %v4981
    %v5500 = vpack.c.b16 %v4989, %v4982
    %v5501 = vpack.c.b16 %v4997, %v4990
    %v5502 = vpack.c.b16 %v4998, %v4991
    %v5503 = vpack.c.b16 %v4999, %v4992
    %v5504 = vpack.c.b16 %v5000, %v4993
    %v5505 = vpack.c.b16 %v5001, %v4994
    %v5506 = vpack.c.b16 %v5002, %v4995
    %v5507 = vpack.c.b16 %v5003, %v4996
    %v5508 = vpack.c.b16 %v5011, %v5004
    %v5509 = vpack.c.b16 %v5012, %v5005
    %v5510 = vpack.c.b16 %v5013, %v5006
    %v5511 = vpack.c.b16 %v5014, %v5007
    %v5512 = vpack.c.b16 %v5015, %v5008
    %v5513 = vpack.c.b16 %v5016, %v5009
    %v5514 = vpack.c.b16 %v5017, %v5010
    %v5515 = vpack.c.b16 %v5025, %v5018
    %v5516 = vpack.c.b16 %v5026, %v5019
    %v5517 = vpack.c.b16 %v5027, %v5020
    %v5518 = vpack.c.b16 %v5028, %v5021
    %v5519 = vpack.c.b16 %v5029, %v5022
    %v5520 = vpack.c.b16 %v5030, %v5023
    %v5521 = vpack.c.b16 %v5031, %v5024
    %v5522 = vpack.c.b16 %v5039, %v5032
    %v5523 = vpack.c.b16 %v5040, %v5033
    %v5524 = vpack.c.b16 %v5041, %v5034
    %v5525 = vpack.c.b16 %v5042, %v5035
    %v5526 = vpack.c.b16 %v5043, %v5036
    %v5527 = vpack.c.b16 %v5044, %v5037
    %v5528 = vpack.c.b16 %v5045, %v5038
    %v5529 = vpack.c.b16 %v5053, %v5046
    %v5530 = vpack.c.b16 %v5054, %v5047
    %v5531 = vpack.c.b16 %v5055, %v5048
    %v5532 = vpack.c.b16 %v5056, %v5049
    %v5533 = vpack.c.b16 %v5057, %v5050
    %v5534 = vpack.c.b16 %v5058, %v5051
    %v5535 = vpack.c.b16 %v5059, %v5052
    %v5536 = vpack.c.b16 %v5067, %v5060
    %v5537 = vpack.c.b16 %v5068, %v5061
    %v5538 = vpack.c.b16 %v5069, %v5062
    %v5539 = vpack.c.b16 %v5070, %v5063
    %v5540 = vpack.c.b16 %v5071, %v5064
    %v5541 = vpack.c.b16 %v5072, %v5065
    %v5542 = vpack.c.b16 %v5073, %v5066
    %v5543 = vpack.c.b16 %v5081, %v5074
    %v5544 = vpack.c.b16 %v5082, %v5075
    %v5545 = vpack.c.b16 %v5083, %v5076
    %v5546 = vpack.c.b16 %v5084, %v5077
    %v5547 = vpack.c.b16 %v5085, %v5078
    %v5548 = vpack.c.b16 %v5086, %v5079
    %v5549 = vpack.c.b16 %v5087, %v5080
    %v5550 = vpack.c.b16 %v5095, %v5088
    %v5551 = vpack.c.b16 %v5096, %v5089
    %v5552 = vpack.c.b16 %v5097, %v5090
    %v5553 = vpack.c.b16 %v5098, %v5091
    %v5554 = vpack.c.b16 %v5099, %v5092
    %v5555 = vpack.c.b16 %v5100, %v5093
    %v5556 = vpack.c.b16 %v5101, %v5094
    %v5557 = vpack.c.b16 %v5109, %v5102
    %v5558 = vpack.c.b16 %v5110, %v5103
    %v5559 = vpack.c.b16 %v5111, %v5104
    %v5560 = vpack.c.b16 %v5112, %v5105
    %v5561 = vpack.c.b16 %v5113, %v5106
    %v5562 = vpack.c.b16 %v5114, %v5107
    %v5563 = vpack.c.b16 %v5115, %v5108
    %6012 = vmatprep.subr.bf16.mxu0 %v5166
    %6013 = vmatpush1.bf16.msra.mxu0 %v5165
    %6014 = vmatprep.subr.bf16.mxu0 %v5159
    %6015 = vmatpush1.bf16.msra.mxu0 %v5158
    %6016 = vmatprep.subr.bf16.mxu0 %v5152
    %6017 = vmatpush1.bf16.msra.mxu0 %v5151
    %6018 = vmatprep.subr.bf16.mxu0 %v5145
    %6019 = vmatpush1.bf16.msra.mxu0 %v5144
    %6020 = vmatprep.subr.bf16.mxu0 %v5138
    %6021 = vmatpush1.bf16.msra.mxu0 %v5137
    %6022 = vmatprep.subr.bf16.mxu0 %v5131
    %6023 = vmatpush1.bf16.msra.mxu0 %v5130
    %6024 = vmatprep.subr.bf16.mxu0 %v5124
    %6025 = vmatpush1.bf16.msra.mxu0 %v5123
    %6026 = vmatprep.subr.bf16.mxu0 %v5117
    %6027 = vmatpush1.bf16.msra.mxu0 %v5116
    %6028 = vmatprep.subr.bf16.mxu0 %v5222
    %6029 = vmatpush2.bf16.msra.mxu0 %v5221
    %6030 = vmatprep.subr.bf16.mxu0 %v5215
    %6031 = vmatpush2.bf16.msra.mxu0 %v5214
    %6032 = vmatprep.subr.bf16.mxu0 %v5208
    %6033 = vmatpush2.bf16.msra.mxu0 %v5207
    %6034 = vmatprep.subr.bf16.mxu0 %v5201
    %6035 = vmatpush2.bf16.msra.mxu0 %v5200
    %6036 = vmatprep.subr.bf16.mxu0 %v5194
    %6037 = vmatpush2.bf16.msra.mxu0 %v5193
    %6038 = vmatprep.subr.bf16.mxu0 %v5187
    %6039 = vmatpush2.bf16.msra.mxu0 %v5186
    %6040 = vmatprep.subr.bf16.mxu0 %v5180
    %6041 = vmatpush2.bf16.msra.mxu0 %v5179
    %6042 = vmatprep.subr.bf16.mxu0 %v5173
    %6043 = vmatpush2.bf16.msra.mxu0 %v5172
    %6044 = vmatprep.mubr.bf16.mxu0 %v3152
    %6045 = vmatmul.mubr.bf16.gmra.mxu0 %v3151
    %v6046 = vpop.f32.mrf.mxu0
    %v6047 = vadd.f32 %v3676, %v6046
    %v6048 = vpop.f32.mrf.mxu0
    %v6049 = vadd.f32 %v3680, %v6048
    %v6050 = vpop.f32.mrf.mxu0
    %v6051 = vpop.f32.mrf.mxu0
    %6052 = vdwg.mxu0
    %6053 = vmatprep.subr.bf16.mxu0 %v5278
    %6054 = vmatpush1.bf16.msra.mxu0 %v5277
    %6055 = vmatprep.subr.bf16.mxu0 %v5271
    %6056 = vmatpush1.bf16.msra.mxu0 %v5270
    %6057 = vmatprep.subr.bf16.mxu0 %v5264
    %6058 = vmatpush1.bf16.msra.mxu0 %v5263
    %6059 = vmatprep.subr.bf16.mxu0 %v5257
    %6060 = vmatpush1.bf16.msra.mxu0 %v5256
    %6061 = vmatprep.subr.bf16.mxu0 %v5250
    %6062 = vmatpush1.bf16.msra.mxu0 %v5249
    %6063 = vmatprep.subr.bf16.mxu0 %v5243
    %6064 = vmatpush1.bf16.msra.mxu0 %v5242
    %6065 = vmatprep.subr.bf16.mxu0 %v5236
    %6066 = vmatpush1.bf16.msra.mxu0 %v5235
    %6067 = vmatprep.subr.bf16.mxu0 %v5229
    %6068 = vmatpush1.bf16.msra.mxu0 %v5228
    %6069 = vmatprep.subr.bf16.mxu0 %v5334
    %6070 = vmatpush2.bf16.msra.mxu0 %v5333
    %6071 = vmatprep.subr.bf16.mxu0 %v5327
    %6072 = vmatpush2.bf16.msra.mxu0 %v5326
    %6073 = vmatprep.subr.bf16.mxu0 %v5320
    %6074 = vmatpush2.bf16.msra.mxu0 %v5319
    %6075 = vmatprep.subr.bf16.mxu0 %v5313
    %6076 = vmatpush2.bf16.msra.mxu0 %v5312
    %6077 = vmatprep.subr.bf16.mxu0 %v5306
    %6078 = vmatpush2.bf16.msra.mxu0 %v5305
    %6079 = vmatprep.subr.bf16.mxu0 %v5299
    %6080 = vmatpush2.bf16.msra.mxu0 %v5298
    %6081 = vmatprep.subr.bf16.mxu0 %v5292
    %6082 = vmatpush2.bf16.msra.mxu0 %v5291
    %6083 = vmatprep.subr.bf16.mxu0 %v5285
    %6084 = vmatpush2.bf16.msra.mxu0 %v5284
    %6085 = vmatprep.mubr.bf16.mxu0 %v3154
    %6086 = vmatmul.mubr.bf16.gmra.mxu0 %v3153
    %v6087 = vpop.f32.mrf.mxu0
    %v6088 = vadd.f32 %v6047, %v6087
    %v6089 = vpop.f32.mrf.mxu0
    %v6090 = vadd.f32 %v6049, %v6089
    %v6091 = vpop.f32.mrf.mxu0
    %v6092 = vpop.f32.mrf.mxu0
    %6093 = vdwg.mxu0
    %6094 = vmatprep.subr.bf16.mxu0 %v5390
    %6095 = vmatpush1.bf16.msra.mxu0 %v5389
    %6096 = vmatprep.subr.bf16.mxu0 %v5383
    %6097 = vmatpush1.bf16.msra.mxu0 %v5382
    %6098 = vmatprep.subr.bf16.mxu0 %v5376
    %6099 = vmatpush1.bf16.msra.mxu0 %v5375
    %6100 = vmatprep.subr.bf16.mxu0 %v5369
    %6101 = vmatpush1.bf16.msra.mxu0 %v5368
    %6102 = vmatprep.subr.bf16.mxu0 %v5362
    %6103 = vmatpush1.bf16.msra.mxu0 %v5361
    %6104 = vmatprep.subr.bf16.mxu0 %v5355
    %6105 = vmatpush1.bf16.msra.mxu0 %v5354
    %6106 = vmatprep.subr.bf16.mxu0 %v5348
    %6107 = vmatpush1.bf16.msra.mxu0 %v5347
    %6108 = vmatprep.subr.bf16.mxu0 %v5341
    %6109 = vmatpush1.bf16.msra.mxu0 %v5340
    %6110 = vmatprep.subr.bf16.mxu0 %v5446
    %6111 = vmatpush2.bf16.msra.mxu0 %v5445
    %6112 = vmatprep.subr.bf16.mxu0 %v5439
    %6113 = vmatpush2.bf16.msra.mxu0 %v5438
    %6114 = vmatprep.subr.bf16.mxu0 %v5432
    %6115 = vmatpush2.bf16.msra.mxu0 %v5431
    %6116 = vmatprep.subr.bf16.mxu0 %v5425
    %6117 = vmatpush2.bf16.msra.mxu0 %v5424
    %6118 = vmatprep.subr.bf16.mxu0 %v5418
    %6119 = vmatpush2.bf16.msra.mxu0 %v5417
    %6120 = vmatprep.subr.bf16.mxu0 %v5411
    %6121 = vmatpush2.bf16.msra.mxu0 %v5410
    %6122 = vmatprep.subr.bf16.mxu0 %v5404
    %6123 = vmatpush2.bf16.msra.mxu0 %v5403
    %6124 = vmatprep.subr.bf16.mxu0 %v5397
    %6125 = vmatpush2.bf16.msra.mxu0 %v5396
    %6126 = vmatprep.mubr.bf16.mxu0 %v3156
    %6127 = vmatmul.mubr.bf16.gmra.mxu0 %v3155
    %v6128 = vpop.f32.mrf.mxu0
    %v6129 = vadd.f32 %v6088, %v6128
    %v6130 = vpop.f32.mrf.mxu0
    %v6131 = vadd.f32 %v6090, %v6130
    %v6132 = vpop.f32.mrf.mxu0
    %v6133 = vpop.f32.mrf.mxu0
    %6134 = vdwg.mxu0
    %6135 = vmatprep.subr.bf16.mxu0 %v5502
    %6136 = vmatpush1.bf16.msra.mxu0 %v5501
    %6137 = vmatprep.subr.bf16.mxu0 %v5495
    %6138 = vmatpush1.bf16.msra.mxu0 %v5494
    %6139 = vmatprep.subr.bf16.mxu0 %v5488
    %6140 = vmatpush1.bf16.msra.mxu0 %v5487
    %6141 = vmatprep.subr.bf16.mxu0 %v5481
    %6142 = vmatpush1.bf16.msra.mxu0 %v5480
    %6143 = vmatprep.subr.bf16.mxu0 %v5474
    %6144 = vmatpush1.bf16.msra.mxu0 %v5473
    %6145 = vmatprep.subr.bf16.mxu0 %v5467
    %6146 = vmatpush1.bf16.msra.mxu0 %v5466
    %6147 = vmatprep.subr.bf16.mxu0 %v5460
    %6148 = vmatpush1.bf16.msra.mxu0 %v5459
    %6149 = vmatprep.subr.bf16.mxu0 %v5453
    %6150 = vmatpush1.bf16.msra.mxu0 %v5452
    %6151 = vmatprep.subr.bf16.mxu0 %v5558
    %6152 = vmatpush2.bf16.msra.mxu0 %v5557
    %6153 = vmatprep.subr.bf16.mxu0 %v5551
    %6154 = vmatpush2.bf16.msra.mxu0 %v5550
    %6155 = vmatprep.subr.bf16.mxu0 %v5544
    %6156 = vmatpush2.bf16.msra.mxu0 %v5543
    %6157 = vmatprep.subr.bf16.mxu0 %v5537
    %6158 = vmatpush2.bf16.msra.mxu0 %v5536
    %6159 = vmatprep.subr.bf16.mxu0 %v5530
    %6160 = vmatpush2.bf16.msra.mxu0 %v5529
    %6161 = vmatprep.subr.bf16.mxu0 %v5523
    %6162 = vmatpush2.bf16.msra.mxu0 %v5522
    %6163 = vmatprep.subr.bf16.mxu0 %v5516
    %6164 = vmatpush2.bf16.msra.mxu0 %v5515
    %6165 = vmatprep.subr.bf16.mxu0 %v5509
    %6166 = vmatpush2.bf16.msra.mxu0 %v5508
    %6167 = vmatprep.mubr.bf16.mxu0 %v3158
    %6168 = vmatmul.mubr.bf16.gmra.mxu0 %v3157
    %v6169 = vpop.f32.mrf.mxu0
    %v6170 = vadd.f32 %v6129, %v6169
    %v6171 = vpop.f32.mrf.mxu0
    %v6172 = vadd.f32 %v6131, %v6171
    %v6173 = vpop.f32.mrf.mxu0
    %v6174 = vpop.f32.mrf.mxu0
    %6175 = vdwg.mxu0
    %6176 = vmatprep.subr.bf16.mxu0 %v5168
    %6177 = vmatpush1.bf16.msra.mxu0 %v5167
    %6178 = vmatprep.subr.bf16.mxu0 %v5161
    %6179 = vmatpush1.bf16.msra.mxu0 %v5160
    %6180 = vmatprep.subr.bf16.mxu0 %v5154
    %6181 = vmatpush1.bf16.msra.mxu0 %v5153
    %6182 = vmatprep.subr.bf16.mxu0 %v5147
    %6183 = vmatpush1.bf16.msra.mxu0 %v5146
    %6184 = vmatprep.subr.bf16.mxu0 %v5140
    %6185 = vmatpush1.bf16.msra.mxu0 %v5139
    %6186 = vmatprep.subr.bf16.mxu0 %v5133
    %6187 = vmatpush1.bf16.msra.mxu0 %v5132
    %6188 = vmatprep.subr.bf16.mxu0 %v5126
    %6189 = vmatpush1.bf16.msra.mxu0 %v5125
    %6190 = vmatprep.subr.bf16.mxu0 %v5119
    %6191 = vmatpush1.bf16.msra.mxu0 %v5118
    %6192 = vmatprep.subr.bf16.mxu0 %v5224
    %6193 = vmatpush2.bf16.msra.mxu0 %v5223
    %6194 = vmatprep.subr.bf16.mxu0 %v5217
    %6195 = vmatpush2.bf16.msra.mxu0 %v5216
    %6196 = vmatprep.subr.bf16.mxu0 %v5210
    %6197 = vmatpush2.bf16.msra.mxu0 %v5209
    %6198 = vmatprep.subr.bf16.mxu0 %v5203
    %6199 = vmatpush2.bf16.msra.mxu0 %v5202
    %6200 = vmatprep.subr.bf16.mxu0 %v5196
    %6201 = vmatpush2.bf16.msra.mxu0 %v5195
    %6202 = vmatprep.subr.bf16.mxu0 %v5189
    %6203 = vmatpush2.bf16.msra.mxu0 %v5188
    %6204 = vmatprep.subr.bf16.mxu0 %v5182
    %6205 = vmatpush2.bf16.msra.mxu0 %v5181
    %6206 = vmatprep.subr.bf16.mxu0 %v5175
    %6207 = vmatpush2.bf16.msra.mxu0 %v5174
    %6208 = vmatprep.mubr.bf16.mxu0 %v3152
    %6209 = vmatmul.mubr.bf16.gmra.mxu0 %v3151
    %v6210 = vpop.f32.mrf.mxu0
    %v6211 = vadd.f32 %v3684, %v6210
    %v6212 = vpop.f32.mrf.mxu0
    %v6213 = vadd.f32 %v3688, %v6212
    %v6214 = vpop.f32.mrf.mxu0
    %v6215 = vpop.f32.mrf.mxu0
    %6216 = vdwg.mxu0
    %6217 = vmatprep.subr.bf16.mxu0 %v5280
    %6218 = vmatpush1.bf16.msra.mxu0 %v5279
    %6219 = vmatprep.subr.bf16.mxu0 %v5273
    %6220 = vmatpush1.bf16.msra.mxu0 %v5272
    %6221 = vmatprep.subr.bf16.mxu0 %v5266
    %6222 = vmatpush1.bf16.msra.mxu0 %v5265
    %6223 = vmatprep.subr.bf16.mxu0 %v5259
    %6224 = vmatpush1.bf16.msra.mxu0 %v5258
    %6225 = vmatprep.subr.bf16.mxu0 %v5252
    %6226 = vmatpush1.bf16.msra.mxu0 %v5251
    %6227 = vmatprep.subr.bf16.mxu0 %v5245
    %6228 = vmatpush1.bf16.msra.mxu0 %v5244
    %6229 = vmatprep.subr.bf16.mxu0 %v5238
    %6230 = vmatpush1.bf16.msra.mxu0 %v5237
    %6231 = vmatprep.subr.bf16.mxu0 %v5231
    %6232 = vmatpush1.bf16.msra.mxu0 %v5230
    %6233 = vmatprep.subr.bf16.mxu0 %v5336
    %6234 = vmatpush2.bf16.msra.mxu0 %v5335
    %6235 = vmatprep.subr.bf16.mxu0 %v5329
    %6236 = vmatpush2.bf16.msra.mxu0 %v5328
    %6237 = vmatprep.subr.bf16.mxu0 %v5322
    %6238 = vmatpush2.bf16.msra.mxu0 %v5321
    %6239 = vmatprep.subr.bf16.mxu0 %v5315
    %6240 = vmatpush2.bf16.msra.mxu0 %v5314
    %6241 = vmatprep.subr.bf16.mxu0 %v5308
    %6242 = vmatpush2.bf16.msra.mxu0 %v5307
    %6243 = vmatprep.subr.bf16.mxu0 %v5301
    %6244 = vmatpush2.bf16.msra.mxu0 %v5300
    %6245 = vmatprep.subr.bf16.mxu0 %v5294
    %6246 = vmatpush2.bf16.msra.mxu0 %v5293
    %6247 = vmatprep.subr.bf16.mxu0 %v5287
    %6248 = vmatpush2.bf16.msra.mxu0 %v5286
    %6249 = vmatprep.mubr.bf16.mxu0 %v3154
    %6250 = vmatmul.mubr.bf16.gmra.mxu0 %v3153
    %v6251 = vpop.f32.mrf.mxu0
    %v6252 = vadd.f32 %v6211, %v6251
    %v6253 = vpop.f32.mrf.mxu0
    %v6254 = vadd.f32 %v6213, %v6253
    %v6255 = vpop.f32.mrf.mxu0
    %v6256 = vpop.f32.mrf.mxu0
    %6257 = vdwg.mxu0
    %6258 = vmatprep.subr.bf16.mxu0 %v5392
    %6259 = vmatpush1.bf16.msra.mxu0 %v5391
    %6260 = vmatprep.subr.bf16.mxu0 %v5385
    %6261 = vmatpush1.bf16.msra.mxu0 %v5384
    %6262 = vmatprep.subr.bf16.mxu0 %v5378
    %6263 = vmatpush1.bf16.msra.mxu0 %v5377
    %6264 = vmatprep.subr.bf16.mxu0 %v5371
    %6265 = vmatpush1.bf16.msra.mxu0 %v5370
    %6266 = vmatprep.subr.bf16.mxu0 %v5364
    %6267 = vmatpush1.bf16.msra.mxu0 %v5363
    %6268 = vmatprep.subr.bf16.mxu0 %v5357
    %6269 = vmatpush1.bf16.msra.mxu0 %v5356
    %6270 = vmatprep.subr.bf16.mxu0 %v5350
    %6271 = vmatpush1.bf16.msra.mxu0 %v5349
    %6272 = vmatprep.subr.bf16.mxu0 %v5343
    %6273 = vmatpush1.bf16.msra.mxu0 %v5342
    %6274 = vmatprep.subr.bf16.mxu0 %v5448
    %6275 = vmatpush2.bf16.msra.mxu0 %v5447
    %6276 = vmatprep.subr.bf16.mxu0 %v5441
    %6277 = vmatpush2.bf16.msra.mxu0 %v5440
    %6278 = vmatprep.subr.bf16.mxu0 %v5434
    %6279 = vmatpush2.bf16.msra.mxu0 %v5433
    %6280 = vmatprep.subr.bf16.mxu0 %v5427
    %6281 = vmatpush2.bf16.msra.mxu0 %v5426
    %6282 = vmatprep.subr.bf16.mxu0 %v5420
    %6283 = vmatpush2.bf16.msra.mxu0 %v5419
    %6284 = vmatprep.subr.bf16.mxu0 %v5413
    %6285 = vmatpush2.bf16.msra.mxu0 %v5412
    %6286 = vmatprep.subr.bf16.mxu0 %v5406
    %6287 = vmatpush2.bf16.msra.mxu0 %v5405
    %6288 = vmatprep.subr.bf16.mxu0 %v5399
    %6289 = vmatpush2.bf16.msra.mxu0 %v5398
    %6290 = vmatprep.mubr.bf16.mxu0 %v3156
    %6291 = vmatmul.mubr.bf16.gmra.mxu0 %v3155
    %v6292 = vpop.f32.mrf.mxu0
    %v6293 = vadd.f32 %v6252, %v6292
    %v6294 = vpop.f32.mrf.mxu0
    %v6295 = vadd.f32 %v6254, %v6294
    %v6296 = vpop.f32.mrf.mxu0
    %v6297 = vpop.f32.mrf.mxu0
    %6298 = vdwg.mxu0
    %6299 = vmatprep.subr.bf16.mxu0 %v5504
    %6300 = vmatpush1.bf16.msra.mxu0 %v5503
    %6301 = vmatprep.subr.bf16.mxu0 %v5497
    %6302 = vmatpush1.bf16.msra.mxu0 %v5496
    %6303 = vmatprep.subr.bf16.mxu0 %v5490
    %6304 = vmatpush1.bf16.msra.mxu0 %v5489
    %6305 = vmatprep.subr.bf16.mxu0 %v5483
    %6306 = vmatpush1.bf16.msra.mxu0 %v5482
    %6307 = vmatprep.subr.bf16.mxu0 %v5476
    %6308 = vmatpush1.bf16.msra.mxu0 %v5475
    %6309 = vmatprep.subr.bf16.mxu0 %v5469
    %6310 = vmatpush1.bf16.msra.mxu0 %v5468
    %6311 = vmatprep.subr.bf16.mxu0 %v5462
    %6312 = vmatpush1.bf16.msra.mxu0 %v5461
    %6313 = vmatprep.subr.bf16.mxu0 %v5455
    %6314 = vmatpush1.bf16.msra.mxu0 %v5454
    %6315 = vmatprep.subr.bf16.mxu0 %v5560
    %6316 = vmatpush2.bf16.msra.mxu0 %v5559
    %6317 = vmatprep.subr.bf16.mxu0 %v5553
    %6318 = vmatpush2.bf16.msra.mxu0 %v5552
    %6319 = vmatprep.subr.bf16.mxu0 %v5546
    %6320 = vmatpush2.bf16.msra.mxu0 %v5545
    %6321 = vmatprep.subr.bf16.mxu0 %v5539
    %6322 = vmatpush2.bf16.msra.mxu0 %v5538
    %6323 = vmatprep.subr.bf16.mxu0 %v5532
    %6324 = vmatpush2.bf16.msra.mxu0 %v5531
    %6325 = vmatprep.subr.bf16.mxu0 %v5525
    %6326 = vmatpush2.bf16.msra.mxu0 %v5524
    %6327 = vmatprep.subr.bf16.mxu0 %v5518
    %6328 = vmatpush2.bf16.msra.mxu0 %v5517
    %6329 = vmatprep.subr.bf16.mxu0 %v5511
    %6330 = vmatpush2.bf16.msra.mxu0 %v5510
    %6331 = vmatprep.mubr.bf16.mxu0 %v3158
    %6332 = vmatmul.mubr.bf16.gmra.mxu0 %v3157
    %v6333 = vpop.f32.mrf.mxu0
    %v6334 = vadd.f32 %v6293, %v6333
    %v6335 = vpop.f32.mrf.mxu0
    %v6336 = vadd.f32 %v6295, %v6335
    %v6337 = vpop.f32.mrf.mxu0
    %v6338 = vpop.f32.mrf.mxu0
    %6339 = vdwg.mxu0
    %6340 = vmatprep.subr.bf16.mxu0 %v5170
    %6341 = vmatpush1.bf16.msra.mxu0 %v5169
    %6342 = vmatprep.subr.bf16.mxu0 %v5163
    %6343 = vmatpush1.bf16.msra.mxu0 %v5162
    %6344 = vmatprep.subr.bf16.mxu0 %v5156
    %6345 = vmatpush1.bf16.msra.mxu0 %v5155
    %6346 = vmatprep.subr.bf16.mxu0 %v5149
    %6347 = vmatpush1.bf16.msra.mxu0 %v5148
    %6348 = vmatprep.subr.bf16.mxu0 %v5142
    %6349 = vmatpush1.bf16.msra.mxu0 %v5141
    %6350 = vmatprep.subr.bf16.mxu0 %v5135
    %6351 = vmatpush1.bf16.msra.mxu0 %v5134
    %6352 = vmatprep.subr.bf16.mxu0 %v5128
    %6353 = vmatpush1.bf16.msra.mxu0 %v5127
    %6354 = vmatprep.subr.bf16.mxu0 %v5121
    %6355 = vmatpush1.bf16.msra.mxu0 %v5120
    %6356 = vmatprep.subr.bf16.mxu0 %v5226
    %6357 = vmatpush2.bf16.msra.mxu0 %v5225
    %6358 = vmatprep.subr.bf16.mxu0 %v5219
    %6359 = vmatpush2.bf16.msra.mxu0 %v5218
    %6360 = vmatprep.subr.bf16.mxu0 %v5212
    %6361 = vmatpush2.bf16.msra.mxu0 %v5211
    %6362 = vmatprep.subr.bf16.mxu0 %v5205
    %6363 = vmatpush2.bf16.msra.mxu0 %v5204
    %6364 = vmatprep.subr.bf16.mxu0 %v5198
    %6365 = vmatpush2.bf16.msra.mxu0 %v5197
    %6366 = vmatprep.subr.bf16.mxu0 %v5191
    %6367 = vmatpush2.bf16.msra.mxu0 %v5190
    %6368 = vmatprep.subr.bf16.mxu0 %v5184
    %6369 = vmatpush2.bf16.msra.mxu0 %v5183
    %6370 = vmatprep.subr.bf16.mxu0 %v5177
    %6371 = vmatpush2.bf16.msra.mxu0 %v5176
    %6372 = vmatprep.mubr.bf16.mxu0 %v3152
    %6373 = vmatmul.mubr.bf16.gmra.mxu0 %v3151
    %v6374 = vpop.f32.mrf.mxu0
    %v6375 = vadd.f32 %v3692, %v6374
    %v6376 = vpop.f32.mrf.mxu0
    %v6377 = vadd.f32 %v3696, %v6376
    %v6378 = vpop.f32.mrf.mxu0
    %v6379 = vpop.f32.mrf.mxu0
    %6380 = vdwg.mxu0
    %6381 = vmatprep.subr.bf16.mxu0 %v5282
    %6382 = vmatpush1.bf16.msra.mxu0 %v5281
    %6383 = vmatprep.subr.bf16.mxu0 %v5275
    %6384 = vmatpush1.bf16.msra.mxu0 %v5274
    %6385 = vmatprep.subr.bf16.mxu0 %v5268
    %6386 = vmatpush1.bf16.msra.mxu0 %v5267
    %6387 = vmatprep.subr.bf16.mxu0 %v5261
    %6388 = vmatpush1.bf16.msra.mxu0 %v5260
    %6389 = vmatprep.subr.bf16.mxu0 %v5254
    %6390 = vmatpush1.bf16.msra.mxu0 %v5253
    %6391 = vmatprep.subr.bf16.mxu0 %v5247
    %6392 = vmatpush1.bf16.msra.mxu0 %v5246
    %6393 = vmatprep.subr.bf16.mxu0 %v5240
    %6394 = vmatpush1.bf16.msra.mxu0 %v5239
    %6395 = vmatprep.subr.bf16.mxu0 %v5233
    %6396 = vmatpush1.bf16.msra.mxu0 %v5232
    %6397 = vmatprep.subr.bf16.mxu0 %v5338
    %6398 = vmatpush2.bf16.msra.mxu0 %v5337
    %6399 = vmatprep.subr.bf16.mxu0 %v5331
    %6400 = vmatpush2.bf16.msra.mxu0 %v5330
    %6401 = vmatprep.subr.bf16.mxu0 %v5324
    %6402 = vmatpush2.bf16.msra.mxu0 %v5323
    %6403 = vmatprep.subr.bf16.mxu0 %v5317
    %6404 = vmatpush2.bf16.msra.mxu0 %v5316
    %6405 = vmatprep.subr.bf16.mxu0 %v5310
    %6406 = vmatpush2.bf16.msra.mxu0 %v5309
    %6407 = vmatprep.subr.bf16.mxu0 %v5303
    %6408 = vmatpush2.bf16.msra.mxu0 %v5302
    %6409 = vmatprep.subr.bf16.mxu0 %v5296
    %6410 = vmatpush2.bf16.msra.mxu0 %v5295
    %6411 = vmatprep.subr.bf16.mxu0 %v5289
    %6412 = vmatpush2.bf16.msra.mxu0 %v5288
    %6413 = vmatprep.mubr.bf16.mxu0 %v3154
    %6414 = vmatmul.mubr.bf16.gmra.mxu0 %v3153
    %v6415 = vpop.f32.mrf.mxu0
    %v6416 = vadd.f32 %v6375, %v6415
    %v6417 = vpop.f32.mrf.mxu0
    %v6418 = vadd.f32 %v6377, %v6417
    %v6419 = vpop.f32.mrf.mxu0
    %v6420 = vpop.f32.mrf.mxu0
    %6421 = vdwg.mxu0
    %6422 = vmatprep.subr.bf16.mxu0 %v5394
    %6423 = vmatpush1.bf16.msra.mxu0 %v5393
    %6424 = vmatprep.subr.bf16.mxu0 %v5387
    %6425 = vmatpush1.bf16.msra.mxu0 %v5386
    %6426 = vmatprep.subr.bf16.mxu0 %v5380
    %6427 = vmatpush1.bf16.msra.mxu0 %v5379
    %6428 = vmatprep.subr.bf16.mxu0 %v5373
    %6429 = vmatpush1.bf16.msra.mxu0 %v5372
    %6430 = vmatprep.subr.bf16.mxu0 %v5366
    %6431 = vmatpush1.bf16.msra.mxu0 %v5365
    %6432 = vmatprep.subr.bf16.mxu0 %v5359
    %6433 = vmatpush1.bf16.msra.mxu0 %v5358
    %6434 = vmatprep.subr.bf16.mxu0 %v5352
    %6435 = vmatpush1.bf16.msra.mxu0 %v5351
    %6436 = vmatprep.subr.bf16.mxu0 %v5345
    %6437 = vmatpush1.bf16.msra.mxu0 %v5344
    %6438 = vmatprep.subr.bf16.mxu0 %v5450
    %6439 = vmatpush2.bf16.msra.mxu0 %v5449
    %6440 = vmatprep.subr.bf16.mxu0 %v5443
    %6441 = vmatpush2.bf16.msra.mxu0 %v5442
    %6442 = vmatprep.subr.bf16.mxu0 %v5436
    %6443 = vmatpush2.bf16.msra.mxu0 %v5435
    %6444 = vmatprep.subr.bf16.mxu0 %v5429
    %6445 = vmatpush2.bf16.msra.mxu0 %v5428
    %6446 = vmatprep.subr.bf16.mxu0 %v5422
    %6447 = vmatpush2.bf16.msra.mxu0 %v5421
    %6448 = vmatprep.subr.bf16.mxu0 %v5415
    %6449 = vmatpush2.bf16.msra.mxu0 %v5414
    %6450 = vmatprep.subr.bf16.mxu0 %v5408
    %6451 = vmatpush2.bf16.msra.mxu0 %v5407
    %6452 = vmatprep.subr.bf16.mxu0 %v5401
    %6453 = vmatpush2.bf16.msra.mxu0 %v5400
    %6454 = vmatprep.mubr.bf16.mxu0 %v3156
    %6455 = vmatmul.mubr.bf16.gmra.mxu0 %v3155
    %v6456 = vpop.f32.mrf.mxu0
    %v6457 = vadd.f32 %v6416, %v6456
    %v6458 = vpop.f32.mrf.mxu0
    %v6459 = vadd.f32 %v6418, %v6458
    %v6460 = vpop.f32.mrf.mxu0
    %v6461 = vpop.f32.mrf.mxu0
    %6462 = vdwg.mxu0
    %6463 = vmatprep.subr.bf16.mxu0 %v5506
    %6464 = vmatpush1.bf16.msra.mxu0 %v5505
    %6465 = vmatprep.subr.bf16.mxu0 %v5499
    %6466 = vmatpush1.bf16.msra.mxu0 %v5498
    %6467 = vmatprep.subr.bf16.mxu0 %v5492
    %6468 = vmatpush1.bf16.msra.mxu0 %v5491
    %6469 = vmatprep.subr.bf16.mxu0 %v5485
    %6470 = vmatpush1.bf16.msra.mxu0 %v5484
    %6471 = vmatprep.subr.bf16.mxu0 %v5478
    %6472 = vmatpush1.bf16.msra.mxu0 %v5477
    %6473 = vmatprep.subr.bf16.mxu0 %v5471
    %6474 = vmatpush1.bf16.msra.mxu0 %v5470
    %6475 = vmatprep.subr.bf16.mxu0 %v5464
    %6476 = vmatpush1.bf16.msra.mxu0 %v5463
    %6477 = vmatprep.subr.bf16.mxu0 %v5457
    %6478 = vmatpush1.bf16.msra.mxu0 %v5456
    %6479 = vmatprep.subr.bf16.mxu0 %v5562
    %6480 = vmatpush2.bf16.msra.mxu0 %v5561
    %6481 = vmatprep.subr.bf16.mxu0 %v5555
    %6482 = vmatpush2.bf16.msra.mxu0 %v5554
    %6483 = vmatprep.subr.bf16.mxu0 %v5548
    %6484 = vmatpush2.bf16.msra.mxu0 %v5547
    %6485 = vmatprep.subr.bf16.mxu0 %v5541
    %6486 = vmatpush2.bf16.msra.mxu0 %v5540
    %6487 = vmatprep.subr.bf16.mxu0 %v5534
    %6488 = vmatpush2.bf16.msra.mxu0 %v5533
    %6489 = vmatprep.subr.bf16.mxu0 %v5527
    %6490 = vmatpush2.bf16.msra.mxu0 %v5526
    %6491 = vmatprep.subr.bf16.mxu0 %v5520
    %6492 = vmatpush2.bf16.msra.mxu0 %v5519
    %6493 = vmatprep.subr.bf16.mxu0 %v5513
    %6494 = vmatpush2.bf16.msra.mxu0 %v5512
    %6495 = vmatprep.mubr.bf16.mxu0 %v3158
    %6496 = vmatmul.mubr.bf16.gmra.mxu0 %v3157
    %v6497 = vpop.f32.mrf.mxu0
    %v6498 = vadd.f32 %v6457, %v6497
    %v6499 = vpop.f32.mrf.mxu0
    %v6500 = vadd.f32 %v6459, %v6499
    %v6501 = vpop.f32.mrf.mxu0
    %v6502 = vpop.f32.mrf.mxu0
    %6503 = vdwg.mxu0
    %6504 = vmatprep.subr.bf16.mxu0 0
    %6505 = vmatpush1.bf16.msra.mxu0 %v5171
    %6506 = vmatprep.subr.bf16.mxu0 0
    %6507 = vmatpush1.bf16.msra.mxu0 %v5164
    %6508 = vmatprep.subr.bf16.mxu0 0
    %6509 = vmatpush1.bf16.msra.mxu0 %v5157
    %6510 = vmatprep.subr.bf16.mxu0 0
    %6511 = vmatpush1.bf16.msra.mxu0 %v5150
    %6512 = vmatprep.subr.bf16.mxu0 0
    %6513 = vmatpush1.bf16.msra.mxu0 %v5143
    %6514 = vmatprep.subr.bf16.mxu0 0
    %6515 = vmatpush1.bf16.msra.mxu0 %v5136
    %6516 = vmatprep.subr.bf16.mxu0 0
    %6517 = vmatpush1.bf16.msra.mxu0 %v5129
    %6518 = vmatprep.subr.bf16.mxu0 0
    %6519 = vmatpush1.bf16.msra.mxu0 %v5122
    %6520 = vmatprep.subr.bf16.mxu0 0
    %6521 = vmatpush2.bf16.msra.mxu0 %v5227
    %6522 = vmatprep.subr.bf16.mxu0 0
    %6523 = vmatpush2.bf16.msra.mxu0 %v5220
    %6524 = vmatprep.subr.bf16.mxu0 0
    %6525 = vmatpush2.bf16.msra.mxu0 %v5213
    %6526 = vmatprep.subr.bf16.mxu0 0
    %6527 = vmatpush2.bf16.msra.mxu0 %v5206
    %6528 = vmatprep.subr.bf16.mxu0 0
    %6529 = vmatpush2.bf16.msra.mxu0 %v5199
    %6530 = vmatprep.subr.bf16.mxu0 0
    %6531 = vmatpush2.bf16.msra.mxu0 %v5192
    %6532 = vmatprep.subr.bf16.mxu0 0
    %6533 = vmatpush2.bf16.msra.mxu0 %v5185
    %6534 = vmatprep.subr.bf16.mxu0 0
    %6535 = vmatpush2.bf16.msra.mxu0 %v5178
    %6536 = vmatprep.mubr.bf16.mxu0 %v3152
    %6537 = vmatmul.mubr.bf16.gmra.mxu0 %v3151
    %v6538 = vpop.f32.mrf.mxu0
    %v6539 = vadd.f32 %v3700, %v6538
    %v6540 = vpop.f32.mrf.mxu0
    %v6541 = vpop.f32.mrf.mxu0
    %v6542 = vpop.f32.mrf.mxu0
    %6543 = vdwg.mxu0
    %6544 = vmatprep.subr.bf16.mxu0 0
    %6545 = vmatpush1.bf16.msra.mxu0 %v5283
    %6546 = vmatprep.subr.bf16.mxu0 0
    %6547 = vmatpush1.bf16.msra.mxu0 %v5276
    %6548 = vmatprep.subr.bf16.mxu0 0
    %6549 = vmatpush1.bf16.msra.mxu0 %v5269
    %6550 = vmatprep.subr.bf16.mxu0 0
    %6551 = vmatpush1.bf16.msra.mxu0 %v5262
    %6552 = vmatprep.subr.bf16.mxu0 0
    %6553 = vmatpush1.bf16.msra.mxu0 %v5255
    %6554 = vmatprep.subr.bf16.mxu0 0
    %6555 = vmatpush1.bf16.msra.mxu0 %v5248
    %6556 = vmatprep.subr.bf16.mxu0 0
    %6557 = vmatpush1.bf16.msra.mxu0 %v5241
    %6558 = vmatprep.subr.bf16.mxu0 0
    %6559 = vmatpush1.bf16.msra.mxu0 %v5234
    %6560 = vmatprep.subr.bf16.mxu0 0
    %6561 = vmatpush2.bf16.msra.mxu0 %v5339
    %6562 = vmatprep.subr.bf16.mxu0 0
    %6563 = vmatpush2.bf16.msra.mxu0 %v5332
    %6564 = vmatprep.subr.bf16.mxu0 0
    %6565 = vmatpush2.bf16.msra.mxu0 %v5325
    %6566 = vmatprep.subr.bf16.mxu0 0
    %6567 = vmatpush2.bf16.msra.mxu0 %v5318
    %6568 = vmatprep.subr.bf16.mxu0 0
    %6569 = vmatpush2.bf16.msra.mxu0 %v5311
    %6570 = vmatprep.subr.bf16.mxu0 0
    %6571 = vmatpush2.bf16.msra.mxu0 %v5304
    %6572 = vmatprep.subr.bf16.mxu0 0
    %6573 = vmatpush2.bf16.msra.mxu0 %v5297
    %6574 = vmatprep.subr.bf16.mxu0 0
    %6575 = vmatpush2.bf16.msra.mxu0 %v5290
    %6576 = vmatprep.mubr.bf16.mxu0 %v3154
    %6577 = vmatmul.mubr.bf16.gmra.mxu0 %v3153
    %v6578 = vpop.f32.mrf.mxu0
    %v6579 = vadd.f32 %v6539, %v6578
    %v6580 = vpop.f32.mrf.mxu0
    %v6581 = vpop.f32.mrf.mxu0
    %v6582 = vpop.f32.mrf.mxu0
    %6583 = vdwg.mxu0
    %6584 = vmatprep.subr.bf16.mxu0 0
    %6585 = vmatpush1.bf16.msra.mxu0 %v5395
    %6586 = vmatprep.subr.bf16.mxu0 0
    %6587 = vmatpush1.bf16.msra.mxu0 %v5388
    %6588 = vmatprep.subr.bf16.mxu0 0
    %6589 = vmatpush1.bf16.msra.mxu0 %v5381
    %6590 = vmatprep.subr.bf16.mxu0 0
    %6591 = vmatpush1.bf16.msra.mxu0 %v5374
    %6592 = vmatprep.subr.bf16.mxu0 0
    %6593 = vmatpush1.bf16.msra.mxu0 %v5367
    %6594 = vmatprep.subr.bf16.mxu0 0
    %6595 = vmatpush1.bf16.msra.mxu0 %v5360
    %6596 = vmatprep.subr.bf16.mxu0 0
    %6597 = vmatpush1.bf16.msra.mxu0 %v5353
    %6598 = vmatprep.subr.bf16.mxu0 0
    %6599 = vmatpush1.bf16.msra.mxu0 %v5346
    %6600 = vmatprep.subr.bf16.mxu0 0
    %6601 = vmatpush2.bf16.msra.mxu0 %v5451
    %6602 = vmatprep.subr.bf16.mxu0 0
    %6603 = vmatpush2.bf16.msra.mxu0 %v5444
    %6604 = vmatprep.subr.bf16.mxu0 0
    %6605 = vmatpush2.bf16.msra.mxu0 %v5437
    %6606 = vmatprep.subr.bf16.mxu0 0
    %6607 = vmatpush2.bf16.msra.mxu0 %v5430
    %6608 = vmatprep.subr.bf16.mxu0 0
    %6609 = vmatpush2.bf16.msra.mxu0 %v5423
    %6610 = vmatprep.subr.bf16.mxu0 0
    %6611 = vmatpush2.bf16.msra.mxu0 %v5416
    %6612 = vmatprep.subr.bf16.mxu0 0
    %6613 = vmatpush2.bf16.msra.mxu0 %v5409
    %6614 = vmatprep.subr.bf16.mxu0 0
    %6615 = vmatpush2.bf16.msra.mxu0 %v5402
    %6616 = vmatprep.mubr.bf16.mxu0 %v3156
    %6617 = vmatmul.mubr.bf16.gmra.mxu0 %v3155
    %v6618 = vpop.f32.mrf.mxu0
    %v6619 = vadd.f32 %v6579, %v6618
    %v6620 = vpop.f32.mrf.mxu0
    %v6621 = vpop.f32.mrf.mxu0
    %v6622 = vpop.f32.mrf.mxu0
    %6623 = vdwg.mxu0
    %6624 = vmatprep.subr.bf16.mxu0 0
    %6625 = vmatpush1.bf16.msra.mxu0 %v5507
    %6626 = vmatprep.subr.bf16.mxu0 0
    %6627 = vmatpush1.bf16.msra.mxu0 %v5500
    %6628 = vmatprep.subr.bf16.mxu0 0
    %6629 = vmatpush1.bf16.msra.mxu0 %v5493
    %6630 = vmatprep.subr.bf16.mxu0 0
    %6631 = vmatpush1.bf16.msra.mxu0 %v5486
    %6632 = vmatprep.subr.bf16.mxu0 0
    %6633 = vmatpush1.bf16.msra.mxu0 %v5479
    %6634 = vmatprep.subr.bf16.mxu0 0
    %6635 = vmatpush1.bf16.msra.mxu0 %v5472
    %6636 = vmatprep.subr.bf16.mxu0 0
    %6637 = vmatpush1.bf16.msra.mxu0 %v5465
    %6638 = vmatprep.subr.bf16.mxu0 0
    %6639 = vmatpush1.bf16.msra.mxu0 %v5458
    %6640 = vmatprep.subr.bf16.mxu0 0
    %6641 = vmatpush2.bf16.msra.mxu0 %v5563
    %6642 = vmatprep.subr.bf16.mxu0 0
    %6643 = vmatpush2.bf16.msra.mxu0 %v5556
    %6644 = vmatprep.subr.bf16.mxu0 0
    %6645 = vmatpush2.bf16.msra.mxu0 %v5549
    %6646 = vmatprep.subr.bf16.mxu0 0
    %6647 = vmatpush2.bf16.msra.mxu0 %v5542
    %6648 = vmatprep.subr.bf16.mxu0 0
    %6649 = vmatpush2.bf16.msra.mxu0 %v5535
    %6650 = vmatprep.subr.bf16.mxu0 0
    %6651 = vmatpush2.bf16.msra.mxu0 %v5528
    %6652 = vmatprep.subr.bf16.mxu0 0
    %6653 = vmatpush2.bf16.msra.mxu0 %v5521
    %6654 = vmatprep.subr.bf16.mxu0 0
    %6655 = vmatpush2.bf16.msra.mxu0 %v5514
    %6656 = vmatprep.mubr.bf16.mxu0 %v3158
    %6657 = vmatmul.mubr.bf16.gmra.mxu0 %v3157
    %v6658 = vpop.f32.mrf.mxu0
    %v6659 = vadd.f32 %v6619, %v6658
    %v6660 = vpop.f32.mrf.mxu0
    %v6661 = vpop.f32.mrf.mxu0
    %v6662 = vpop.f32.mrf.mxu0
    %6663 = vdwg.mxu0
    %v6664 = vtanh.pop %v6170
    %v6665 = vtanh.pop %v6172
    %v6666 = vtanh.pop %v6334
    %v6667 = vtanh.pop %v6336
    %v6668 = vtanh.pop %v6498
    %v6669 = vtanh.pop %v6500
    %v6670 = vtanh.pop %v6659
    %6671 = vst [vmem:[#allocation29] sm:$0xff] %v6664
    %6672 = vst [vmem:[#allocation29 + $0x8] sm:$0xff] %v6665
    %6673 = vst [vmem:[#allocation29 + $0x10] sm:$0xff] %v6666
    %6674 = vst [vmem:[#allocation29 + $0x18] sm:$0xff] %v6667
    %6675 = vst [vmem:[#allocation29 + $0x20] sm:$0xff] %v6668
    %6676 = vst [vmem:[#allocation29 + $0x28] sm:$0xff] %v6669
    %6677 = vst [vmem:[#allocation29 + $0x30] sm:$0xff] %v6670
    // Predicated region
    $region138: #{tpu_custom_call.1} parent=1 // pred_check
      _
    $region139: #{tpu_custom_call.1} parent=1 // pred_check_branch
      %6679 = sbr.rel (0) target = $region141
    $region140: #{tpu_custom_call.1} parent=1 // pred_region
      %s6681 = ssub.s32 896, 896
      %6682 = vsyncadd [#allocation4], %s6681
      %s6684 = sshll.u32 [#allocation29], 4
      %s6685 = int_to_ptr.vmem [resolvable:$true] %s6684
      %6687 = dma.vmem_to_hbm [thread:$0]  %s6685, 896, %s17, [#allocation4]
    $region141: #{tpu_custom_call.1} parent=1 // pred_fallthru
      _
    // Predicated region
    $region142: #{tpu_custom_call.1} parent=1 // pred_check
      _
    $region143: #{tpu_custom_call.1} parent=1 // pred_check_branch
      %6689 = sbr.rel (0) target = $region145
    $region144: #{tpu_custom_call.1} parent=1 // pred_region
      %6690 = dma.done [#allocation4], 896
    $region145: #{tpu_custom_call.1} parent=1 // pred_fallthru
      _
    %6691 = vsyncpa [#allocation3], 1
    %6692 = vsyncpa [#allocation6], 1
    %6693 = vsyncpa [#allocation9], 1
    %6694 = vsyncpa [#allocation12], 1
    %6695 = vsyncpa [#allocation15], 1
    %6696 = vsyncpa [#allocation18], 1
    %6697 = vsyncpa [#allocation21], 1
    %6698 = vsyncpa [#allocation24], 1
    %6699 = vsyncpa [#allocation27], 1
    %6700 = vsyncpa [#allocation4], 1

</llo_original>
